<compile_context>
chip_gen: v5e
topology: v5e:2x2
jax: 0.10.0
libtpu: 0.0.40
codegen_flags: <defaults>
</compile_context>

<pallas_src>
import functools

import numpy as np
import jax
import jax.numpy as jnp
from jax import lax
from jax.experimental import pallas as pl
from jax.experimental.pallas import tpu as pltpu


# ------------------------------ Pallas kernel -------------------------------- #

def _sigmoid(x):
    # exp() goes to the EUP; reciprocal kept exact (approx=True would perturb the
    # 1e-4 parity check against the f32 reference).
    return pl.reciprocal(1.0 + jnp.exp(-x), approx=False)


def _stack_conv_taps(src, h_row, w_row, stk_ref, *, k, hc, wc):
    """Write the k*k masked, lane-rolled taps of `src` (C, L) into stk_ref
    (k*k*C, L) so one K-stacked GEMM computes the stride-1 kxk conv.

    src lanes are ordered (b, h, w); h_row / w_row are (1, L) int32 lane
    coordinates.  Row block t = kh*k + kw of stk_ref holds the (kh, kw) tap.
    """
    pad = k // 2
    nchan, L = src.shape
    for kh in range(k):
        for kw in range(k):
            t = kh * k + kw
            s = (kh - pad) * wc + (kw - pad)          # lane offset of this tap
            tap = src if s == 0 else pltpu.roll(src, shift=(-s) % L, axis=1)
            valid = ((h_row >= pad - kh) & (h_row < hc + pad - kh)
                     & (w_row >= pad - kw) & (w_row < wc + pad - kw))
            # circular roll may wrap across rows / batch images; `valid` zeroes
            # exactly those lanes (they are the padded-zero taps).
            stk_ref[pl.ds(t * nchan, nchan), :] = jnp.where(valid, tap, 0.0)


def _lenet_kernel(p1_ref, crd1_ref, crd2_ref, w1_ref, b1_ref, w2_ref, b2_ref,
                  w3_ref, b3_ref, fcw_ref, bf_ref, o_ref, stk2_ref, stk3_ref,
                  *, k, batch, hc1, wc1, hc2, wc2):
    """Fused conv1 + conv2 + conv3 + fc.

    p1   : (Cin*k*k, L1)  conv1 stride-2 im2col patches, L1 = B*16*16, lanes (b,h,w)
    crd1 : (3, L1) int32  lane coordinates [b, h, w] on the 16x16 grid
    crd2 : (3, L2) int32  lane coordinates [b, h, w] on the 8x8 grid, L2 = B*8*8
    w1   : (12, Cin*k*k)      b1: (12, 1)
    w2   : (12, k*k*12)       b2: (12, 1)   (columns ordered (kh, kw, c))
    w3   : (12, k*k*12)       b3: (12, 1)
    fcw  : (12, N, 64)  per-channel fc planes (NOT batch-replicated)
    bf   : (N, 1)
    o    : (N, B)
    stk2 : (k*k*12, L1) f32 scratch - K-stacked conv2 taps
    stk3 : (k*k*12, L2) f32 scratch - K-stacked conv3 taps
    """
    f32 = jnp.float32
    L1 = batch * hc1 * wc1
    L2 = batch * hc2 * wc2
    hw = hc2 * wc2

    h1 = crd1_ref[1:2, :]                              # (1, L1)
    w1 = crd1_ref[2:3, :]
    b2r = crd2_ref[0:1, :]                             # (1, L2)
    h2 = crd2_ref[1:2, :]
    w2r = crd2_ref[2:3, :]

    # ---- conv1: lane-dense GEMM on the XLA-built stride-2 patches -----------
    y1 = jnp.dot(w1_ref[...], p1_ref[...], preferred_element_type=f32)
    y1 = _sigmoid(y1 + b1_ref[...])                    # (12, L1), lanes (b,h,w)

    # ---- conv2: stride-1 conv on the 16x16 lane grid (rolled taps, one
    #      K-stacked GEMM), then stride-2 subsample via a one-hot matrix on the
    #      MXU.  4x MXU overcompute, but no lane gather and no HBM round trip.
    _stack_conv_taps(y1, h1, w1, stk2_ref, k=k, hc=hc1, wc=wc1)
    y2f = jnp.dot(w2_ref[...], stk2_ref[...], preferred_element_type=f32)  # (12, L1)

    li = lax.broadcasted_iota(jnp.int32, (L1, L2), 0)
    src = b2r * (hc1 * wc1) + (2 * h2) * wc1 + (2 * w2r)       # (1, L2)
    ssub = jnp.where(li == src, 1.0, 0.0)                      # (L1, L2) one-hot
    y2 = jnp.dot(y2f, ssub, preferred_element_type=f32)        # (12, L2)
    y2 = _sigmoid(y2 + b2_ref[...])

    # ---- conv3 (stride 1): same rolled-tap K-stacked single GEMM ------------
    _stack_conv_taps(y2, h2, w2r, stk3_ref, k=k, hc=hc2, wc=wc2)
    y3 = jnp.dot(w3_ref[...], stk3_ref[...], preferred_element_type=f32)
    y3 = _sigmoid(y3 + b3_ref[...])                            # (12, L2)

    # ---- fc: per-channel planes tiled across batch in-kernel, then a one-hot
    #      batch-selector matmul:  out[n,b] = sum_{c,p} fcw[c,n,p] * y3[c,b*hw+p]
    c3, n_cls = fcw_ref.shape[0], fcw_ref.shape[1]
    fcw_t = jnp.concatenate([fcw_ref[...]] * batch, axis=-1)   # (12, N, L2)
    z = jnp.zeros((n_cls, L2), f32)
    for c in range(c3):
        z = z + fcw_t[c] * y3[c:c + 1, :]                      # (N, L2)
    lane = lax.broadcasted_iota(jnp.int32, (L2, batch), 0)
    bidx = lax.broadcasted_iota(jnp.int32, (L2, batch), 1)
    sel = jnp.where((lane >= bidx * hw) & (lane < bidx * hw + hw), 1.0, 0.0)
    out = jnp.dot(z, sel, preferred_element_type=f32)          # (N, B)
    o_ref[...] = (out + bf_ref[...]).astype(o_ref.dtype)


# ------------------------------ pallas wrapper -------------------------------- #

_VMEM = pl.BlockSpec(memory_space=pltpu.MemorySpace.VMEM)   # whole array, no grid


def lenet_fused(p1, crd1, crd2, pp, *, batch, k, hc1, wc1, hc2, wc2):
    n_cls = pp["bfc"].shape[0]
    c1 = pp["w1m"].shape[0]
    c2 = pp["w2p"].shape[0]
    L1 = batch * hc1 * wc1
    L2 = batch * hc2 * wc2
    kernel = functools.partial(_lenet_kernel, k=k, batch=batch,
                               hc1=hc1, wc1=wc1, hc2=hc2, wc2=wc2)
    return pl.pallas_call(
        kernel,
        out_shape=jax.ShapeDtypeStruct((n_cls, batch), p1.dtype),
        in_specs=[_VMEM] * 11,
        out_specs=_VMEM,
        scratch_shapes=[pltpu.VMEM((k * k * c1, L1), jnp.float32),
                        pltpu.VMEM((k * k * c2, L2), jnp.float32)],
    )(p1, crd1, crd2, pp["w1m"], pp["b1c"], pp["w2p"], pp["b2c"],
      pp["w3p"], pp["b3c"], pp["fcw"], pp["bfc"])


# ------------------------------- glue (JAX) ----------------------------------- #

def im2col_cbhw(y, k, stride, pad):
    """(C, B, H, W) -> patches (C*k*k, B*Hout*Wout); rows ordered (c, kh, kw),
    columns ordered (b, ho, wo) -> lane-dense GEMM RHS."""
    C, B, H, W = y.shape
    Hout = (H + 2 * pad - k) // stride + 1
    Wout = (W + 2 * pad - k) // stride + 1
    yp = jnp.pad(y, ((0, 0), (0, 0), (pad, pad), (pad, pad)))
    cols = [yp[:, :, i:i + stride * Hout:stride, j:j + stride * Wout:stride]
            for i in range(k) for j in range(k)]
    patches = jnp.stack(cols, axis=1).reshape(C * k * k, B * Hout * Wout)
    return patches, Hout, Wout


def _lane_coords(batch, hc, wc):
    """(3, B*hc*wc) int32 rows [b, h, w] for lanes ordered (b, h, w)."""
    l = np.arange(batch * hc * wc, dtype=np.int32)
    b = l // (hc * wc)
    h = (l % (hc * wc)) // wc
    w = l % wc
    return np.stack([b, h, w], axis=0)


def lenet_forward(x, pp):
    """x: (B, C, H, W) NCHW, pp: packed params from pack_params()."""
    B, C, H, W = x.shape
    k = 5
    pad = k // 2

    # Only the conv1 stride-2 patch extraction stays in XLA (one fusion over the
    # raw input); everything else runs in a single fused Pallas kernel.
    # TODO(synk): pull the conv1 im2col in-kernel too (strided VMEM windows) to
    # reach a literally single launch once it pays for the extra index math.
    p1, H1, W1 = im2col_cbhw(x.transpose(1, 0, 2, 3), k, 2, pad)   # (75, B*16*16)
    H2 = (H1 + 2 * pad - k) // 2 + 1
    W2 = (W1 + 2 * pad - k) // 2 + 1

    crd1 = jnp.asarray(_lane_coords(B, H1, W1))    # tiny trace-time constants
    crd2 = jnp.asarray(_lane_coords(B, H2, W2))

    out = lenet_fused(p1, crd1, crd2, pp, batch=B, k=k,
                      hc1=H1, wc1=W1, hc2=H2, wc2=W2)              # (10, B)
    return out.T                                                   # (B, 10)


# ------------------------------- parameters ----------------------------------- #

def init_params(key, channel=3, hidden=768, num_classes=10):
    def uniform(key, shape, fan_in):
        bound = 1.0 / jnp.sqrt(jnp.asarray(fan_in, jnp.float32))
        return jax.random.uniform(key, shape, jnp.float32, -bound, bound)

    ks = jax.random.split(key, 8)
    return {
        "w1": uniform(ks[0], (12, channel, 5, 5), channel * 25),
        "b1": uniform(ks[1], (12,), channel * 25),
        "w2": uniform(ks[2], (12, 12, 5, 5), 12 * 25),
        "b2": uniform(ks[3], (12,), 12 * 25),
        "w3": uniform(ks[4], (12, 12, 5, 5), 12 * 25),
        "b3": uniform(ks[5], (12,), 12 * 25),
        "wf": uniform(ks[6], (num_classes, hidden), hidden),
        "bf": uniform(ks[7], (num_classes,), hidden),
    }


def pack_params(params):
    """One-time, batch-independent repack of PyTorch-layout params."""
    o1, c0, k, _ = params["w1"].shape
    o2 = params["w2"].shape[0]
    o3 = params["w3"].shape[0]
    ncls, hidden = params["wf"].shape
    hw = hidden // o3                                   # spatial positions (8*8)
    return {
        "w1m": params["w1"].reshape(o1, c0 * k * k),                    # (12, 75)
        "b1c": params["b1"].reshape(o1, 1),
        # conv2/conv3 weights packed to match the K-stacked tap operand rows,
        # columns ordered (kh, kw, c):
        "w2p": params["w2"].transpose(0, 2, 3, 1).reshape(o2, k * k * o1),
        "b2c": params["b2"].reshape(o2, 1),
        "w3p": params["w3"].transpose(0, 2, 3, 1).reshape(o3, k * k * o2),
        "b3c": params["b3"].reshape(o3, 1),
        # fc weight as per-channel (c, n, p) planes; tiled across batch in-kernel.
        "fcw": params["wf"].reshape(ncls, o3, hw).transpose(1, 0, 2),   # (12,10,64)
        "bfc": params["bf"].reshape(ncls, 1),
    }


# -------------------------------- reference ----------------------------------- #

def lenet_reference(x, params):
    def conv(x, w, b, stride):
        y = lax.conv_general_dilated(
            x, w, (stride, stride), ((2, 2), (2, 2)),
            dimension_numbers=("NCHW", "OIHW", "NCHW"))
        return jax.nn.sigmoid(y + b[None, :, None, None])

    h = conv(x, params["w1"], params["b1"], 2)
    h = conv(h, params["w2"], params["b2"], 2)
    h = conv(h, params["w3"], params["b3"], 1)
    h = h.reshape(h.shape[0], -1)
    return h @ params["wf"].T + params["bf"]


# ---------------------------------- main --------------------------------------- #

if __name__ == "__main__":
    key = jax.random.PRNGKey(0)
    k_x, k_p = jax.random.split(key)

    # hideen=768 in the PyTorch module implies a 3x32x32 input (12 * 8 * 8 = 768).
    B, C, H, W = 2, 3, 32, 32
    x = jax.random.normal(k_x, (B, C, H, W), jnp.float32)
    params = init_params(k_p, channel=C, hidden=768, num_classes=10)
    packed = pack_params(params)

    out = jax.block_until_ready(jax.jit(lenet_forward)(x, packed))
    ref = jax.block_until_ready(lenet_reference(x, params))

    assert out.shape == (B, 10), out.shape
    assert jnp.allclose(out, ref, rtol=1e-4, atol=1e-4), (
        float(jnp.max(jnp.abs(out - ref))))

    print("KERNEL_OK")
</pallas_src>

<mosaic_0001>
module attributes {stable_mosaic.version = 11 : i64} {
  func.func @_lenet_kernel(%arg0: memref<75x512xf32, #tpu.memory_space<vmem>>, %arg1: memref<3x512xi32, #tpu.memory_space<vmem>>, %arg2: memref<3x128xi32, #tpu.memory_space<vmem>>, %arg3: memref<12x75xf32, #tpu.memory_space<vmem>>, %arg4: memref<12x1xf32, #tpu.memory_space<vmem>>, %arg5: memref<12x300xf32, #tpu.memory_space<vmem>>, %arg6: memref<12x1xf32, #tpu.memory_space<vmem>>, %arg7: memref<12x300xf32, #tpu.memory_space<vmem>>, %arg8: memref<12x1xf32, #tpu.memory_space<vmem>>, %arg9: memref<12x10x64xf32, #tpu.memory_space<vmem>>, %arg10: memref<10x1xf32, #tpu.memory_space<vmem>>, %arg11: memref<10x2xf32, #tpu.memory_space<vmem>>, %arg12: memref<300x512xf32, #tpu.memory_space<vmem>>, %arg13: memref<300x128xf32, #tpu.memory_space<vmem>>) attributes {dimension_semantics = [], scalar_prefetch = 0 : i64, scratch_operands = 2 : i64, tpu.core_type = #tpu.core_type<tc>} {
    %c1 = arith.constant 1 : index
    %c0 = arith.constant 0 : index
    %0 = vector.load %arg1[%c1, %c0] : memref<3x512xi32, #tpu.memory_space<vmem>>, vector<1x512xi32>
    %c2 = arith.constant 2 : index
    %c0_0 = arith.constant 0 : index
    %1 = vector.load %arg1[%c2, %c0_0] : memref<3x512xi32, #tpu.memory_space<vmem>>, vector<1x512xi32>
    %c0_1 = arith.constant 0 : index
    %c0_2 = arith.constant 0 : index
    %2 = vector.load %arg2[%c0_1, %c0_2] : memref<3x128xi32, #tpu.memory_space<vmem>>, vector<1x128xi32>
    %c1_3 = arith.constant 1 : index
    %c0_4 = arith.constant 0 : index
    %3 = vector.load %arg2[%c1_3, %c0_4] : memref<3x128xi32, #tpu.memory_space<vmem>>, vector<1x128xi32>
    %c2_5 = arith.constant 2 : index
    %c0_6 = arith.constant 0 : index
    %4 = vector.load %arg2[%c2_5, %c0_6] : memref<3x128xi32, #tpu.memory_space<vmem>>, vector<1x128xi32>
    %c0_7 = arith.constant 0 : index
    %c0_8 = arith.constant 0 : index
    %5 = vector.load %arg3[%c0_7, %c0_8] : memref<12x75xf32, #tpu.memory_space<vmem>>, vector<12x75xf32>
    %c0_9 = arith.constant 0 : index
    %c0_10 = arith.constant 0 : index
    %6 = vector.load %arg0[%c0_9, %c0_10] : memref<75x512xf32, #tpu.memory_space<vmem>>, vector<75x512xf32>
    %cst = arith.constant dense<0.000000e+00> : vector<12x512xf32>
    %7 = tpu.matmul %5, %6, %cst {dimension_numbers = #tpu.dot_dimension_numbers<[1], [0], [0], [1], [0, 0, 1, 1], [], []>} : vector<12x75xf32>, vector<75x512xf32>, vector<12x512xf32> -> vector<12x512xf32>
    %c0_11 = arith.constant 0 : index
    %c0_12 = arith.constant 0 : index
    %8 = vector.load %arg4[%c0_11, %c0_12] : memref<12x1xf32, #tpu.memory_space<vmem>>, vector<12x1xf32>
    %9 = vector.broadcast %8 : vector<12x1xf32> to vector<12x512xf32>
    %10 = arith.addf %7, %9 : vector<12x512xf32>
    %cst_13 = arith.constant 0.000000e+00 : f32
    %11 = vector.broadcast %cst_13 : f32 to vector<12x512xf32>
    %12 = arith.subf %11, %10 : vector<12x512xf32>
    %13 = math.exp %12 : vector<12x512xf32>
    %cst_14 = arith.constant 1.000000e+00 : f32
    %14 = vector.broadcast %cst_14 : f32 to vector<12x512xf32>
    %15 = arith.addf %14, %13 : vector<12x512xf32>
    %16 = tpu.reciprocal %15 : vector<12x512xf32> -> vector<12x512xf32>
    %c34_i32 = arith.constant 34 : i32
    %17 = tpu.dynamic_rotate %16 by %c34_i32 dim 1 : vector<12x512xf32>, i32 -> vector<12x512xf32>
    %c2_i32 = arith.constant 2 : i32
    %18 = vector.broadcast %c2_i32 : i32 to vector<1x512xi32>
    %19 = arith.cmpi sge, %0, %18 : vector<1x512xi32>
    %c18_i32 = arith.constant 18 : i32
    %20 = vector.broadcast %c18_i32 : i32 to vector<1x512xi32>
    %21 = arith.cmpi slt, %0, %20 : vector<1x512xi32>
    %22 = arith.andi %19, %21 : vector<1x512xi1>
    %c2_i32_15 = arith.constant 2 : i32
    %23 = vector.broadcast %c2_i32_15 : i32 to vector<1x512xi32>
    %24 = arith.cmpi sge, %1, %23 : vector<1x512xi32>
    %25 = arith.andi %22, %24 : vector<1x512xi1>
    %c18_i32_16 = arith.constant 18 : i32
    %26 = vector.broadcast %c18_i32_16 : i32 to vector<1x512xi32>
    %27 = arith.cmpi slt, %1, %26 : vector<1x512xi32>
    %28 = arith.andi %25, %27 : vector<1x512xi1>
    %cst_17 = arith.constant 0.000000e+00 : f32
    %29 = vector.shape_cast %28 : vector<1x512xi1> to vector<1x512xi1>
    %30 = vector.broadcast %29 : vector<1x512xi1> to vector<12x512xi1>
    %31 = vector.broadcast %cst_17 : f32 to vector<12x512xf32>
    %32 = arith.select %30, %17, %31 : vector<12x512xi1>, vector<12x512xf32>
    %c0_18 = arith.constant 0 : index
    %c0_19 = arith.constant 0 : index
    %33 = vector.load %arg12[%c0_18, %c0_19] : memref<300x512xf32, #tpu.memory_space<vmem>>, vector<12x512xf32>
    tpu.vector_store %arg12[%c0_18, %c0_19], %32 {strides = array<i32>} : memref<300x512xf32, #tpu.memory_space<vmem>>, vector<12x512xf32>,
    %c33_i32 = arith.constant 33 : i32
    %34 = tpu.dynamic_rotate %16 by %c33_i32 dim 1 : vector<12x512xf32>, i32 -> vector<12x512xf32>
    %c2_i32_20 = arith.constant 2 : i32
    %35 = vector.broadcast %c2_i32_20 : i32 to vector<1x512xi32>
    %36 = arith.cmpi sge, %0, %35 : vector<1x512xi32>
    %c18_i32_21 = arith.constant 18 : i32
    %37 = vector.broadcast %c18_i32_21 : i32 to vector<1x512xi32>
    %38 = arith.cmpi slt, %0, %37 : vector<1x512xi32>
    %39 = arith.andi %36, %38 : vector<1x512xi1>
    %c1_i32 = arith.constant 1 : i32
    %40 = vector.broadcast %c1_i32 : i32 to vector<1x512xi32>
    %41 = arith.cmpi sge, %1, %40 : vector<1x512xi32>
    %42 = arith.andi %39, %41 : vector<1x512xi1>
    %c17_i32 = arith.constant 17 : i32
    %43 = vector.broadcast %c17_i32 : i32 to vector<1x512xi32>
    %44 = arith.cmpi slt, %1, %43 : vector<1x512xi32>
    %45 = arith.andi %42, %44 : vector<1x512xi1>
    %cst_22 = arith.constant 0.000000e+00 : f32
    %46 = vector.shape_cast %45 : vector<1x512xi1> to vector<1x512xi1>
    %47 = vector.broadcast %46 : vector<1x512xi1> to vector<12x512xi1>
    %48 = vector.broadcast %cst_22 : f32 to vector<12x512xf32>
    %49 = arith.select %47, %34, %48 : vector<12x512xi1>, vector<12x512xf32>
    %c12 = arith.constant 12 : index
    %c0_23 = arith.constant 0 : index
    %50 = vector.load %arg12[%c12, %c0_23] : memref<300x512xf32, #tpu.memory_space<vmem>>, vector<12x512xf32>
    tpu.vector_store %arg12[%c12, %c0_23], %49 {strides = array<i32>} : memref<300x512xf32, #tpu.memory_space<vmem>>, vector<12x512xf32>,
    %c32_i32 = arith.constant 32 : i32
    %51 = tpu.dynamic_rotate %16 by %c32_i32 dim 1 : vector<12x512xf32>, i32 -> vector<12x512xf32>
    %c2_i32_24 = arith.constant 2 : i32
    %52 = vector.broadcast %c2_i32_24 : i32 to vector<1x512xi32>
    %53 = arith.cmpi sge, %0, %52 : vector<1x512xi32>
    %c18_i32_25 = arith.constant 18 : i32
    %54 = vector.broadcast %c18_i32_25 : i32 to vector<1x512xi32>
    %55 = arith.cmpi slt, %0, %54 : vector<1x512xi32>
    %56 = arith.andi %53, %55 : vector<1x512xi1>
    %c0_i32 = arith.constant 0 : i32
    %57 = vector.broadcast %c0_i32 : i32 to vector<1x512xi32>
    %58 = arith.cmpi sge, %1, %57 : vector<1x512xi32>
    %59 = arith.andi %56, %58 : vector<1x512xi1>
    %c16_i32 = arith.constant 16 : i32
    %60 = vector.broadcast %c16_i32 : i32 to vector<1x512xi32>
    %61 = arith.cmpi slt, %1, %60 : vector<1x512xi32>
    %62 = arith.andi %59, %61 : vector<1x512xi1>
    %cst_26 = arith.constant 0.000000e+00 : f32
    %63 = vector.shape_cast %62 : vector<1x512xi1> to vector<1x512xi1>
    %64 = vector.broadcast %63 : vector<1x512xi1> to vector<12x512xi1>
    %65 = vector.broadcast %cst_26 : f32 to vector<12x512xf32>
    %66 = arith.select %64, %51, %65 : vector<12x512xi1>, vector<12x512xf32>
    %c24 = arith.constant 24 : index
    %c0_27 = arith.constant 0 : index
    %67 = vector.load %arg12[%c24, %c0_27] : memref<300x512xf32, #tpu.memory_space<vmem>>, vector<12x512xf32>
    tpu.vector_store %arg12[%c24, %c0_27], %66 {strides = array<i32>} : memref<300x512xf32, #tpu.memory_space<vmem>>, vector<12x512xf32>,
    %c31_i32 = arith.constant 31 : i32
    %68 = tpu.dynamic_rotate %16 by %c31_i32 dim 1 : vector<12x512xf32>, i32 -> vector<12x512xf32>
    %c2_i32_28 = arith.constant 2 : i32
    %69 = vector.broadcast %c2_i32_28 : i32 to vector<1x512xi32>
    %70 = arith.cmpi sge, %0, %69 : vector<1x512xi32>
    %c18_i32_29 = arith.constant 18 : i32
    %71 = vector.broadcast %c18_i32_29 : i32 to vector<1x512xi32>
    %72 = arith.cmpi slt, %0, %71 : vector<1x512xi32>
    %73 = arith.andi %70, %72 : vector<1x512xi1>
    %c-1_i32 = arith.constant -1 : i32
    %74 = vector.broadcast %c-1_i32 : i32 to vector<1x512xi32>
    %75 = arith.cmpi sge, %1, %74 : vector<1x512xi32>
    %76 = arith.andi %73, %75 : vector<1x512xi1>
    %c15_i32 = arith.constant 15 : i32
    %77 = vector.broadcast %c15_i32 : i32 to vector<1x512xi32>
    %78 = arith.cmpi slt, %1, %77 : vector<1x512xi32>
    %79 = arith.andi %76, %78 : vector<1x512xi1>
    %cst_30 = arith.constant 0.000000e+00 : f32
    %80 = vector.shape_cast %79 : vector<1x512xi1> to vector<1x512xi1>
    %81 = vector.broadcast %80 : vector<1x512xi1> to vector<12x512xi1>
    %82 = vector.broadcast %cst_30 : f32 to vector<12x512xf32>
    %83 = arith.select %81, %68, %82 : vector<12x512xi1>, vector<12x512xf32>
    %c36 = arith.constant 36 : index
    %c0_31 = arith.constant 0 : index
    %84 = vector.load %arg12[%c36, %c0_31] : memref<300x512xf32, #tpu.memory_space<vmem>>, vector<12x512xf32>
    tpu.vector_store %arg12[%c36, %c0_31], %83 {strides = array<i32>} : memref<300x512xf32, #tpu.memory_space<vmem>>, vector<12x512xf32>,
    %c30_i32 = arith.constant 30 : i32
    %85 = tpu.dynamic_rotate %16 by %c30_i32 dim 1 : vector<12x512xf32>, i32 -> vector<12x512xf32>
    %c2_i32_32 = arith.constant 2 : i32
    %86 = vector.broadcast %c2_i32_32 : i32 to vector<1x512xi32>
    %87 = arith.cmpi sge, %0, %86 : vector<1x512xi32>
    %c18_i32_33 = arith.constant 18 : i32
    %88 = vector.broadcast %c18_i32_33 : i32 to vector<1x512xi32>
    %89 = arith.cmpi slt, %0, %88 : vector<1x512xi32>
    %90 = arith.andi %87, %89 : vector<1x512xi1>
    %c-2_i32 = arith.constant -2 : i32
    %91 = vector.broadcast %c-2_i32 : i32 to vector<1x512xi32>
    %92 = arith.cmpi sge, %1, %91 : vector<1x512xi32>
    %93 = arith.andi %90, %92 : vector<1x512xi1>
    %c14_i32 = arith.constant 14 : i32
    %94 = vector.broadcast %c14_i32 : i32 to vector<1x512xi32>
    %95 = arith.cmpi slt, %1, %94 : vector<1x512xi32>
    %96 = arith.andi %93, %95 : vector<1x512xi1>
    %cst_34 = arith.constant 0.000000e+00 : f32
    %97 = vector.shape_cast %96 : vector<1x512xi1> to vector<1x512xi1>
    %98 = vector.broadcast %97 : vector<1x512xi1> to vector<12x512xi1>
    %99 = vector.broadcast %cst_34 : f32 to vector<12x512xf32>
    %100 = arith.select %98, %85, %99 : vector<12x512xi1>, vector<12x512xf32>
    %c48 = arith.constant 48 : index
    %c0_35 = arith.constant 0 : index
    %101 = vector.load %arg12[%c48, %c0_35] : memref<300x512xf32, #tpu.memory_space<vmem>>, vector<12x512xf32>
    tpu.vector_store %arg12[%c48, %c0_35], %100 {strides = array<i32>} : memref<300x512xf32, #tpu.memory_space<vmem>>, vector<12x512xf32>,
    %c18_i32_36 = arith.constant 18 : i32
    %102 = tpu.dynamic_rotate %16 by %c18_i32_36 dim 1 : vector<12x512xf32>, i32 -> vector<12x512xf32>
    %c1_i32_37 = arith.constant 1 : i32
    %103 = vector.broadcast %c1_i32_37 : i32 to vector<1x512xi32>
    %104 = arith.cmpi sge, %0, %103 : vector<1x512xi32>
    %c17_i32_38 = arith.constant 17 : i32
    %105 = vector.broadcast %c17_i32_38 : i32 to vector<1x512xi32>
    %106 = arith.cmpi slt, %0, %105 : vector<1x512xi32>
    %107 = arith.andi %104, %106 : vector<1x512xi1>
    %c2_i32_39 = arith.constant 2 : i32
    %108 = vector.broadcast %c2_i32_39 : i32 to vector<1x512xi32>
    %109 = arith.cmpi sge, %1, %108 : vector<1x512xi32>
    %110 = arith.andi %107, %109 : vector<1x512xi1>
    %c18_i32_40 = arith.constant 18 : i32
    %111 = vector.broadcast %c18_i32_40 : i32 to vector<1x512xi32>
    %112 = arith.cmpi slt, %1, %111 : vector<1x512xi32>
    %113 = arith.andi %110, %112 : vector<1x512xi1>
    %cst_41 = arith.constant 0.000000e+00 : f32
    %114 = vector.shape_cast %113 : vector<1x512xi1> to vector<1x512xi1>
    %115 = vector.broadcast %114 : vector<1x512xi1> to vector<12x512xi1>
    %116 = vector.broadcast %cst_41 : f32 to vector<12x512xf32>
    %117 = arith.select %115, %102, %116 : vector<12x512xi1>, vector<12x512xf32>
    %c60 = arith.constant 60 : index
    %c0_42 = arith.constant 0 : index
    %118 = vector.load %arg12[%c60, %c0_42] : memref<300x512xf32, #tpu.memory_space<vmem>>, vector<12x512xf32>
    tpu.vector_store %arg12[%c60, %c0_42], %117 {strides = array<i32>} : memref<300x512xf32, #tpu.memory_space<vmem>>, vector<12x512xf32>,
    %c17_i32_43 = arith.constant 17 : i32
    %119 = tpu.dynamic_rotate %16 by %c17_i32_43 dim 1 : vector<12x512xf32>, i32 -> vector<12x512xf32>
    %c1_i32_44 = arith.constant 1 : i32
    %120 = vector.broadcast %c1_i32_44 : i32 to vector<1x512xi32>
    %121 = arith.cmpi sge, %0, %120 : vector<1x512xi32>
    %c17_i32_45 = arith.constant 17 : i32
    %122 = vector.broadcast %c17_i32_45 : i32 to vector<1x512xi32>
    %123 = arith.cmpi slt, %0, %122 : vector<1x512xi32>
    %124 = arith.andi %121, %123 : vector<1x512xi1>
    %c1_i32_46 = arith.constant 1 : i32
    %125 = vector.broadcast %c1_i32_46 : i32 to vector<1x512xi32>
    %126 = arith.cmpi sge, %1, %125 : vector<1x512xi32>
    %127 = arith.andi %124, %126 : vector<1x512xi1>
    %c17_i32_47 = arith.constant 17 : i32
    %128 = vector.broadcast %c17_i32_47 : i32 to vector<1x512xi32>
    %129 = arith.cmpi slt, %1, %128 : vector<1x512xi32>
    %130 = arith.andi %127, %129 : vector<1x512xi1>
    %cst_48 = arith.constant 0.000000e+00 : f32
    %131 = vector.shape_cast %130 : vector<1x512xi1> to vector<1x512xi1>
    %132 = vector.broadcast %131 : vector<1x512xi1> to vector<12x512xi1>
    %133 = vector.broadcast %cst_48 : f32 to vector<12x512xf32>
    %134 = arith.select %132, %119, %133 : vector<12x512xi1>, vector<12x512xf32>
    %c72 = arith.constant 72 : index
    %c0_49 = arith.constant 0 : index
    %135 = vector.load %arg12[%c72, %c0_49] : memref<300x512xf32, #tpu.memory_space<vmem>>, vector<12x512xf32>
    tpu.vector_store %arg12[%c72, %c0_49], %134 {strides = array<i32>} : memref<300x512xf32, #tpu.memory_space<vmem>>, vector<12x512xf32>,
    %c16_i32_50 = arith.constant 16 : i32
    %136 = tpu.dynamic_rotate %16 by %c16_i32_50 dim 1 : vector<12x512xf32>, i32 -> vector<12x512xf32>
    %c1_i32_51 = arith.constant 1 : i32
    %137 = vector.broadcast %c1_i32_51 : i32 to vector<1x512xi32>
    %138 = arith.cmpi sge, %0, %137 : vector<1x512xi32>
    %c17_i32_52 = arith.constant 17 : i32
    %139 = vector.broadcast %c17_i32_52 : i32 to vector<1x512xi32>
    %140 = arith.cmpi slt, %0, %139 : vector<1x512xi32>
    %141 = arith.andi %138, %140 : vector<1x512xi1>
    %c0_i32_53 = arith.constant 0 : i32
    %142 = vector.broadcast %c0_i32_53 : i32 to vector<1x512xi32>
    %143 = arith.cmpi sge, %1, %142 : vector<1x512xi32>
    %144 = arith.andi %141, %143 : vector<1x512xi1>
    %c16_i32_54 = arith.constant 16 : i32
    %145 = vector.broadcast %c16_i32_54 : i32 to vector<1x512xi32>
    %146 = arith.cmpi slt, %1, %145 : vector<1x512xi32>
    %147 = arith.andi %144, %146 : vector<1x512xi1>
    %cst_55 = arith.constant 0.000000e+00 : f32
    %148 = vector.shape_cast %147 : vector<1x512xi1> to vector<1x512xi1>
    %149 = vector.broadcast %148 : vector<1x512xi1> to vector<12x512xi1>
    %150 = vector.broadcast %cst_55 : f32 to vector<12x512xf32>
    %151 = arith.select %149, %136, %150 : vector<12x512xi1>, vector<12x512xf32>
    %c84 = arith.constant 84 : index
    %c0_56 = arith.constant 0 : index
    %152 = vector.load %arg12[%c84, %c0_56] : memref<300x512xf32, #tpu.memory_space<vmem>>, vector<12x512xf32>
    tpu.vector_store %arg12[%c84, %c0_56], %151 {strides = array<i32>} : memref<300x512xf32, #tpu.memory_space<vmem>>, vector<12x512xf32>,
    %c15_i32_57 = arith.constant 15 : i32
    %153 = tpu.dynamic_rotate %16 by %c15_i32_57 dim 1 : vector<12x512xf32>, i32 -> vector<12x512xf32>
    %c1_i32_58 = arith.constant 1 : i32
    %154 = vector.broadcast %c1_i32_58 : i32 to vector<1x512xi32>
    %155 = arith.cmpi sge, %0, %154 : vector<1x512xi32>
    %c17_i32_59 = arith.constant 17 : i32
    %156 = vector.broadcast %c17_i32_59 : i32 to vector<1x512xi32>
    %157 = arith.cmpi slt, %0, %156 : vector<1x512xi32>
    %158 = arith.andi %155, %157 : vector<1x512xi1>
    %c-1_i32_60 = arith.constant -1 : i32
    %159 = vector.broadcast %c-1_i32_60 : i32 to vector<1x512xi32>
    %160 = arith.cmpi sge, %1, %159 : vector<1x512xi32>
    %161 = arith.andi %158, %160 : vector<1x512xi1>
    %c15_i32_61 = arith.constant 15 : i32
    %162 = vector.broadcast %c15_i32_61 : i32 to vector<1x512xi32>
    %163 = arith.cmpi slt, %1, %162 : vector<1x512xi32>
    %164 = arith.andi %161, %163 : vector<1x512xi1>
    %cst_62 = arith.constant 0.000000e+00 : f32
    %165 = vector.shape_cast %164 : vector<1x512xi1> to vector<1x512xi1>
    %166 = vector.broadcast %165 : vector<1x512xi1> to vector<12x512xi1>
    %167 = vector.broadcast %cst_62 : f32 to vector<12x512xf32>
    %168 = arith.select %166, %153, %167 : vector<12x512xi1>, vector<12x512xf32>
    %c96 = arith.constant 96 : index
    %c0_63 = arith.constant 0 : index
    %169 = vector.load %arg12[%c96, %c0_63] : memref<300x512xf32, #tpu.memory_space<vmem>>, vector<12x512xf32>
    tpu.vector_store %arg12[%c96, %c0_63], %168 {strides = array<i32>} : memref<300x512xf32, #tpu.memory_space<vmem>>, vector<12x512xf32>,
    %c14_i32_64 = arith.constant 14 : i32
    %170 = tpu.dynamic_rotate %16 by %c14_i32_64 dim 1 : vector<12x512xf32>, i32 -> vector<12x512xf32>
    %c1_i32_65 = arith.constant 1 : i32
    %171 = vector.broadcast %c1_i32_65 : i32 to vector<1x512xi32>
    %172 = arith.cmpi sge, %0, %171 : vector<1x512xi32>
    %c17_i32_66 = arith.constant 17 : i32
    %173 = vector.broadcast %c17_i32_66 : i32 to vector<1x512xi32>
    %174 = arith.cmpi slt, %0, %173 : vector<1x512xi32>
    %175 = arith.andi %172, %174 : vector<1x512xi1>
    %c-2_i32_67 = arith.constant -2 : i32
    %176 = vector.broadcast %c-2_i32_67 : i32 to vector<1x512xi32>
    %177 = arith.cmpi sge, %1, %176 : vector<1x512xi32>
    %178 = arith.andi %175, %177 : vector<1x512xi1>
    %c14_i32_68 = arith.constant 14 : i32
    %179 = vector.broadcast %c14_i32_68 : i32 to vector<1x512xi32>
    %180 = arith.cmpi slt, %1, %179 : vector<1x512xi32>
    %181 = arith.andi %178, %180 : vector<1x512xi1>
    %cst_69 = arith.constant 0.000000e+00 : f32
    %182 = vector.shape_cast %181 : vector<1x512xi1> to vector<1x512xi1>
    %183 = vector.broadcast %182 : vector<1x512xi1> to vector<12x512xi1>
    %184 = vector.broadcast %cst_69 : f32 to vector<12x512xf32>
    %185 = arith.select %183, %170, %184 : vector<12x512xi1>, vector<12x512xf32>
    %c108 = arith.constant 108 : index
    %c0_70 = arith.constant 0 : index
    %186 = vector.load %arg12[%c108, %c0_70] : memref<300x512xf32, #tpu.memory_space<vmem>>, vector<12x512xf32>
    tpu.vector_store %arg12[%c108, %c0_70], %185 {strides = array<i32>} : memref<300x512xf32, #tpu.memory_space<vmem>>, vector<12x512xf32>,
    %c2_i32_71 = arith.constant 2 : i32
    %187 = tpu.dynamic_rotate %16 by %c2_i32_71 dim 1 : vector<12x512xf32>, i32 -> vector<12x512xf32>
    %c0_i32_72 = arith.constant 0 : i32
    %188 = vector.broadcast %c0_i32_72 : i32 to vector<1x512xi32>
    %189 = arith.cmpi sge, %0, %188 : vector<1x512xi32>
    %c16_i32_73 = arith.constant 16 : i32
    %190 = vector.broadcast %c16_i32_73 : i32 to vector<1x512xi32>
    %191 = arith.cmpi slt, %0, %190 : vector<1x512xi32>
    %192 = arith.andi %189, %191 : vector<1x512xi1>
    %c2_i32_74 = arith.constant 2 : i32
    %193 = vector.broadcast %c2_i32_74 : i32 to vector<1x512xi32>
    %194 = arith.cmpi sge, %1, %193 : vector<1x512xi32>
    %195 = arith.andi %192, %194 : vector<1x512xi1>
    %c18_i32_75 = arith.constant 18 : i32
    %196 = vector.broadcast %c18_i32_75 : i32 to vector<1x512xi32>
    %197 = arith.cmpi slt, %1, %196 : vector<1x512xi32>
    %198 = arith.andi %195, %197 : vector<1x512xi1>
    %cst_76 = arith.constant 0.000000e+00 : f32
    %199 = vector.shape_cast %198 : vector<1x512xi1> to vector<1x512xi1>
    %200 = vector.broadcast %199 : vector<1x512xi1> to vector<12x512xi1>
    %201 = vector.broadcast %cst_76 : f32 to vector<12x512xf32>
    %202 = arith.select %200, %187, %201 : vector<12x512xi1>, vector<12x512xf32>
    %c120 = arith.constant 120 : index
    %c0_77 = arith.constant 0 : index
    %203 = vector.load %arg12[%c120, %c0_77] : memref<300x512xf32, #tpu.memory_space<vmem>>, vector<12x512xf32>
    tpu.vector_store %arg12[%c120, %c0_77], %202 {strides = array<i32>} : memref<300x512xf32, #tpu.memory_space<vmem>>, vector<12x512xf32>,
    %c1_i32_78 = arith.constant 1 : i32
    %204 = tpu.dynamic_rotate %16 by %c1_i32_78 dim 1 : vector<12x512xf32>, i32 -> vector<12x512xf32>
    %c0_i32_79 = arith.constant 0 : i32
    %205 = vector.broadcast %c0_i32_79 : i32 to vector<1x512xi32>
    %206 = arith.cmpi sge, %0, %205 : vector<1x512xi32>
    %c16_i32_80 = arith.constant 16 : i32
    %207 = vector.broadcast %c16_i32_80 : i32 to vector<1x512xi32>
    %208 = arith.cmpi slt, %0, %207 : vector<1x512xi32>
    %209 = arith.andi %206, %208 : vector<1x512xi1>
    %c1_i32_81 = arith.constant 1 : i32
    %210 = vector.broadcast %c1_i32_81 : i32 to vector<1x512xi32>
    %211 = arith.cmpi sge, %1, %210 : vector<1x512xi32>
    %212 = arith.andi %209, %211 : vector<1x512xi1>
    %c17_i32_82 = arith.constant 17 : i32
    %213 = vector.broadcast %c17_i32_82 : i32 to vector<1x512xi32>
    %214 = arith.cmpi slt, %1, %213 : vector<1x512xi32>
    %215 = arith.andi %212, %214 : vector<1x512xi1>
    %cst_83 = arith.constant 0.000000e+00 : f32
    %216 = vector.shape_cast %215 : vector<1x512xi1> to vector<1x512xi1>
    %217 = vector.broadcast %216 : vector<1x512xi1> to vector<12x512xi1>
    %218 = vector.broadcast %cst_83 : f32 to vector<12x512xf32>
    %219 = arith.select %217, %204, %218 : vector<12x512xi1>, vector<12x512xf32>
    %c132 = arith.constant 132 : index
    %c0_84 = arith.constant 0 : index
    %220 = vector.load %arg12[%c132, %c0_84] : memref<300x512xf32, #tpu.memory_space<vmem>>, vector<12x512xf32>
    tpu.vector_store %arg12[%c132, %c0_84], %219 {strides = array<i32>} : memref<300x512xf32, #tpu.memory_space<vmem>>, vector<12x512xf32>,
    %c0_i32_85 = arith.constant 0 : i32
    %221 = vector.broadcast %c0_i32_85 : i32 to vector<1x512xi32>
    %222 = arith.cmpi sge, %0, %221 : vector<1x512xi32>
    %c16_i32_86 = arith.constant 16 : i32
    %223 = vector.broadcast %c16_i32_86 : i32 to vector<1x512xi32>
    %224 = arith.cmpi slt, %0, %223 : vector<1x512xi32>
    %225 = arith.andi %222, %224 : vector<1x512xi1>
    %c0_i32_87 = arith.constant 0 : i32
    %226 = vector.broadcast %c0_i32_87 : i32 to vector<1x512xi32>
    %227 = arith.cmpi sge, %1, %226 : vector<1x512xi32>
    %228 = arith.andi %225, %227 : vector<1x512xi1>
    %c16_i32_88 = arith.constant 16 : i32
    %229 = vector.broadcast %c16_i32_88 : i32 to vector<1x512xi32>
    %230 = arith.cmpi slt, %1, %229 : vector<1x512xi32>
    %231 = arith.andi %228, %230 : vector<1x512xi1>
    %cst_89 = arith.constant 0.000000e+00 : f32
    %232 = vector.shape_cast %231 : vector<1x512xi1> to vector<1x512xi1>
    %233 = vector.broadcast %232 : vector<1x512xi1> to vector<12x512xi1>
    %234 = vector.broadcast %cst_89 : f32 to vector<12x512xf32>
    %235 = arith.select %233, %16, %234 : vector<12x512xi1>, vector<12x512xf32>
    %c144 = arith.constant 144 : index
    %c0_90 = arith.constant 0 : index
    %236 = vector.load %arg12[%c144, %c0_90] : memref<300x512xf32, #tpu.memory_space<vmem>>, vector<12x512xf32>
    tpu.vector_store %arg12[%c144, %c0_90], %235 {strides = array<i32>} : memref<300x512xf32, #tpu.memory_space<vmem>>, vector<12x512xf32>,
    %c511_i32 = arith.constant 511 : i32
    %237 = tpu.dynamic_rotate %16 by %c511_i32 dim 1 : vector<12x512xf32>, i32 -> vector<12x512xf32>
    %c0_i32_91 = arith.constant 0 : i32
    %238 = vector.broadcast %c0_i32_91 : i32 to vector<1x512xi32>
    %239 = arith.cmpi sge, %0, %238 : vector<1x512xi32>
    %c16_i32_92 = arith.constant 16 : i32
    %240 = vector.broadcast %c16_i32_92 : i32 to vector<1x512xi32>
    %241 = arith.cmpi slt, %0, %240 : vector<1x512xi32>
    %242 = arith.andi %239, %241 : vector<1x512xi1>
    %c-1_i32_93 = arith.constant -1 : i32
    %243 = vector.broadcast %c-1_i32_93 : i32 to vector<1x512xi32>
    %244 = arith.cmpi sge, %1, %243 : vector<1x512xi32>
    %245 = arith.andi %242, %244 : vector<1x512xi1>
    %c15_i32_94 = arith.constant 15 : i32
    %246 = vector.broadcast %c15_i32_94 : i32 to vector<1x512xi32>
    %247 = arith.cmpi slt, %1, %246 : vector<1x512xi32>
    %248 = arith.andi %245, %247 : vector<1x512xi1>
    %cst_95 = arith.constant 0.000000e+00 : f32
    %249 = vector.shape_cast %248 : vector<1x512xi1> to vector<1x512xi1>
    %250 = vector.broadcast %249 : vector<1x512xi1> to vector<12x512xi1>
    %251 = vector.broadcast %cst_95 : f32 to vector<12x512xf32>
    %252 = arith.select %250, %237, %251 : vector<12x512xi1>, vector<12x512xf32>
    %c156 = arith.constant 156 : index
    %c0_96 = arith.constant 0 : index
    %253 = vector.load %arg12[%c156, %c0_96] : memref<300x512xf32, #tpu.memory_space<vmem>>, vector<12x512xf32>
    tpu.vector_store %arg12[%c156, %c0_96], %252 {strides = array<i32>} : memref<300x512xf32, #tpu.memory_space<vmem>>, vector<12x512xf32>,
    %c510_i32 = arith.constant 510 : i32
    %254 = tpu.dynamic_rotate %16 by %c510_i32 dim 1 : vector<12x512xf32>, i32 -> vector<12x512xf32>
    %c0_i32_97 = arith.constant 0 : i32
    %255 = vector.broadcast %c0_i32_97 : i32 to vector<1x512xi32>
    %256 = arith.cmpi sge, %0, %255 : vector<1x512xi32>
    %c16_i32_98 = arith.constant 16 : i32
    %257 = vector.broadcast %c16_i32_98 : i32 to vector<1x512xi32>
    %258 = arith.cmpi slt, %0, %257 : vector<1x512xi32>
    %259 = arith.andi %256, %258 : vector<1x512xi1>
    %c-2_i32_99 = arith.constant -2 : i32
    %260 = vector.broadcast %c-2_i32_99 : i32 to vector<1x512xi32>
    %261 = arith.cmpi sge, %1, %260 : vector<1x512xi32>
    %262 = arith.andi %259, %261 : vector<1x512xi1>
    %c14_i32_100 = arith.constant 14 : i32
    %263 = vector.broadcast %c14_i32_100 : i32 to vector<1x512xi32>
    %264 = arith.cmpi slt, %1, %263 : vector<1x512xi32>
    %265 = arith.andi %262, %264 : vector<1x512xi1>
    %cst_101 = arith.constant 0.000000e+00 : f32
    %266 = vector.shape_cast %265 : vector<1x512xi1> to vector<1x512xi1>
    %267 = vector.broadcast %266 : vector<1x512xi1> to vector<12x512xi1>
    %268 = vector.broadcast %cst_101 : f32 to vector<12x512xf32>
    %269 = arith.select %267, %254, %268 : vector<12x512xi1>, vector<12x512xf32>
    %c168 = arith.constant 168 : index
    %c0_102 = arith.constant 0 : index
    %270 = vector.load %arg12[%c168, %c0_102] : memref<300x512xf32, #tpu.memory_space<vmem>>, vector<12x512xf32>
    tpu.vector_store %arg12[%c168, %c0_102], %269 {strides = array<i32>} : memref<300x512xf32, #tpu.memory_space<vmem>>, vector<12x512xf32>,
    %c498_i32 = arith.constant 498 : i32
    %271 = tpu.dynamic_rotate %16 by %c498_i32 dim 1 : vector<12x512xf32>, i32 -> vector<12x512xf32>
    %c-1_i32_103 = arith.constant -1 : i32
    %272 = vector.broadcast %c-1_i32_103 : i32 to vector<1x512xi32>
    %273 = arith.cmpi sge, %0, %272 : vector<1x512xi32>
    %c15_i32_104 = arith.constant 15 : i32
    %274 = vector.broadcast %c15_i32_104 : i32 to vector<1x512xi32>
    %275 = arith.cmpi slt, %0, %274 : vector<1x512xi32>
    %276 = arith.andi %273, %275 : vector<1x512xi1>
    %c2_i32_105 = arith.constant 2 : i32
    %277 = vector.broadcast %c2_i32_105 : i32 to vector<1x512xi32>
    %278 = arith.cmpi sge, %1, %277 : vector<1x512xi32>
    %279 = arith.andi %276, %278 : vector<1x512xi1>
    %c18_i32_106 = arith.constant 18 : i32
    %280 = vector.broadcast %c18_i32_106 : i32 to vector<1x512xi32>
    %281 = arith.cmpi slt, %1, %280 : vector<1x512xi32>
    %282 = arith.andi %279, %281 : vector<1x512xi1>
    %cst_107 = arith.constant 0.000000e+00 : f32
    %283 = vector.shape_cast %282 : vector<1x512xi1> to vector<1x512xi1>
    %284 = vector.broadcast %283 : vector<1x512xi1> to vector<12x512xi1>
    %285 = vector.broadcast %cst_107 : f32 to vector<12x512xf32>
    %286 = arith.select %284, %271, %285 : vector<12x512xi1>, vector<12x512xf32>
    %c180 = arith.constant 180 : index
    %c0_108 = arith.constant 0 : index
    %287 = vector.load %arg12[%c180, %c0_108] : memref<300x512xf32, #tpu.memory_space<vmem>>, vector<12x512xf32>
    tpu.vector_store %arg12[%c180, %c0_108], %286 {strides = array<i32>} : memref<300x512xf32, #tpu.memory_space<vmem>>, vector<12x512xf32>,
    %c497_i32 = arith.constant 497 : i32
    %288 = tpu.dynamic_rotate %16 by %c497_i32 dim 1 : vector<12x512xf32>, i32 -> vector<12x512xf32>
    %c-1_i32_109 = arith.constant -1 : i32
    %289 = vector.broadcast %c-1_i32_109 : i32 to vector<1x512xi32>
    %290 = arith.cmpi sge, %0, %289 : vector<1x512xi32>
    %c15_i32_110 = arith.constant 15 : i32
    %291 = vector.broadcast %c15_i32_110 : i32 to vector<1x512xi32>
    %292 = arith.cmpi slt, %0, %291 : vector<1x512xi32>
    %293 = arith.andi %290, %292 : vector<1x512xi1>
    %c1_i32_111 = arith.constant 1 : i32
    %294 = vector.broadcast %c1_i32_111 : i32 to vector<1x512xi32>
    %295 = arith.cmpi sge, %1, %294 : vector<1x512xi32>
    %296 = arith.andi %293, %295 : vector<1x512xi1>
    %c17_i32_112 = arith.constant 17 : i32
    %297 = vector.broadcast %c17_i32_112 : i32 to vector<1x512xi32>
    %298 = arith.cmpi slt, %1, %297 : vector<1x512xi32>
    %299 = arith.andi %296, %298 : vector<1x512xi1>
    %cst_113 = arith.constant 0.000000e+00 : f32
    %300 = vector.shape_cast %299 : vector<1x512xi1> to vector<1x512xi1>
    %301 = vector.broadcast %300 : vector<1x512xi1> to vector<12x512xi1>
    %302 = vector.broadcast %cst_113 : f32 to vector<12x512xf32>
    %303 = arith.select %301, %288, %302 : vector<12x512xi1>, vector<12x512xf32>
    %c192 = arith.constant 192 : index
    %c0_114 = arith.constant 0 : index
    %304 = vector.load %arg12[%c192, %c0_114] : memref<300x512xf32, #tpu.memory_space<vmem>>, vector<12x512xf32>
    tpu.vector_store %arg12[%c192, %c0_114], %303 {strides = array<i32>} : memref<300x512xf32, #tpu.memory_space<vmem>>, vector<12x512xf32>,
    %c496_i32 = arith.constant 496 : i32
    %305 = tpu.dynamic_rotate %16 by %c496_i32 dim 1 : vector<12x512xf32>, i32 -> vector<12x512xf32>
    %c-1_i32_115 = arith.constant -1 : i32
    %306 = vector.broadcast %c-1_i32_115 : i32 to vector<1x512xi32>
    %307 = arith.cmpi sge, %0, %306 : vector<1x512xi32>
    %c15_i32_116 = arith.constant 15 : i32
    %308 = vector.broadcast %c15_i32_116 : i32 to vector<1x512xi32>
    %309 = arith.cmpi slt, %0, %308 : vector<1x512xi32>
    %310 = arith.andi %307, %309 : vector<1x512xi1>
    %c0_i32_117 = arith.constant 0 : i32
    %311 = vector.broadcast %c0_i32_117 : i32 to vector<1x512xi32>
    %312 = arith.cmpi sge, %1, %311 : vector<1x512xi32>
    %313 = arith.andi %310, %312 : vector<1x512xi1>
    %c16_i32_118 = arith.constant 16 : i32
    %314 = vector.broadcast %c16_i32_118 : i32 to vector<1x512xi32>
    %315 = arith.cmpi slt, %1, %314 : vector<1x512xi32>
    %316 = arith.andi %313, %315 : vector<1x512xi1>
    %cst_119 = arith.constant 0.000000e+00 : f32
    %317 = vector.shape_cast %316 : vector<1x512xi1> to vector<1x512xi1>
    %318 = vector.broadcast %317 : vector<1x512xi1> to vector<12x512xi1>
    %319 = vector.broadcast %cst_119 : f32 to vector<12x512xf32>
    %320 = arith.select %318, %305, %319 : vector<12x512xi1>, vector<12x512xf32>
    %c204 = arith.constant 204 : index
    %c0_120 = arith.constant 0 : index
    %321 = vector.load %arg12[%c204, %c0_120] : memref<300x512xf32, #tpu.memory_space<vmem>>, vector<12x512xf32>
    tpu.vector_store %arg12[%c204, %c0_120], %320 {strides = array<i32>} : memref<300x512xf32, #tpu.memory_space<vmem>>, vector<12x512xf32>,
    %c495_i32 = arith.constant 495 : i32
    %322 = tpu.dynamic_rotate %16 by %c495_i32 dim 1 : vector<12x512xf32>, i32 -> vector<12x512xf32>
    %c-1_i32_121 = arith.constant -1 : i32
    %323 = vector.broadcast %c-1_i32_121 : i32 to vector<1x512xi32>
    %324 = arith.cmpi sge, %0, %323 : vector<1x512xi32>
    %c15_i32_122 = arith.constant 15 : i32
    %325 = vector.broadcast %c15_i32_122 : i32 to vector<1x512xi32>
    %326 = arith.cmpi slt, %0, %325 : vector<1x512xi32>
    %327 = arith.andi %324, %326 : vector<1x512xi1>
    %c-1_i32_123 = arith.constant -1 : i32
    %328 = vector.broadcast %c-1_i32_123 : i32 to vector<1x512xi32>
    %329 = arith.cmpi sge, %1, %328 : vector<1x512xi32>
    %330 = arith.andi %327, %329 : vector<1x512xi1>
    %c15_i32_124 = arith.constant 15 : i32
    %331 = vector.broadcast %c15_i32_124 : i32 to vector<1x512xi32>
    %332 = arith.cmpi slt, %1, %331 : vector<1x512xi32>
    %333 = arith.andi %330, %332 : vector<1x512xi1>
    %cst_125 = arith.constant 0.000000e+00 : f32
    %334 = vector.shape_cast %333 : vector<1x512xi1> to vector<1x512xi1>
    %335 = vector.broadcast %334 : vector<1x512xi1> to vector<12x512xi1>
    %336 = vector.broadcast %cst_125 : f32 to vector<12x512xf32>
    %337 = arith.select %335, %322, %336 : vector<12x512xi1>, vector<12x512xf32>
    %c216 = arith.constant 216 : index
    %c0_126 = arith.constant 0 : index
    %338 = vector.load %arg12[%c216, %c0_126] : memref<300x512xf32, #tpu.memory_space<vmem>>, vector<12x512xf32>
    tpu.vector_store %arg12[%c216, %c0_126], %337 {strides = array<i32>} : memref<300x512xf32, #tpu.memory_space<vmem>>, vector<12x512xf32>,
    %c494_i32 = arith.constant 494 : i32
    %339 = tpu.dynamic_rotate %16 by %c494_i32 dim 1 : vector<12x512xf32>, i32 -> vector<12x512xf32>
    %c-1_i32_127 = arith.constant -1 : i32
    %340 = vector.broadcast %c-1_i32_127 : i32 to vector<1x512xi32>
    %341 = arith.cmpi sge, %0, %340 : vector<1x512xi32>
    %c15_i32_128 = arith.constant 15 : i32
    %342 = vector.broadcast %c15_i32_128 : i32 to vector<1x512xi32>
    %343 = arith.cmpi slt, %0, %342 : vector<1x512xi32>
    %344 = arith.andi %341, %343 : vector<1x512xi1>
    %c-2_i32_129 = arith.constant -2 : i32
    %345 = vector.broadcast %c-2_i32_129 : i32 to vector<1x512xi32>
    %346 = arith.cmpi sge, %1, %345 : vector<1x512xi32>
    %347 = arith.andi %344, %346 : vector<1x512xi1>
    %c14_i32_130 = arith.constant 14 : i32
    %348 = vector.broadcast %c14_i32_130 : i32 to vector<1x512xi32>
    %349 = arith.cmpi slt, %1, %348 : vector<1x512xi32>
    %350 = arith.andi %347, %349 : vector<1x512xi1>
    %cst_131 = arith.constant 0.000000e+00 : f32
    %351 = vector.shape_cast %350 : vector<1x512xi1> to vector<1x512xi1>
    %352 = vector.broadcast %351 : vector<1x512xi1> to vector<12x512xi1>
    %353 = vector.broadcast %cst_131 : f32 to vector<12x512xf32>
    %354 = arith.select %352, %339, %353 : vector<12x512xi1>, vector<12x512xf32>
    %c228 = arith.constant 228 : index
    %c0_132 = arith.constant 0 : index
    %355 = vector.load %arg12[%c228, %c0_132] : memref<300x512xf32, #tpu.memory_space<vmem>>, vector<12x512xf32>
    tpu.vector_store %arg12[%c228, %c0_132], %354 {strides = array<i32>} : memref<300x512xf32, #tpu.memory_space<vmem>>, vector<12x512xf32>,
    %c482_i32 = arith.constant 482 : i32
    %356 = tpu.dynamic_rotate %16 by %c482_i32 dim 1 : vector<12x512xf32>, i32 -> vector<12x512xf32>
    %c-2_i32_133 = arith.constant -2 : i32
    %357 = vector.broadcast %c-2_i32_133 : i32 to vector<1x512xi32>
    %358 = arith.cmpi sge, %0, %357 : vector<1x512xi32>
    %c14_i32_134 = arith.constant 14 : i32
    %359 = vector.broadcast %c14_i32_134 : i32 to vector<1x512xi32>
    %360 = arith.cmpi slt, %0, %359 : vector<1x512xi32>
    %361 = arith.andi %358, %360 : vector<1x512xi1>
    %c2_i32_135 = arith.constant 2 : i32
    %362 = vector.broadcast %c2_i32_135 : i32 to vector<1x512xi32>
    %363 = arith.cmpi sge, %1, %362 : vector<1x512xi32>
    %364 = arith.andi %361, %363 : vector<1x512xi1>
    %c18_i32_136 = arith.constant 18 : i32
    %365 = vector.broadcast %c18_i32_136 : i32 to vector<1x512xi32>
    %366 = arith.cmpi slt, %1, %365 : vector<1x512xi32>
    %367 = arith.andi %364, %366 : vector<1x512xi1>
    %cst_137 = arith.constant 0.000000e+00 : f32
    %368 = vector.shape_cast %367 : vector<1x512xi1> to vector<1x512xi1>
    %369 = vector.broadcast %368 : vector<1x512xi1> to vector<12x512xi1>
    %370 = vector.broadcast %cst_137 : f32 to vector<12x512xf32>
    %371 = arith.select %369, %356, %370 : vector<12x512xi1>, vector<12x512xf32>
    %c240 = arith.constant 240 : index
    %c0_138 = arith.constant 0 : index
    %372 = vector.load %arg12[%c240, %c0_138] : memref<300x512xf32, #tpu.memory_space<vmem>>, vector<12x512xf32>
    tpu.vector_store %arg12[%c240, %c0_138], %371 {strides = array<i32>} : memref<300x512xf32, #tpu.memory_space<vmem>>, vector<12x512xf32>,
    %c481_i32 = arith.constant 481 : i32
    %373 = tpu.dynamic_rotate %16 by %c481_i32 dim 1 : vector<12x512xf32>, i32 -> vector<12x512xf32>
    %c-2_i32_139 = arith.constant -2 : i32
    %374 = vector.broadcast %c-2_i32_139 : i32 to vector<1x512xi32>
    %375 = arith.cmpi sge, %0, %374 : vector<1x512xi32>
    %c14_i32_140 = arith.constant 14 : i32
    %376 = vector.broadcast %c14_i32_140 : i32 to vector<1x512xi32>
    %377 = arith.cmpi slt, %0, %376 : vector<1x512xi32>
    %378 = arith.andi %375, %377 : vector<1x512xi1>
    %c1_i32_141 = arith.constant 1 : i32
    %379 = vector.broadcast %c1_i32_141 : i32 to vector<1x512xi32>
    %380 = arith.cmpi sge, %1, %379 : vector<1x512xi32>
    %381 = arith.andi %378, %380 : vector<1x512xi1>
    %c17_i32_142 = arith.constant 17 : i32
    %382 = vector.broadcast %c17_i32_142 : i32 to vector<1x512xi32>
    %383 = arith.cmpi slt, %1, %382 : vector<1x512xi32>
    %384 = arith.andi %381, %383 : vector<1x512xi1>
    %cst_143 = arith.constant 0.000000e+00 : f32
    %385 = vector.shape_cast %384 : vector<1x512xi1> to vector<1x512xi1>
    %386 = vector.broadcast %385 : vector<1x512xi1> to vector<12x512xi1>
    %387 = vector.broadcast %cst_143 : f32 to vector<12x512xf32>
    %388 = arith.select %386, %373, %387 : vector<12x512xi1>, vector<12x512xf32>
    %c252 = arith.constant 252 : index
    %c0_144 = arith.constant 0 : index
    %389 = vector.load %arg12[%c252, %c0_144] : memref<300x512xf32, #tpu.memory_space<vmem>>, vector<12x512xf32>
    tpu.vector_store %arg12[%c252, %c0_144], %388 {strides = array<i32>} : memref<300x512xf32, #tpu.memory_space<vmem>>, vector<12x512xf32>,
    %c480_i32 = arith.constant 480 : i32
    %390 = tpu.dynamic_rotate %16 by %c480_i32 dim 1 : vector<12x512xf32>, i32 -> vector<12x512xf32>
    %c-2_i32_145 = arith.constant -2 : i32
    %391 = vector.broadcast %c-2_i32_145 : i32 to vector<1x512xi32>
    %392 = arith.cmpi sge, %0, %391 : vector<1x512xi32>
    %c14_i32_146 = arith.constant 14 : i32
    %393 = vector.broadcast %c14_i32_146 : i32 to vector<1x512xi32>
    %394 = arith.cmpi slt, %0, %393 : vector<1x512xi32>
    %395 = arith.andi %392, %394 : vector<1x512xi1>
    %c0_i32_147 = arith.constant 0 : i32
    %396 = vector.broadcast %c0_i32_147 : i32 to vector<1x512xi32>
    %397 = arith.cmpi sge, %1, %396 : vector<1x512xi32>
    %398 = arith.andi %395, %397 : vector<1x512xi1>
    %c16_i32_148 = arith.constant 16 : i32
    %399 = vector.broadcast %c16_i32_148 : i32 to vector<1x512xi32>
    %400 = arith.cmpi slt, %1, %399 : vector<1x512xi32>
    %401 = arith.andi %398, %400 : vector<1x512xi1>
    %cst_149 = arith.constant 0.000000e+00 : f32
    %402 = vector.shape_cast %401 : vector<1x512xi1> to vector<1x512xi1>
    %403 = vector.broadcast %402 : vector<1x512xi1> to vector<12x512xi1>
    %404 = vector.broadcast %cst_149 : f32 to vector<12x512xf32>
    %405 = arith.select %403, %390, %404 : vector<12x512xi1>, vector<12x512xf32>
    %c264 = arith.constant 264 : index
    %c0_150 = arith.constant 0 : index
    %406 = vector.load %arg12[%c264, %c0_150] : memref<300x512xf32, #tpu.memory_space<vmem>>, vector<12x512xf32>
    tpu.vector_store %arg12[%c264, %c0_150], %405 {strides = array<i32>} : memref<300x512xf32, #tpu.memory_space<vmem>>, vector<12x512xf32>,
    %c479_i32 = arith.constant 479 : i32
    %407 = tpu.dynamic_rotate %16 by %c479_i32 dim 1 : vector<12x512xf32>, i32 -> vector<12x512xf32>
    %c-2_i32_151 = arith.constant -2 : i32
    %408 = vector.broadcast %c-2_i32_151 : i32 to vector<1x512xi32>
    %409 = arith.cmpi sge, %0, %408 : vector<1x512xi32>
    %c14_i32_152 = arith.constant 14 : i32
    %410 = vector.broadcast %c14_i32_152 : i32 to vector<1x512xi32>
    %411 = arith.cmpi slt, %0, %410 : vector<1x512xi32>
    %412 = arith.andi %409, %411 : vector<1x512xi1>
    %c-1_i32_153 = arith.constant -1 : i32
    %413 = vector.broadcast %c-1_i32_153 : i32 to vector<1x512xi32>
    %414 = arith.cmpi sge, %1, %413 : vector<1x512xi32>
    %415 = arith.andi %412, %414 : vector<1x512xi1>
    %c15_i32_154 = arith.constant 15 : i32
    %416 = vector.broadcast %c15_i32_154 : i32 to vector<1x512xi32>
    %417 = arith.cmpi slt, %1, %416 : vector<1x512xi32>
    %418 = arith.andi %415, %417 : vector<1x512xi1>
    %cst_155 = arith.constant 0.000000e+00 : f32
    %419 = vector.shape_cast %418 : vector<1x512xi1> to vector<1x512xi1>
    %420 = vector.broadcast %419 : vector<1x512xi1> to vector<12x512xi1>
    %421 = vector.broadcast %cst_155 : f32 to vector<12x512xf32>
    %422 = arith.select %420, %407, %421 : vector<12x512xi1>, vector<12x512xf32>
    %c276 = arith.constant 276 : index
    %c0_156 = arith.constant 0 : index
    %423 = vector.load %arg12[%c276, %c0_156] : memref<300x512xf32, #tpu.memory_space<vmem>>, vector<12x512xf32>
    tpu.vector_store %arg12[%c276, %c0_156], %422 {strides = array<i32>} : memref<300x512xf32, #tpu.memory_space<vmem>>, vector<12x512xf32>,
    %c478_i32 = arith.constant 478 : i32
    %424 = tpu.dynamic_rotate %16 by %c478_i32 dim 1 : vector<12x512xf32>, i32 -> vector<12x512xf32>
    %c-2_i32_157 = arith.constant -2 : i32
    %425 = vector.broadcast %c-2_i32_157 : i32 to vector<1x512xi32>
    %426 = arith.cmpi sge, %0, %425 : vector<1x512xi32>
    %c14_i32_158 = arith.constant 14 : i32
    %427 = vector.broadcast %c14_i32_158 : i32 to vector<1x512xi32>
    %428 = arith.cmpi slt, %0, %427 : vector<1x512xi32>
    %429 = arith.andi %426, %428 : vector<1x512xi1>
    %c-2_i32_159 = arith.constant -2 : i32
    %430 = vector.broadcast %c-2_i32_159 : i32 to vector<1x512xi32>
    %431 = arith.cmpi sge, %1, %430 : vector<1x512xi32>
    %432 = arith.andi %429, %431 : vector<1x512xi1>
    %c14_i32_160 = arith.constant 14 : i32
    %433 = vector.broadcast %c14_i32_160 : i32 to vector<1x512xi32>
    %434 = arith.cmpi slt, %1, %433 : vector<1x512xi32>
    %435 = arith.andi %432, %434 : vector<1x512xi1>
    %cst_161 = arith.constant 0.000000e+00 : f32
    %436 = vector.shape_cast %435 : vector<1x512xi1> to vector<1x512xi1>
    %437 = vector.broadcast %436 : vector<1x512xi1> to vector<12x512xi1>
    %438 = vector.broadcast %cst_161 : f32 to vector<12x512xf32>
    %439 = arith.select %437, %424, %438 : vector<12x512xi1>, vector<12x512xf32>
    %c288 = arith.constant 288 : index
    %c0_162 = arith.constant 0 : index
    %440 = vector.load %arg12[%c288, %c0_162] : memref<300x512xf32, #tpu.memory_space<vmem>>, vector<12x512xf32>
    tpu.vector_store %arg12[%c288, %c0_162], %439 {strides = array<i32>} : memref<300x512xf32, #tpu.memory_space<vmem>>, vector<12x512xf32>,
    %c0_163 = arith.constant 0 : index
    %c0_164 = arith.constant 0 : index
    %441 = vector.load %arg5[%c0_163, %c0_164] : memref<12x300xf32, #tpu.memory_space<vmem>>, vector<12x300xf32>
    %c0_165 = arith.constant 0 : index
    %c0_166 = arith.constant 0 : index
    %442 = vector.load %arg12[%c0_165, %c0_166] : memref<300x512xf32, #tpu.memory_space<vmem>>, vector<300x512xf32>
    %cst_167 = arith.constant dense<0.000000e+00> : vector<12x512xf32>
    %443 = tpu.matmul %441, %442, %cst_167 {dimension_numbers = #tpu.dot_dimension_numbers<[1], [0], [0], [1], [0, 0, 1, 1], [], []>} : vector<12x300xf32>, vector<300x512xf32>, vector<12x512xf32> -> vector<12x512xf32>
    %444 = tpu.iota {dimensions = array<i32: 0>} : vector<512x128xi32>
    %c256_i32 = arith.constant 256 : i32
    %445 = vector.broadcast %c256_i32 : i32 to vector<1x128xi32>
    %446 = arith.muli %2, %445 : vector<1x128xi32>
    %c2_i32_168 = arith.constant 2 : i32
    %447 = vector.broadcast %c2_i32_168 : i32 to vector<1x128xi32>
    %448 = arith.muli %447, %3 : vector<1x128xi32>
    %c16_i32_169 = arith.constant 16 : i32
    %449 = vector.broadcast %c16_i32_169 : i32 to vector<1x128xi32>
    %450 = arith.muli %448, %449 : vector<1x128xi32>
    %451 = arith.addi %446, %450 : vector<1x128xi32>
    %c2_i32_170 = arith.constant 2 : i32
    %452 = vector.broadcast %c2_i32_170 : i32 to vector<1x128xi32>
    %453 = arith.muli %452, %4 : vector<1x128xi32>
    %454 = arith.addi %451, %453 : vector<1x128xi32>
    %455 = vector.broadcast %454 : vector<1x128xi32> to vector<512x128xi32>
    %456 = arith.cmpi eq, %444, %455 : vector<512x128xi32>
    %cst_171 = arith.constant 1.000000e+00 : f32
    %cst_172 = arith.constant 0.000000e+00 : f32
    %457 = vector.broadcast %cst_171 : f32 to vector<512x128xf32>
    %458 = vector.broadcast %cst_172 : f32 to vector<512x128xf32>
    %459 = arith.select %456, %457, %458 : vector<512x128xi1>, vector<512x128xf32>
    %cst_173 = arith.constant dense<0.000000e+00> : vector<12x128xf32>
    %460 = tpu.matmul %443, %459, %cst_173 {dimension_numbers = #tpu.dot_dimension_numbers<[1], [0], [0], [1], [0, 0, 1, 1], [], []>} : vector<12x512xf32>, vector<512x128xf32>, vector<12x128xf32> -> vector<12x128xf32>
    %c0_174 = arith.constant 0 : index
    %c0_175 = arith.constant 0 : index
    %461 = vector.load %arg6[%c0_174, %c0_175] : memref<12x1xf32, #tpu.memory_space<vmem>>, vector<12x1xf32>
    %462 = vector.broadcast %461 : vector<12x1xf32> to vector<12x128xf32>
    %463 = arith.addf %460, %462 : vector<12x128xf32>
    %cst_176 = arith.constant 0.000000e+00 : f32
    %464 = vector.broadcast %cst_176 : f32 to vector<12x128xf32>
    %465 = arith.subf %464, %463 : vector<12x128xf32>
    %466 = math.exp %465 : vector<12x128xf32>
    %cst_177 = arith.constant 1.000000e+00 : f32
    %467 = vector.broadcast %cst_177 : f32 to vector<12x128xf32>
    %468 = arith.addf %467, %466 : vector<12x128xf32>
    %469 = tpu.reciprocal %468 : vector<12x128xf32> -> vector<12x128xf32>
    %c18_i32_178 = arith.constant 18 : i32
    %470 = tpu.dynamic_rotate %469 by %c18_i32_178 dim 1 : vector<12x128xf32>, i32 -> vector<12x128xf32>
    %c2_i32_179 = arith.constant 2 : i32
    %471 = vector.broadcast %c2_i32_179 : i32 to vector<1x128xi32>
    %472 = arith.cmpi sge, %3, %471 : vector<1x128xi32>
    %c10_i32 = arith.constant 10 : i32
    %473 = vector.broadcast %c10_i32 : i32 to vector<1x128xi32>
    %474 = arith.cmpi slt, %3, %473 : vector<1x128xi32>
    %475 = arith.andi %472, %474 : vector<1x128xi1>
    %c2_i32_180 = arith.constant 2 : i32
    %476 = vector.broadcast %c2_i32_180 : i32 to vector<1x128xi32>
    %477 = arith.cmpi sge, %4, %476 : vector<1x128xi32>
    %478 = arith.andi %475, %477 : vector<1x128xi1>
    %c10_i32_181 = arith.constant 10 : i32
    %479 = vector.broadcast %c10_i32_181 : i32 to vector<1x128xi32>
    %480 = arith.cmpi slt, %4, %479 : vector<1x128xi32>
    %481 = arith.andi %478, %480 : vector<1x128xi1>
    %cst_182 = arith.constant 0.000000e+00 : f32
    %482 = vector.shape_cast %481 : vector<1x128xi1> to vector<1x128xi1>
    %483 = vector.broadcast %482 : vector<1x128xi1> to vector<12x128xi1>
    %484 = vector.broadcast %cst_182 : f32 to vector<12x128xf32>
    %485 = arith.select %483, %470, %484 : vector<12x128xi1>, vector<12x128xf32>
    %c0_183 = arith.constant 0 : index
    %c0_184 = arith.constant 0 : index
    %486 = vector.load %arg13[%c0_183, %c0_184] : memref<300x128xf32, #tpu.memory_space<vmem>>, vector<12x128xf32>
    tpu.vector_store %arg13[%c0_183, %c0_184], %485 {strides = array<i32>} : memref<300x128xf32, #tpu.memory_space<vmem>>, vector<12x128xf32>,
    %c17_i32_185 = arith.constant 17 : i32
    %487 = tpu.dynamic_rotate %469 by %c17_i32_185 dim 1 : vector<12x128xf32>, i32 -> vector<12x128xf32>
    %c2_i32_186 = arith.constant 2 : i32
    %488 = vector.broadcast %c2_i32_186 : i32 to vector<1x128xi32>
    %489 = arith.cmpi sge, %3, %488 : vector<1x128xi32>
    %c10_i32_187 = arith.constant 10 : i32
    %490 = vector.broadcast %c10_i32_187 : i32 to vector<1x128xi32>
    %491 = arith.cmpi slt, %3, %490 : vector<1x128xi32>
    %492 = arith.andi %489, %491 : vector<1x128xi1>
    %c1_i32_188 = arith.constant 1 : i32
    %493 = vector.broadcast %c1_i32_188 : i32 to vector<1x128xi32>
    %494 = arith.cmpi sge, %4, %493 : vector<1x128xi32>
    %495 = arith.andi %492, %494 : vector<1x128xi1>
    %c9_i32 = arith.constant 9 : i32
    %496 = vector.broadcast %c9_i32 : i32 to vector<1x128xi32>
    %497 = arith.cmpi slt, %4, %496 : vector<1x128xi32>
    %498 = arith.andi %495, %497 : vector<1x128xi1>
    %cst_189 = arith.constant 0.000000e+00 : f32
    %499 = vector.shape_cast %498 : vector<1x128xi1> to vector<1x128xi1>
    %500 = vector.broadcast %499 : vector<1x128xi1> to vector<12x128xi1>
    %501 = vector.broadcast %cst_189 : f32 to vector<12x128xf32>
    %502 = arith.select %500, %487, %501 : vector<12x128xi1>, vector<12x128xf32>
    %c12_190 = arith.constant 12 : index
    %c0_191 = arith.constant 0 : index
    %503 = vector.load %arg13[%c12_190, %c0_191] : memref<300x128xf32, #tpu.memory_space<vmem>>, vector<12x128xf32>
    tpu.vector_store %arg13[%c12_190, %c0_191], %502 {strides = array<i32>} : memref<300x128xf32, #tpu.memory_space<vmem>>, vector<12x128xf32>,
    %c16_i32_192 = arith.constant 16 : i32
    %504 = tpu.dynamic_rotate %469 by %c16_i32_192 dim 1 : vector<12x128xf32>, i32 -> vector<12x128xf32>
    %c2_i32_193 = arith.constant 2 : i32
    %505 = vector.broadcast %c2_i32_193 : i32 to vector<1x128xi32>
    %506 = arith.cmpi sge, %3, %505 : vector<1x128xi32>
    %c10_i32_194 = arith.constant 10 : i32
    %507 = vector.broadcast %c10_i32_194 : i32 to vector<1x128xi32>
    %508 = arith.cmpi slt, %3, %507 : vector<1x128xi32>
    %509 = arith.andi %506, %508 : vector<1x128xi1>
    %c0_i32_195 = arith.constant 0 : i32
    %510 = vector.broadcast %c0_i32_195 : i32 to vector<1x128xi32>
    %511 = arith.cmpi sge, %4, %510 : vector<1x128xi32>
    %512 = arith.andi %509, %511 : vector<1x128xi1>
    %c8_i32 = arith.constant 8 : i32
    %513 = vector.broadcast %c8_i32 : i32 to vector<1x128xi32>
    %514 = arith.cmpi slt, %4, %513 : vector<1x128xi32>
    %515 = arith.andi %512, %514 : vector<1x128xi1>
    %cst_196 = arith.constant 0.000000e+00 : f32
    %516 = vector.shape_cast %515 : vector<1x128xi1> to vector<1x128xi1>
    %517 = vector.broadcast %516 : vector<1x128xi1> to vector<12x128xi1>
    %518 = vector.broadcast %cst_196 : f32 to vector<12x128xf32>
    %519 = arith.select %517, %504, %518 : vector<12x128xi1>, vector<12x128xf32>
    %c24_197 = arith.constant 24 : index
    %c0_198 = arith.constant 0 : index
    %520 = vector.load %arg13[%c24_197, %c0_198] : memref<300x128xf32, #tpu.memory_space<vmem>>, vector<12x128xf32>
    tpu.vector_store %arg13[%c24_197, %c0_198], %519 {strides = array<i32>} : memref<300x128xf32, #tpu.memory_space<vmem>>, vector<12x128xf32>,
    %c15_i32_199 = arith.constant 15 : i32
    %521 = tpu.dynamic_rotate %469 by %c15_i32_199 dim 1 : vector<12x128xf32>, i32 -> vector<12x128xf32>
    %c2_i32_200 = arith.constant 2 : i32
    %522 = vector.broadcast %c2_i32_200 : i32 to vector<1x128xi32>
    %523 = arith.cmpi sge, %3, %522 : vector<1x128xi32>
    %c10_i32_201 = arith.constant 10 : i32
    %524 = vector.broadcast %c10_i32_201 : i32 to vector<1x128xi32>
    %525 = arith.cmpi slt, %3, %524 : vector<1x128xi32>
    %526 = arith.andi %523, %525 : vector<1x128xi1>
    %c-1_i32_202 = arith.constant -1 : i32
    %527 = vector.broadcast %c-1_i32_202 : i32 to vector<1x128xi32>
    %528 = arith.cmpi sge, %4, %527 : vector<1x128xi32>
    %529 = arith.andi %526, %528 : vector<1x128xi1>
    %c7_i32 = arith.constant 7 : i32
    %530 = vector.broadcast %c7_i32 : i32 to vector<1x128xi32>
    %531 = arith.cmpi slt, %4, %530 : vector<1x128xi32>
    %532 = arith.andi %529, %531 : vector<1x128xi1>
    %cst_203 = arith.constant 0.000000e+00 : f32
    %533 = vector.shape_cast %532 : vector<1x128xi1> to vector<1x128xi1>
    %534 = vector.broadcast %533 : vector<1x128xi1> to vector<12x128xi1>
    %535 = vector.broadcast %cst_203 : f32 to vector<12x128xf32>
    %536 = arith.select %534, %521, %535 : vector<12x128xi1>, vector<12x128xf32>
    %c36_204 = arith.constant 36 : index
    %c0_205 = arith.constant 0 : index
    %537 = vector.load %arg13[%c36_204, %c0_205] : memref<300x128xf32, #tpu.memory_space<vmem>>, vector<12x128xf32>
    tpu.vector_store %arg13[%c36_204, %c0_205], %536 {strides = array<i32>} : memref<300x128xf32, #tpu.memory_space<vmem>>, vector<12x128xf32>,
    %c14_i32_206 = arith.constant 14 : i32
    %538 = tpu.dynamic_rotate %469 by %c14_i32_206 dim 1 : vector<12x128xf32>, i32 -> vector<12x128xf32>
    %c2_i32_207 = arith.constant 2 : i32
    %539 = vector.broadcast %c2_i32_207 : i32 to vector<1x128xi32>
    %540 = arith.cmpi sge, %3, %539 : vector<1x128xi32>
    %c10_i32_208 = arith.constant 10 : i32
    %541 = vector.broadcast %c10_i32_208 : i32 to vector<1x128xi32>
    %542 = arith.cmpi slt, %3, %541 : vector<1x128xi32>
    %543 = arith.andi %540, %542 : vector<1x128xi1>
    %c-2_i32_209 = arith.constant -2 : i32
    %544 = vector.broadcast %c-2_i32_209 : i32 to vector<1x128xi32>
    %545 = arith.cmpi sge, %4, %544 : vector<1x128xi32>
    %546 = arith.andi %543, %545 : vector<1x128xi1>
    %c6_i32 = arith.constant 6 : i32
    %547 = vector.broadcast %c6_i32 : i32 to vector<1x128xi32>
    %548 = arith.cmpi slt, %4, %547 : vector<1x128xi32>
    %549 = arith.andi %546, %548 : vector<1x128xi1>
    %cst_210 = arith.constant 0.000000e+00 : f32
    %550 = vector.shape_cast %549 : vector<1x128xi1> to vector<1x128xi1>
    %551 = vector.broadcast %550 : vector<1x128xi1> to vector<12x128xi1>
    %552 = vector.broadcast %cst_210 : f32 to vector<12x128xf32>
    %553 = arith.select %551, %538, %552 : vector<12x128xi1>, vector<12x128xf32>
    %c48_211 = arith.constant 48 : index
    %c0_212 = arith.constant 0 : index
    %554 = vector.load %arg13[%c48_211, %c0_212] : memref<300x128xf32, #tpu.memory_space<vmem>>, vector<12x128xf32>
    tpu.vector_store %arg13[%c48_211, %c0_212], %553 {strides = array<i32>} : memref<300x128xf32, #tpu.memory_space<vmem>>, vector<12x128xf32>,
    %c10_i32_213 = arith.constant 10 : i32
    %555 = tpu.dynamic_rotate %469 by %c10_i32_213 dim 1 : vector<12x128xf32>, i32 -> vector<12x128xf32>
    %c1_i32_214 = arith.constant 1 : i32
    %556 = vector.broadcast %c1_i32_214 : i32 to vector<1x128xi32>
    %557 = arith.cmpi sge, %3, %556 : vector<1x128xi32>
    %c9_i32_215 = arith.constant 9 : i32
    %558 = vector.broadcast %c9_i32_215 : i32 to vector<1x128xi32>
    %559 = arith.cmpi slt, %3, %558 : vector<1x128xi32>
    %560 = arith.andi %557, %559 : vector<1x128xi1>
    %c2_i32_216 = arith.constant 2 : i32
    %561 = vector.broadcast %c2_i32_216 : i32 to vector<1x128xi32>
    %562 = arith.cmpi sge, %4, %561 : vector<1x128xi32>
    %563 = arith.andi %560, %562 : vector<1x128xi1>
    %c10_i32_217 = arith.constant 10 : i32
    %564 = vector.broadcast %c10_i32_217 : i32 to vector<1x128xi32>
    %565 = arith.cmpi slt, %4, %564 : vector<1x128xi32>
    %566 = arith.andi %563, %565 : vector<1x128xi1>
    %cst_218 = arith.constant 0.000000e+00 : f32
    %567 = vector.shape_cast %566 : vector<1x128xi1> to vector<1x128xi1>
    %568 = vector.broadcast %567 : vector<1x128xi1> to vector<12x128xi1>
    %569 = vector.broadcast %cst_218 : f32 to vector<12x128xf32>
    %570 = arith.select %568, %555, %569 : vector<12x128xi1>, vector<12x128xf32>
    %c60_219 = arith.constant 60 : index
    %c0_220 = arith.constant 0 : index
    %571 = vector.load %arg13[%c60_219, %c0_220] : memref<300x128xf32, #tpu.memory_space<vmem>>, vector<12x128xf32>
    tpu.vector_store %arg13[%c60_219, %c0_220], %570 {strides = array<i32>} : memref<300x128xf32, #tpu.memory_space<vmem>>, vector<12x128xf32>,
    %c9_i32_221 = arith.constant 9 : i32
    %572 = tpu.dynamic_rotate %469 by %c9_i32_221 dim 1 : vector<12x128xf32>, i32 -> vector<12x128xf32>
    %c1_i32_222 = arith.constant 1 : i32
    %573 = vector.broadcast %c1_i32_222 : i32 to vector<1x128xi32>
    %574 = arith.cmpi sge, %3, %573 : vector<1x128xi32>
    %c9_i32_223 = arith.constant 9 : i32
    %575 = vector.broadcast %c9_i32_223 : i32 to vector<1x128xi32>
    %576 = arith.cmpi slt, %3, %575 : vector<1x128xi32>
    %577 = arith.andi %574, %576 : vector<1x128xi1>
    %c1_i32_224 = arith.constant 1 : i32
    %578 = vector.broadcast %c1_i32_224 : i32 to vector<1x128xi32>
    %579 = arith.cmpi sge, %4, %578 : vector<1x128xi32>
    %580 = arith.andi %577, %579 : vector<1x128xi1>
    %c9_i32_225 = arith.constant 9 : i32
    %581 = vector.broadcast %c9_i32_225 : i32 to vector<1x128xi32>
    %582 = arith.cmpi slt, %4, %581 : vector<1x128xi32>
    %583 = arith.andi %580, %582 : vector<1x128xi1>
    %cst_226 = arith.constant 0.000000e+00 : f32
    %584 = vector.shape_cast %583 : vector<1x128xi1> to vector<1x128xi1>
    %585 = vector.broadcast %584 : vector<1x128xi1> to vector<12x128xi1>
    %586 = vector.broadcast %cst_226 : f32 to vector<12x128xf32>
    %587 = arith.select %585, %572, %586 : vector<12x128xi1>, vector<12x128xf32>
    %c72_227 = arith.constant 72 : index
    %c0_228 = arith.constant 0 : index
    %588 = vector.load %arg13[%c72_227, %c0_228] : memref<300x128xf32, #tpu.memory_space<vmem>>, vector<12x128xf32>
    tpu.vector_store %arg13[%c72_227, %c0_228], %587 {strides = array<i32>} : memref<300x128xf32, #tpu.memory_space<vmem>>, vector<12x128xf32>,
    %c8_i32_229 = arith.constant 8 : i32
    %589 = tpu.dynamic_rotate %469 by %c8_i32_229 dim 1 : vector<12x128xf32>, i32 -> vector<12x128xf32>
    %c1_i32_230 = arith.constant 1 : i32
    %590 = vector.broadcast %c1_i32_230 : i32 to vector<1x128xi32>
    %591 = arith.cmpi sge, %3, %590 : vector<1x128xi32>
    %c9_i32_231 = arith.constant 9 : i32
    %592 = vector.broadcast %c9_i32_231 : i32 to vector<1x128xi32>
    %593 = arith.cmpi slt, %3, %592 : vector<1x128xi32>
    %594 = arith.andi %591, %593 : vector<1x128xi1>
    %c0_i32_232 = arith.constant 0 : i32
    %595 = vector.broadcast %c0_i32_232 : i32 to vector<1x128xi32>
    %596 = arith.cmpi sge, %4, %595 : vector<1x128xi32>
    %597 = arith.andi %594, %596 : vector<1x128xi1>
    %c8_i32_233 = arith.constant 8 : i32
    %598 = vector.broadcast %c8_i32_233 : i32 to vector<1x128xi32>
    %599 = arith.cmpi slt, %4, %598 : vector<1x128xi32>
    %600 = arith.andi %597, %599 : vector<1x128xi1>
    %cst_234 = arith.constant 0.000000e+00 : f32
    %601 = vector.shape_cast %600 : vector<1x128xi1> to vector<1x128xi1>
    %602 = vector.broadcast %601 : vector<1x128xi1> to vector<12x128xi1>
    %603 = vector.broadcast %cst_234 : f32 to vector<12x128xf32>
    %604 = arith.select %602, %589, %603 : vector<12x128xi1>, vector<12x128xf32>
    %c84_235 = arith.constant 84 : index
    %c0_236 = arith.constant 0 : index
    %605 = vector.load %arg13[%c84_235, %c0_236] : memref<300x128xf32, #tpu.memory_space<vmem>>, vector<12x128xf32>
    tpu.vector_store %arg13[%c84_235, %c0_236], %604 {strides = array<i32>} : memref<300x128xf32, #tpu.memory_space<vmem>>, vector<12x128xf32>,
    %c7_i32_237 = arith.constant 7 : i32
    %606 = tpu.dynamic_rotate %469 by %c7_i32_237 dim 1 : vector<12x128xf32>, i32 -> vector<12x128xf32>
    %c1_i32_238 = arith.constant 1 : i32
    %607 = vector.broadcast %c1_i32_238 : i32 to vector<1x128xi32>
    %608 = arith.cmpi sge, %3, %607 : vector<1x128xi32>
    %c9_i32_239 = arith.constant 9 : i32
    %609 = vector.broadcast %c9_i32_239 : i32 to vector<1x128xi32>
    %610 = arith.cmpi slt, %3, %609 : vector<1x128xi32>
    %611 = arith.andi %608, %610 : vector<1x128xi1>
    %c-1_i32_240 = arith.constant -1 : i32
    %612 = vector.broadcast %c-1_i32_240 : i32 to vector<1x128xi32>
    %613 = arith.cmpi sge, %4, %612 : vector<1x128xi32>
    %614 = arith.andi %611, %613 : vector<1x128xi1>
    %c7_i32_241 = arith.constant 7 : i32
    %615 = vector.broadcast %c7_i32_241 : i32 to vector<1x128xi32>
    %616 = arith.cmpi slt, %4, %615 : vector<1x128xi32>
    %617 = arith.andi %614, %616 : vector<1x128xi1>
    %cst_242 = arith.constant 0.000000e+00 : f32
    %618 = vector.shape_cast %617 : vector<1x128xi1> to vector<1x128xi1>
    %619 = vector.broadcast %618 : vector<1x128xi1> to vector<12x128xi1>
    %620 = vector.broadcast %cst_242 : f32 to vector<12x128xf32>
    %621 = arith.select %619, %606, %620 : vector<12x128xi1>, vector<12x128xf32>
    %c96_243 = arith.constant 96 : index
    %c0_244 = arith.constant 0 : index
    %622 = vector.load %arg13[%c96_243, %c0_244] : memref<300x128xf32, #tpu.memory_space<vmem>>, vector<12x128xf32>
    tpu.vector_store %arg13[%c96_243, %c0_244], %621 {strides = array<i32>} : memref<300x128xf32, #tpu.memory_space<vmem>>, vector<12x128xf32>,
    %c6_i32_245 = arith.constant 6 : i32
    %623 = tpu.dynamic_rotate %469 by %c6_i32_245 dim 1 : vector<12x128xf32>, i32 -> vector<12x128xf32>
    %c1_i32_246 = arith.constant 1 : i32
    %624 = vector.broadcast %c1_i32_246 : i32 to vector<1x128xi32>
    %625 = arith.cmpi sge, %3, %624 : vector<1x128xi32>
    %c9_i32_247 = arith.constant 9 : i32
    %626 = vector.broadcast %c9_i32_247 : i32 to vector<1x128xi32>
    %627 = arith.cmpi slt, %3, %626 : vector<1x128xi32>
    %628 = arith.andi %625, %627 : vector<1x128xi1>
    %c-2_i32_248 = arith.constant -2 : i32
    %629 = vector.broadcast %c-2_i32_248 : i32 to vector<1x128xi32>
    %630 = arith.cmpi sge, %4, %629 : vector<1x128xi32>
    %631 = arith.andi %628, %630 : vector<1x128xi1>
    %c6_i32_249 = arith.constant 6 : i32
    %632 = vector.broadcast %c6_i32_249 : i32 to vector<1x128xi32>
    %633 = arith.cmpi slt, %4, %632 : vector<1x128xi32>
    %634 = arith.andi %631, %633 : vector<1x128xi1>
    %cst_250 = arith.constant 0.000000e+00 : f32
    %635 = vector.shape_cast %634 : vector<1x128xi1> to vector<1x128xi1>
    %636 = vector.broadcast %635 : vector<1x128xi1> to vector<12x128xi1>
    %637 = vector.broadcast %cst_250 : f32 to vector<12x128xf32>
    %638 = arith.select %636, %623, %637 : vector<12x128xi1>, vector<12x128xf32>
    %c108_251 = arith.constant 108 : index
    %c0_252 = arith.constant 0 : index
    %639 = vector.load %arg13[%c108_251, %c0_252] : memref<300x128xf32, #tpu.memory_space<vmem>>, vector<12x128xf32>
    tpu.vector_store %arg13[%c108_251, %c0_252], %638 {strides = array<i32>} : memref<300x128xf32, #tpu.memory_space<vmem>>, vector<12x128xf32>,
    %c2_i32_253 = arith.constant 2 : i32
    %640 = tpu.dynamic_rotate %469 by %c2_i32_253 dim 1 : vector<12x128xf32>, i32 -> vector<12x128xf32>
    %c0_i32_254 = arith.constant 0 : i32
    %641 = vector.broadcast %c0_i32_254 : i32 to vector<1x128xi32>
    %642 = arith.cmpi sge, %3, %641 : vector<1x128xi32>
    %c8_i32_255 = arith.constant 8 : i32
    %643 = vector.broadcast %c8_i32_255 : i32 to vector<1x128xi32>
    %644 = arith.cmpi slt, %3, %643 : vector<1x128xi32>
    %645 = arith.andi %642, %644 : vector<1x128xi1>
    %c2_i32_256 = arith.constant 2 : i32
    %646 = vector.broadcast %c2_i32_256 : i32 to vector<1x128xi32>
    %647 = arith.cmpi sge, %4, %646 : vector<1x128xi32>
    %648 = arith.andi %645, %647 : vector<1x128xi1>
    %c10_i32_257 = arith.constant 10 : i32
    %649 = vector.broadcast %c10_i32_257 : i32 to vector<1x128xi32>
    %650 = arith.cmpi slt, %4, %649 : vector<1x128xi32>
    %651 = arith.andi %648, %650 : vector<1x128xi1>
    %cst_258 = arith.constant 0.000000e+00 : f32
    %652 = vector.shape_cast %651 : vector<1x128xi1> to vector<1x128xi1>
    %653 = vector.broadcast %652 : vector<1x128xi1> to vector<12x128xi1>
    %654 = vector.broadcast %cst_258 : f32 to vector<12x128xf32>
    %655 = arith.select %653, %640, %654 : vector<12x128xi1>, vector<12x128xf32>
    %c120_259 = arith.constant 120 : index
    %c0_260 = arith.constant 0 : index
    %656 = vector.load %arg13[%c120_259, %c0_260] : memref<300x128xf32, #tpu.memory_space<vmem>>, vector<12x128xf32>
    tpu.vector_store %arg13[%c120_259, %c0_260], %655 {strides = array<i32>} : memref<300x128xf32, #tpu.memory_space<vmem>>, vector<12x128xf32>,
    %c1_i32_261 = arith.constant 1 : i32
    %657 = tpu.dynamic_rotate %469 by %c1_i32_261 dim 1 : vector<12x128xf32>, i32 -> vector<12x128xf32>
    %c0_i32_262 = arith.constant 0 : i32
    %658 = vector.broadcast %c0_i32_262 : i32 to vector<1x128xi32>
    %659 = arith.cmpi sge, %3, %658 : vector<1x128xi32>
    %c8_i32_263 = arith.constant 8 : i32
    %660 = vector.broadcast %c8_i32_263 : i32 to vector<1x128xi32>
    %661 = arith.cmpi slt, %3, %660 : vector<1x128xi32>
    %662 = arith.andi %659, %661 : vector<1x128xi1>
    %c1_i32_264 = arith.constant 1 : i32
    %663 = vector.broadcast %c1_i32_264 : i32 to vector<1x128xi32>
    %664 = arith.cmpi sge, %4, %663 : vector<1x128xi32>
    %665 = arith.andi %662, %664 : vector<1x128xi1>
    %c9_i32_265 = arith.constant 9 : i32
    %666 = vector.broadcast %c9_i32_265 : i32 to vector<1x128xi32>
    %667 = arith.cmpi slt, %4, %666 : vector<1x128xi32>
    %668 = arith.andi %665, %667 : vector<1x128xi1>
    %cst_266 = arith.constant 0.000000e+00 : f32
    %669 = vector.shape_cast %668 : vector<1x128xi1> to vector<1x128xi1>
    %670 = vector.broadcast %669 : vector<1x128xi1> to vector<12x128xi1>
    %671 = vector.broadcast %cst_266 : f32 to vector<12x128xf32>
    %672 = arith.select %670, %657, %671 : vector<12x128xi1>, vector<12x128xf32>
    %c132_267 = arith.constant 132 : index
    %c0_268 = arith.constant 0 : index
    %673 = vector.load %arg13[%c132_267, %c0_268] : memref<300x128xf32, #tpu.memory_space<vmem>>, vector<12x128xf32>
    tpu.vector_store %arg13[%c132_267, %c0_268], %672 {strides = array<i32>} : memref<300x128xf32, #tpu.memory_space<vmem>>, vector<12x128xf32>,
    %c0_i32_269 = arith.constant 0 : i32
    %674 = vector.broadcast %c0_i32_269 : i32 to vector<1x128xi32>
    %675 = arith.cmpi sge, %3, %674 : vector<1x128xi32>
    %c8_i32_270 = arith.constant 8 : i32
    %676 = vector.broadcast %c8_i32_270 : i32 to vector<1x128xi32>
    %677 = arith.cmpi slt, %3, %676 : vector<1x128xi32>
    %678 = arith.andi %675, %677 : vector<1x128xi1>
    %c0_i32_271 = arith.constant 0 : i32
    %679 = vector.broadcast %c0_i32_271 : i32 to vector<1x128xi32>
    %680 = arith.cmpi sge, %4, %679 : vector<1x128xi32>
    %681 = arith.andi %678, %680 : vector<1x128xi1>
    %c8_i32_272 = arith.constant 8 : i32
    %682 = vector.broadcast %c8_i32_272 : i32 to vector<1x128xi32>
    %683 = arith.cmpi slt, %4, %682 : vector<1x128xi32>
    %684 = arith.andi %681, %683 : vector<1x128xi1>
    %cst_273 = arith.constant 0.000000e+00 : f32
    %685 = vector.shape_cast %684 : vector<1x128xi1> to vector<1x128xi1>
    %686 = vector.broadcast %685 : vector<1x128xi1> to vector<12x128xi1>
    %687 = vector.broadcast %cst_273 : f32 to vector<12x128xf32>
    %688 = arith.select %686, %469, %687 : vector<12x128xi1>, vector<12x128xf32>
    %c144_274 = arith.constant 144 : index
    %c0_275 = arith.constant 0 : index
    %689 = vector.load %arg13[%c144_274, %c0_275] : memref<300x128xf32, #tpu.memory_space<vmem>>, vector<12x128xf32>
    tpu.vector_store %arg13[%c144_274, %c0_275], %688 {strides = array<i32>} : memref<300x128xf32, #tpu.memory_space<vmem>>, vector<12x128xf32>,
    %c127_i32 = arith.constant 127 : i32
    %690 = tpu.dynamic_rotate %469 by %c127_i32 dim 1 : vector<12x128xf32>, i32 -> vector<12x128xf32>
    %c0_i32_276 = arith.constant 0 : i32
    %691 = vector.broadcast %c0_i32_276 : i32 to vector<1x128xi32>
    %692 = arith.cmpi sge, %3, %691 : vector<1x128xi32>
    %c8_i32_277 = arith.constant 8 : i32
    %693 = vector.broadcast %c8_i32_277 : i32 to vector<1x128xi32>
    %694 = arith.cmpi slt, %3, %693 : vector<1x128xi32>
    %695 = arith.andi %692, %694 : vector<1x128xi1>
    %c-1_i32_278 = arith.constant -1 : i32
    %696 = vector.broadcast %c-1_i32_278 : i32 to vector<1x128xi32>
    %697 = arith.cmpi sge, %4, %696 : vector<1x128xi32>
    %698 = arith.andi %695, %697 : vector<1x128xi1>
    %c7_i32_279 = arith.constant 7 : i32
    %699 = vector.broadcast %c7_i32_279 : i32 to vector<1x128xi32>
    %700 = arith.cmpi slt, %4, %699 : vector<1x128xi32>
    %701 = arith.andi %698, %700 : vector<1x128xi1>
    %cst_280 = arith.constant 0.000000e+00 : f32
    %702 = vector.shape_cast %701 : vector<1x128xi1> to vector<1x128xi1>
    %703 = vector.broadcast %702 : vector<1x128xi1> to vector<12x128xi1>
    %704 = vector.broadcast %cst_280 : f32 to vector<12x128xf32>
    %705 = arith.select %703, %690, %704 : vector<12x128xi1>, vector<12x128xf32>
    %c156_281 = arith.constant 156 : index
    %c0_282 = arith.constant 0 : index
    %706 = vector.load %arg13[%c156_281, %c0_282] : memref<300x128xf32, #tpu.memory_space<vmem>>, vector<12x128xf32>
    tpu.vector_store %arg13[%c156_281, %c0_282], %705 {strides = array<i32>} : memref<300x128xf32, #tpu.memory_space<vmem>>, vector<12x128xf32>,
    %c126_i32 = arith.constant 126 : i32
    %707 = tpu.dynamic_rotate %469 by %c126_i32 dim 1 : vector<12x128xf32>, i32 -> vector<12x128xf32>
    %c0_i32_283 = arith.constant 0 : i32
    %708 = vector.broadcast %c0_i32_283 : i32 to vector<1x128xi32>
    %709 = arith.cmpi sge, %3, %708 : vector<1x128xi32>
    %c8_i32_284 = arith.constant 8 : i32
    %710 = vector.broadcast %c8_i32_284 : i32 to vector<1x128xi32>
    %711 = arith.cmpi slt, %3, %710 : vector<1x128xi32>
    %712 = arith.andi %709, %711 : vector<1x128xi1>
    %c-2_i32_285 = arith.constant -2 : i32
    %713 = vector.broadcast %c-2_i32_285 : i32 to vector<1x128xi32>
    %714 = arith.cmpi sge, %4, %713 : vector<1x128xi32>
    %715 = arith.andi %712, %714 : vector<1x128xi1>
    %c6_i32_286 = arith.constant 6 : i32
    %716 = vector.broadcast %c6_i32_286 : i32 to vector<1x128xi32>
    %717 = arith.cmpi slt, %4, %716 : vector<1x128xi32>
    %718 = arith.andi %715, %717 : vector<1x128xi1>
    %cst_287 = arith.constant 0.000000e+00 : f32
    %719 = vector.shape_cast %718 : vector<1x128xi1> to vector<1x128xi1>
    %720 = vector.broadcast %719 : vector<1x128xi1> to vector<12x128xi1>
    %721 = vector.broadcast %cst_287 : f32 to vector<12x128xf32>
    %722 = arith.select %720, %707, %721 : vector<12x128xi1>, vector<12x128xf32>
    %c168_288 = arith.constant 168 : index
    %c0_289 = arith.constant 0 : index
    %723 = vector.load %arg13[%c168_288, %c0_289] : memref<300x128xf32, #tpu.memory_space<vmem>>, vector<12x128xf32>
    tpu.vector_store %arg13[%c168_288, %c0_289], %722 {strides = array<i32>} : memref<300x128xf32, #tpu.memory_space<vmem>>, vector<12x128xf32>,
    %c122_i32 = arith.constant 122 : i32
    %724 = tpu.dynamic_rotate %469 by %c122_i32 dim 1 : vector<12x128xf32>, i32 -> vector<12x128xf32>
    %c-1_i32_290 = arith.constant -1 : i32
    %725 = vector.broadcast %c-1_i32_290 : i32 to vector<1x128xi32>
    %726 = arith.cmpi sge, %3, %725 : vector<1x128xi32>
    %c7_i32_291 = arith.constant 7 : i32
    %727 = vector.broadcast %c7_i32_291 : i32 to vector<1x128xi32>
    %728 = arith.cmpi slt, %3, %727 : vector<1x128xi32>
    %729 = arith.andi %726, %728 : vector<1x128xi1>
    %c2_i32_292 = arith.constant 2 : i32
    %730 = vector.broadcast %c2_i32_292 : i32 to vector<1x128xi32>
    %731 = arith.cmpi sge, %4, %730 : vector<1x128xi32>
    %732 = arith.andi %729, %731 : vector<1x128xi1>
    %c10_i32_293 = arith.constant 10 : i32
    %733 = vector.broadcast %c10_i32_293 : i32 to vector<1x128xi32>
    %734 = arith.cmpi slt, %4, %733 : vector<1x128xi32>
    %735 = arith.andi %732, %734 : vector<1x128xi1>
    %cst_294 = arith.constant 0.000000e+00 : f32
    %736 = vector.shape_cast %735 : vector<1x128xi1> to vector<1x128xi1>
    %737 = vector.broadcast %736 : vector<1x128xi1> to vector<12x128xi1>
    %738 = vector.broadcast %cst_294 : f32 to vector<12x128xf32>
    %739 = arith.select %737, %724, %738 : vector<12x128xi1>, vector<12x128xf32>
    %c180_295 = arith.constant 180 : index
    %c0_296 = arith.constant 0 : index
    %740 = vector.load %arg13[%c180_295, %c0_296] : memref<300x128xf32, #tpu.memory_space<vmem>>, vector<12x128xf32>
    tpu.vector_store %arg13[%c180_295, %c0_296], %739 {strides = array<i32>} : memref<300x128xf32, #tpu.memory_space<vmem>>, vector<12x128xf32>,
    %c121_i32 = arith.constant 121 : i32
    %741 = tpu.dynamic_rotate %469 by %c121_i32 dim 1 : vector<12x128xf32>, i32 -> vector<12x128xf32>
    %c-1_i32_297 = arith.constant -1 : i32
    %742 = vector.broadcast %c-1_i32_297 : i32 to vector<1x128xi32>
    %743 = arith.cmpi sge, %3, %742 : vector<1x128xi32>
    %c7_i32_298 = arith.constant 7 : i32
    %744 = vector.broadcast %c7_i32_298 : i32 to vector<1x128xi32>
    %745 = arith.cmpi slt, %3, %744 : vector<1x128xi32>
    %746 = arith.andi %743, %745 : vector<1x128xi1>
    %c1_i32_299 = arith.constant 1 : i32
    %747 = vector.broadcast %c1_i32_299 : i32 to vector<1x128xi32>
    %748 = arith.cmpi sge, %4, %747 : vector<1x128xi32>
    %749 = arith.andi %746, %748 : vector<1x128xi1>
    %c9_i32_300 = arith.constant 9 : i32
    %750 = vector.broadcast %c9_i32_300 : i32 to vector<1x128xi32>
    %751 = arith.cmpi slt, %4, %750 : vector<1x128xi32>
    %752 = arith.andi %749, %751 : vector<1x128xi1>
    %cst_301 = arith.constant 0.000000e+00 : f32
    %753 = vector.shape_cast %752 : vector<1x128xi1> to vector<1x128xi1>
    %754 = vector.broadcast %753 : vector<1x128xi1> to vector<12x128xi1>
    %755 = vector.broadcast %cst_301 : f32 to vector<12x128xf32>
    %756 = arith.select %754, %741, %755 : vector<12x128xi1>, vector<12x128xf32>
    %c192_302 = arith.constant 192 : index
    %c0_303 = arith.constant 0 : index
    %757 = vector.load %arg13[%c192_302, %c0_303] : memref<300x128xf32, #tpu.memory_space<vmem>>, vector<12x128xf32>
    tpu.vector_store %arg13[%c192_302, %c0_303], %756 {strides = array<i32>} : memref<300x128xf32, #tpu.memory_space<vmem>>, vector<12x128xf32>,
    %c120_i32 = arith.constant 120 : i32
    %758 = tpu.dynamic_rotate %469 by %c120_i32 dim 1 : vector<12x128xf32>, i32 -> vector<12x128xf32>
    %c-1_i32_304 = arith.constant -1 : i32
    %759 = vector.broadcast %c-1_i32_304 : i32 to vector<1x128xi32>
    %760 = arith.cmpi sge, %3, %759 : vector<1x128xi32>
    %c7_i32_305 = arith.constant 7 : i32
    %761 = vector.broadcast %c7_i32_305 : i32 to vector<1x128xi32>
    %762 = arith.cmpi slt, %3, %761 : vector<1x128xi32>
    %763 = arith.andi %760, %762 : vector<1x128xi1>
    %c0_i32_306 = arith.constant 0 : i32
    %764 = vector.broadcast %c0_i32_306 : i32 to vector<1x128xi32>
    %765 = arith.cmpi sge, %4, %764 : vector<1x128xi32>
    %766 = arith.andi %763, %765 : vector<1x128xi1>
    %c8_i32_307 = arith.constant 8 : i32
    %767 = vector.broadcast %c8_i32_307 : i32 to vector<1x128xi32>
    %768 = arith.cmpi slt, %4, %767 : vector<1x128xi32>
    %769 = arith.andi %766, %768 : vector<1x128xi1>
    %cst_308 = arith.constant 0.000000e+00 : f32
    %770 = vector.shape_cast %769 : vector<1x128xi1> to vector<1x128xi1>
    %771 = vector.broadcast %770 : vector<1x128xi1> to vector<12x128xi1>
    %772 = vector.broadcast %cst_308 : f32 to vector<12x128xf32>
    %773 = arith.select %771, %758, %772 : vector<12x128xi1>, vector<12x128xf32>
    %c204_309 = arith.constant 204 : index
    %c0_310 = arith.constant 0 : index
    %774 = vector.load %arg13[%c204_309, %c0_310] : memref<300x128xf32, #tpu.memory_space<vmem>>, vector<12x128xf32>
    tpu.vector_store %arg13[%c204_309, %c0_310], %773 {strides = array<i32>} : memref<300x128xf32, #tpu.memory_space<vmem>>, vector<12x128xf32>,
    %c119_i32 = arith.constant 119 : i32
    %775 = tpu.dynamic_rotate %469 by %c119_i32 dim 1 : vector<12x128xf32>, i32 -> vector<12x128xf32>
    %c-1_i32_311 = arith.constant -1 : i32
    %776 = vector.broadcast %c-1_i32_311 : i32 to vector<1x128xi32>
    %777 = arith.cmpi sge, %3, %776 : vector<1x128xi32>
    %c7_i32_312 = arith.constant 7 : i32
    %778 = vector.broadcast %c7_i32_312 : i32 to vector<1x128xi32>
    %779 = arith.cmpi slt, %3, %778 : vector<1x128xi32>
    %780 = arith.andi %777, %779 : vector<1x128xi1>
    %c-1_i32_313 = arith.constant -1 : i32
    %781 = vector.broadcast %c-1_i32_313 : i32 to vector<1x128xi32>
    %782 = arith.cmpi sge, %4, %781 : vector<1x128xi32>
    %783 = arith.andi %780, %782 : vector<1x128xi1>
    %c7_i32_314 = arith.constant 7 : i32
    %784 = vector.broadcast %c7_i32_314 : i32 to vector<1x128xi32>
    %785 = arith.cmpi slt, %4, %784 : vector<1x128xi32>
    %786 = arith.andi %783, %785 : vector<1x128xi1>
    %cst_315 = arith.constant 0.000000e+00 : f32
    %787 = vector.shape_cast %786 : vector<1x128xi1> to vector<1x128xi1>
    %788 = vector.broadcast %787 : vector<1x128xi1> to vector<12x128xi1>
    %789 = vector.broadcast %cst_315 : f32 to vector<12x128xf32>
    %790 = arith.select %788, %775, %789 : vector<12x128xi1>, vector<12x128xf32>
    %c216_316 = arith.constant 216 : index
    %c0_317 = arith.constant 0 : index
    %791 = vector.load %arg13[%c216_316, %c0_317] : memref<300x128xf32, #tpu.memory_space<vmem>>, vector<12x128xf32>
    tpu.vector_store %arg13[%c216_316, %c0_317], %790 {strides = array<i32>} : memref<300x128xf32, #tpu.memory_space<vmem>>, vector<12x128xf32>,
    %c118_i32 = arith.constant 118 : i32
    %792 = tpu.dynamic_rotate %469 by %c118_i32 dim 1 : vector<12x128xf32>, i32 -> vector<12x128xf32>
    %c-1_i32_318 = arith.constant -1 : i32
    %793 = vector.broadcast %c-1_i32_318 : i32 to vector<1x128xi32>
    %794 = arith.cmpi sge, %3, %793 : vector<1x128xi32>
    %c7_i32_319 = arith.constant 7 : i32
    %795 = vector.broadcast %c7_i32_319 : i32 to vector<1x128xi32>
    %796 = arith.cmpi slt, %3, %795 : vector<1x128xi32>
    %797 = arith.andi %794, %796 : vector<1x128xi1>
    %c-2_i32_320 = arith.constant -2 : i32
    %798 = vector.broadcast %c-2_i32_320 : i32 to vector<1x128xi32>
    %799 = arith.cmpi sge, %4, %798 : vector<1x128xi32>
    %800 = arith.andi %797, %799 : vector<1x128xi1>
    %c6_i32_321 = arith.constant 6 : i32
    %801 = vector.broadcast %c6_i32_321 : i32 to vector<1x128xi32>
    %802 = arith.cmpi slt, %4, %801 : vector<1x128xi32>
    %803 = arith.andi %800, %802 : vector<1x128xi1>
    %cst_322 = arith.constant 0.000000e+00 : f32
    %804 = vector.shape_cast %803 : vector<1x128xi1> to vector<1x128xi1>
    %805 = vector.broadcast %804 : vector<1x128xi1> to vector<12x128xi1>
    %806 = vector.broadcast %cst_322 : f32 to vector<12x128xf32>
    %807 = arith.select %805, %792, %806 : vector<12x128xi1>, vector<12x128xf32>
    %c228_323 = arith.constant 228 : index
    %c0_324 = arith.constant 0 : index
    %808 = vector.load %arg13[%c228_323, %c0_324] : memref<300x128xf32, #tpu.memory_space<vmem>>, vector<12x128xf32>
    tpu.vector_store %arg13[%c228_323, %c0_324], %807 {strides = array<i32>} : memref<300x128xf32, #tpu.memory_space<vmem>>, vector<12x128xf32>,
    %c114_i32 = arith.constant 114 : i32
    %809 = tpu.dynamic_rotate %469 by %c114_i32 dim 1 : vector<12x128xf32>, i32 -> vector<12x128xf32>
    %c-2_i32_325 = arith.constant -2 : i32
    %810 = vector.broadcast %c-2_i32_325 : i32 to vector<1x128xi32>
    %811 = arith.cmpi sge, %3, %810 : vector<1x128xi32>
    %c6_i32_326 = arith.constant 6 : i32
    %812 = vector.broadcast %c6_i32_326 : i32 to vector<1x128xi32>
    %813 = arith.cmpi slt, %3, %812 : vector<1x128xi32>
    %814 = arith.andi %811, %813 : vector<1x128xi1>
    %c2_i32_327 = arith.constant 2 : i32
    %815 = vector.broadcast %c2_i32_327 : i32 to vector<1x128xi32>
    %816 = arith.cmpi sge, %4, %815 : vector<1x128xi32>
    %817 = arith.andi %814, %816 : vector<1x128xi1>
    %c10_i32_328 = arith.constant 10 : i32
    %818 = vector.broadcast %c10_i32_328 : i32 to vector<1x128xi32>
    %819 = arith.cmpi slt, %4, %818 : vector<1x128xi32>
    %820 = arith.andi %817, %819 : vector<1x128xi1>
    %cst_329 = arith.constant 0.000000e+00 : f32
    %821 = vector.shape_cast %820 : vector<1x128xi1> to vector<1x128xi1>
    %822 = vector.broadcast %821 : vector<1x128xi1> to vector<12x128xi1>
    %823 = vector.broadcast %cst_329 : f32 to vector<12x128xf32>
    %824 = arith.select %822, %809, %823 : vector<12x128xi1>, vector<12x128xf32>
    %c240_330 = arith.constant 240 : index
    %c0_331 = arith.constant 0 : index
    %825 = vector.load %arg13[%c240_330, %c0_331] : memref<300x128xf32, #tpu.memory_space<vmem>>, vector<12x128xf32>
    tpu.vector_store %arg13[%c240_330, %c0_331], %824 {strides = array<i32>} : memref<300x128xf32, #tpu.memory_space<vmem>>, vector<12x128xf32>,
    %c113_i32 = arith.constant 113 : i32
    %826 = tpu.dynamic_rotate %469 by %c113_i32 dim 1 : vector<12x128xf32>, i32 -> vector<12x128xf32>
    %c-2_i32_332 = arith.constant -2 : i32
    %827 = vector.broadcast %c-2_i32_332 : i32 to vector<1x128xi32>
    %828 = arith.cmpi sge, %3, %827 : vector<1x128xi32>
    %c6_i32_333 = arith.constant 6 : i32
    %829 = vector.broadcast %c6_i32_333 : i32 to vector<1x128xi32>
    %830 = arith.cmpi slt, %3, %829 : vector<1x128xi32>
    %831 = arith.andi %828, %830 : vector<1x128xi1>
    %c1_i32_334 = arith.constant 1 : i32
    %832 = vector.broadcast %c1_i32_334 : i32 to vector<1x128xi32>
    %833 = arith.cmpi sge, %4, %832 : vector<1x128xi32>
    %834 = arith.andi %831, %833 : vector<1x128xi1>
    %c9_i32_335 = arith.constant 9 : i32
    %835 = vector.broadcast %c9_i32_335 : i32 to vector<1x128xi32>
    %836 = arith.cmpi slt, %4, %835 : vector<1x128xi32>
    %837 = arith.andi %834, %836 : vector<1x128xi1>
    %cst_336 = arith.constant 0.000000e+00 : f32
    %838 = vector.shape_cast %837 : vector<1x128xi1> to vector<1x128xi1>
    %839 = vector.broadcast %838 : vector<1x128xi1> to vector<12x128xi1>
    %840 = vector.broadcast %cst_336 : f32 to vector<12x128xf32>
    %841 = arith.select %839, %826, %840 : vector<12x128xi1>, vector<12x128xf32>
    %c252_337 = arith.constant 252 : index
    %c0_338 = arith.constant 0 : index
    %842 = vector.load %arg13[%c252_337, %c0_338] : memref<300x128xf32, #tpu.memory_space<vmem>>, vector<12x128xf32>
    tpu.vector_store %arg13[%c252_337, %c0_338], %841 {strides = array<i32>} : memref<300x128xf32, #tpu.memory_space<vmem>>, vector<12x128xf32>,
    %c112_i32 = arith.constant 112 : i32
    %843 = tpu.dynamic_rotate %469 by %c112_i32 dim 1 : vector<12x128xf32>, i32 -> vector<12x128xf32>
    %c-2_i32_339 = arith.constant -2 : i32
    %844 = vector.broadcast %c-2_i32_339 : i32 to vector<1x128xi32>
    %845 = arith.cmpi sge, %3, %844 : vector<1x128xi32>
    %c6_i32_340 = arith.constant 6 : i32
    %846 = vector.broadcast %c6_i32_340 : i32 to vector<1x128xi32>
    %847 = arith.cmpi slt, %3, %846 : vector<1x128xi32>
    %848 = arith.andi %845, %847 : vector<1x128xi1>
    %c0_i32_341 = arith.constant 0 : i32
    %849 = vector.broadcast %c0_i32_341 : i32 to vector<1x128xi32>
    %850 = arith.cmpi sge, %4, %849 : vector<1x128xi32>
    %851 = arith.andi %848, %850 : vector<1x128xi1>
    %c8_i32_342 = arith.constant 8 : i32
    %852 = vector.broadcast %c8_i32_342 : i32 to vector<1x128xi32>
    %853 = arith.cmpi slt, %4, %852 : vector<1x128xi32>
    %854 = arith.andi %851, %853 : vector<1x128xi1>
    %cst_343 = arith.constant 0.000000e+00 : f32
    %855 = vector.shape_cast %854 : vector<1x128xi1> to vector<1x128xi1>
    %856 = vector.broadcast %855 : vector<1x128xi1> to vector<12x128xi1>
    %857 = vector.broadcast %cst_343 : f32 to vector<12x128xf32>
    %858 = arith.select %856, %843, %857 : vector<12x128xi1>, vector<12x128xf32>
    %c264_344 = arith.constant 264 : index
    %c0_345 = arith.constant 0 : index
    %859 = vector.load %arg13[%c264_344, %c0_345] : memref<300x128xf32, #tpu.memory_space<vmem>>, vector<12x128xf32>
    tpu.vector_store %arg13[%c264_344, %c0_345], %858 {strides = array<i32>} : memref<300x128xf32, #tpu.memory_space<vmem>>, vector<12x128xf32>,
    %c111_i32 = arith.constant 111 : i32
    %860 = tpu.dynamic_rotate %469 by %c111_i32 dim 1 : vector<12x128xf32>, i32 -> vector<12x128xf32>
    %c-2_i32_346 = arith.constant -2 : i32
    %861 = vector.broadcast %c-2_i32_346 : i32 to vector<1x128xi32>
    %862 = arith.cmpi sge, %3, %861 : vector<1x128xi32>
    %c6_i32_347 = arith.constant 6 : i32
    %863 = vector.broadcast %c6_i32_347 : i32 to vector<1x128xi32>
    %864 = arith.cmpi slt, %3, %863 : vector<1x128xi32>
    %865 = arith.andi %862, %864 : vector<1x128xi1>
    %c-1_i32_348 = arith.constant -1 : i32
    %866 = vector.broadcast %c-1_i32_348 : i32 to vector<1x128xi32>
    %867 = arith.cmpi sge, %4, %866 : vector<1x128xi32>
    %868 = arith.andi %865, %867 : vector<1x128xi1>
    %c7_i32_349 = arith.constant 7 : i32
    %869 = vector.broadcast %c7_i32_349 : i32 to vector<1x128xi32>
    %870 = arith.cmpi slt, %4, %869 : vector<1x128xi32>
    %871 = arith.andi %868, %870 : vector<1x128xi1>
    %cst_350 = arith.constant 0.000000e+00 : f32
    %872 = vector.shape_cast %871 : vector<1x128xi1> to vector<1x128xi1>
    %873 = vector.broadcast %872 : vector<1x128xi1> to vector<12x128xi1>
    %874 = vector.broadcast %cst_350 : f32 to vector<12x128xf32>
    %875 = arith.select %873, %860, %874 : vector<12x128xi1>, vector<12x128xf32>
    %c276_351 = arith.constant 276 : index
    %c0_352 = arith.constant 0 : index
    %876 = vector.load %arg13[%c276_351, %c0_352] : memref<300x128xf32, #tpu.memory_space<vmem>>, vector<12x128xf32>
    tpu.vector_store %arg13[%c276_351, %c0_352], %875 {strides = array<i32>} : memref<300x128xf32, #tpu.memory_space<vmem>>, vector<12x128xf32>,
    %c110_i32 = arith.constant 110 : i32
    %877 = tpu.dynamic_rotate %469 by %c110_i32 dim 1 : vector<12x128xf32>, i32 -> vector<12x128xf32>
    %c-2_i32_353 = arith.constant -2 : i32
    %878 = vector.broadcast %c-2_i32_353 : i32 to vector<1x128xi32>
    %879 = arith.cmpi sge, %3, %878 : vector<1x128xi32>
    %c6_i32_354 = arith.constant 6 : i32
    %880 = vector.broadcast %c6_i32_354 : i32 to vector<1x128xi32>
    %881 = arith.cmpi slt, %3, %880 : vector<1x128xi32>
    %882 = arith.andi %879, %881 : vector<1x128xi1>
    %c-2_i32_355 = arith.constant -2 : i32
    %883 = vector.broadcast %c-2_i32_355 : i32 to vector<1x128xi32>
    %884 = arith.cmpi sge, %4, %883 : vector<1x128xi32>
    %885 = arith.andi %882, %884 : vector<1x128xi1>
    %c6_i32_356 = arith.constant 6 : i32
    %886 = vector.broadcast %c6_i32_356 : i32 to vector<1x128xi32>
    %887 = arith.cmpi slt, %4, %886 : vector<1x128xi32>
    %888 = arith.andi %885, %887 : vector<1x128xi1>
    %cst_357 = arith.constant 0.000000e+00 : f32
    %889 = vector.shape_cast %888 : vector<1x128xi1> to vector<1x128xi1>
    %890 = vector.broadcast %889 : vector<1x128xi1> to vector<12x128xi1>
    %891 = vector.broadcast %cst_357 : f32 to vector<12x128xf32>
    %892 = arith.select %890, %877, %891 : vector<12x128xi1>, vector<12x128xf32>
    %c288_358 = arith.constant 288 : index
    %c0_359 = arith.constant 0 : index
    %893 = vector.load %arg13[%c288_358, %c0_359] : memref<300x128xf32, #tpu.memory_space<vmem>>, vector<12x128xf32>
    tpu.vector_store %arg13[%c288_358, %c0_359], %892 {strides = array<i32>} : memref<300x128xf32, #tpu.memory_space<vmem>>, vector<12x128xf32>,
    %c0_360 = arith.constant 0 : index
    %c0_361 = arith.constant 0 : index
    %894 = vector.load %arg7[%c0_360, %c0_361] : memref<12x300xf32, #tpu.memory_space<vmem>>, vector<12x300xf32>
    %c0_362 = arith.constant 0 : index
    %c0_363 = arith.constant 0 : index
    %895 = vector.load %arg13[%c0_362, %c0_363] : memref<300x128xf32, #tpu.memory_space<vmem>>, vector<300x128xf32>
    %cst_364 = arith.constant dense<0.000000e+00> : vector<12x128xf32>
    %896 = tpu.matmul %894, %895, %cst_364 {dimension_numbers = #tpu.dot_dimension_numbers<[1], [0], [0], [1], [0, 0, 1, 1], [], []>} : vector<12x300xf32>, vector<300x128xf32>, vector<12x128xf32> -> vector<12x128xf32>
    %c0_365 = arith.constant 0 : index
    %c0_366 = arith.constant 0 : index
    %897 = vector.load %arg8[%c0_365, %c0_366] : memref<12x1xf32, #tpu.memory_space<vmem>>, vector<12x1xf32>
    %898 = vector.broadcast %897 : vector<12x1xf32> to vector<12x128xf32>
    %899 = arith.addf %896, %898 : vector<12x128xf32>
    %cst_367 = arith.constant 0.000000e+00 : f32
    %900 = vector.broadcast %cst_367 : f32 to vector<12x128xf32>
    %901 = arith.subf %900, %899 : vector<12x128xf32>
    %902 = math.exp %901 : vector<12x128xf32>
    %cst_368 = arith.constant 1.000000e+00 : f32
    %903 = vector.broadcast %cst_368 : f32 to vector<12x128xf32>
    %904 = arith.addf %903, %902 : vector<12x128xf32>
    %905 = tpu.reciprocal %904 : vector<12x128xf32> -> vector<12x128xf32>
    %c0_369 = arith.constant 0 : index
    %c0_370 = arith.constant 0 : index
    %c0_371 = arith.constant 0 : index
    %906 = vector.load %arg9[%c0_369, %c0_370, %c0_371] : memref<12x10x64xf32, #tpu.memory_space<vmem>>, vector<12x10x64xf32>
    %907 = tpu.concatenate %906, %906 in 2 : vector<12x10x64xf32>, vector<12x10x64xf32> -> vector<12x10x128xf32>
    %cst_372 = arith.constant 0.000000e+00 : f32
    %908 = vector.broadcast %cst_372 : f32 to vector<10x128xf32>
    %909 = vector.extract_strided_slice %907 {offsets = [0, 0, 0], sizes = [1, 10, 128], strides = [1, 1, 1]} : vector<12x10x128xf32> to vector<1x10x128xf32>
    %910 = vector.shape_cast %909 : vector<1x10x128xf32> to vector<10x128xf32>
    %911 = vector.extract_strided_slice %905 {offsets = [0, 0], sizes = [1, 128], strides = [1, 1]} : vector<12x128xf32> to vector<1x128xf32>
    %912 = vector.broadcast %911 : vector<1x128xf32> to vector<10x128xf32>
    %913 = arith.mulf %910, %912 : vector<10x128xf32>
    %914 = arith.addf %908, %913 : vector<10x128xf32>
    %915 = vector.extract_strided_slice %907 {offsets = [1, 0, 0], sizes = [1, 10, 128], strides = [1, 1, 1]} : vector<12x10x128xf32> to vector<1x10x128xf32>
    %916 = vector.shape_cast %915 : vector<1x10x128xf32> to vector<10x128xf32>
    %917 = vector.extract_strided_slice %905 {offsets = [1, 0], sizes = [1, 128], strides = [1, 1]} : vector<12x128xf32> to vector<1x128xf32>
    %918 = vector.broadcast %917 : vector<1x128xf32> to vector<10x128xf32>
    %919 = arith.mulf %916, %918 : vector<10x128xf32>
    %920 = arith.addf %914, %919 : vector<10x128xf32>
    %921 = vector.extract_strided_slice %907 {offsets = [2, 0, 0], sizes = [1, 10, 128], strides = [1, 1, 1]} : vector<12x10x128xf32> to vector<1x10x128xf32>
    %922 = vector.shape_cast %921 : vector<1x10x128xf32> to vector<10x128xf32>
    %923 = vector.extract_strided_slice %905 {offsets = [2, 0], sizes = [1, 128], strides = [1, 1]} : vector<12x128xf32> to vector<1x128xf32>
    %924 = vector.broadcast %923 : vector<1x128xf32> to vector<10x128xf32>
    %925 = arith.mulf %922, %924 : vector<10x128xf32>
    %926 = arith.addf %920, %925 : vector<10x128xf32>
    %927 = vector.extract_strided_slice %907 {offsets = [3, 0, 0], sizes = [1, 10, 128], strides = [1, 1, 1]} : vector<12x10x128xf32> to vector<1x10x128xf32>
    %928 = vector.shape_cast %927 : vector<1x10x128xf32> to vector<10x128xf32>
    %929 = vector.extract_strided_slice %905 {offsets = [3, 0], sizes = [1, 128], strides = [1, 1]} : vector<12x128xf32> to vector<1x128xf32>
    %930 = vector.broadcast %929 : vector<1x128xf32> to vector<10x128xf32>
    %931 = arith.mulf %928, %930 : vector<10x128xf32>
    %932 = arith.addf %926, %931 : vector<10x128xf32>
    %933 = vector.extract_strided_slice %907 {offsets = [4, 0, 0], sizes = [1, 10, 128], strides = [1, 1, 1]} : vector<12x10x128xf32> to vector<1x10x128xf32>
    %934 = vector.shape_cast %933 : vector<1x10x128xf32> to vector<10x128xf32>
    %935 = vector.extract_strided_slice %905 {offsets = [4, 0], sizes = [1, 128], strides = [1, 1]} : vector<12x128xf32> to vector<1x128xf32>
    %936 = vector.broadcast %935 : vector<1x128xf32> to vector<10x128xf32>
    %937 = arith.mulf %934, %936 : vector<10x128xf32>
    %938 = arith.addf %932, %937 : vector<10x128xf32>
    %939 = vector.extract_strided_slice %907 {offsets = [5, 0, 0], sizes = [1, 10, 128], strides = [1, 1, 1]} : vector<12x10x128xf32> to vector<1x10x128xf32>
    %940 = vector.shape_cast %939 : vector<1x10x128xf32> to vector<10x128xf32>
    %941 = vector.extract_strided_slice %905 {offsets = [5, 0], sizes = [1, 128], strides = [1, 1]} : vector<12x128xf32> to vector<1x128xf32>
    %942 = vector.broadcast %941 : vector<1x128xf32> to vector<10x128xf32>
    %943 = arith.mulf %940, %942 : vector<10x128xf32>
    %944 = arith.addf %938, %943 : vector<10x128xf32>
    %945 = vector.extract_strided_slice %907 {offsets = [6, 0, 0], sizes = [1, 10, 128], strides = [1, 1, 1]} : vector<12x10x128xf32> to vector<1x10x128xf32>
    %946 = vector.shape_cast %945 : vector<1x10x128xf32> to vector<10x128xf32>
    %947 = vector.extract_strided_slice %905 {offsets = [6, 0], sizes = [1, 128], strides = [1, 1]} : vector<12x128xf32> to vector<1x128xf32>
    %948 = vector.broadcast %947 : vector<1x128xf32> to vector<10x128xf32>
    %949 = arith.mulf %946, %948 : vector<10x128xf32>
    %950 = arith.addf %944, %949 : vector<10x128xf32>
    %951 = vector.extract_strided_slice %907 {offsets = [7, 0, 0], sizes = [1, 10, 128], strides = [1, 1, 1]} : vector<12x10x128xf32> to vector<1x10x128xf32>
    %952 = vector.shape_cast %951 : vector<1x10x128xf32> to vector<10x128xf32>
    %953 = vector.extract_strided_slice %905 {offsets = [7, 0], sizes = [1, 128], strides = [1, 1]} : vector<12x128xf32> to vector<1x128xf32>
    %954 = vector.broadcast %953 : vector<1x128xf32> to vector<10x128xf32>
    %955 = arith.mulf %952, %954 : vector<10x128xf32>
    %956 = arith.addf %950, %955 : vector<10x128xf32>
    %957 = vector.extract_strided_slice %907 {offsets = [8, 0, 0], sizes = [1, 10, 128], strides = [1, 1, 1]} : vector<12x10x128xf32> to vector<1x10x128xf32>
    %958 = vector.shape_cast %957 : vector<1x10x128xf32> to vector<10x128xf32>
    %959 = vector.extract_strided_slice %905 {offsets = [8, 0], sizes = [1, 128], strides = [1, 1]} : vector<12x128xf32> to vector<1x128xf32>
    %960 = vector.broadcast %959 : vector<1x128xf32> to vector<10x128xf32>
    %961 = arith.mulf %958, %960 : vector<10x128xf32>
    %962 = arith.addf %956, %961 : vector<10x128xf32>
    %963 = vector.extract_strided_slice %907 {offsets = [9, 0, 0], sizes = [1, 10, 128], strides = [1, 1, 1]} : vector<12x10x128xf32> to vector<1x10x128xf32>
    %964 = vector.shape_cast %963 : vector<1x10x128xf32> to vector<10x128xf32>
    %965 = vector.extract_strided_slice %905 {offsets = [9, 0], sizes = [1, 128], strides = [1, 1]} : vector<12x128xf32> to vector<1x128xf32>
    %966 = vector.broadcast %965 : vector<1x128xf32> to vector<10x128xf32>
    %967 = arith.mulf %964, %966 : vector<10x128xf32>
    %968 = arith.addf %962, %967 : vector<10x128xf32>
    %969 = vector.extract_strided_slice %907 {offsets = [10, 0, 0], sizes = [1, 10, 128], strides = [1, 1, 1]} : vector<12x10x128xf32> to vector<1x10x128xf32>
    %970 = vector.shape_cast %969 : vector<1x10x128xf32> to vector<10x128xf32>
    %971 = vector.extract_strided_slice %905 {offsets = [10, 0], sizes = [1, 128], strides = [1, 1]} : vector<12x128xf32> to vector<1x128xf32>
    %972 = vector.broadcast %971 : vector<1x128xf32> to vector<10x128xf32>
    %973 = arith.mulf %970, %972 : vector<10x128xf32>
    %974 = arith.addf %968, %973 : vector<10x128xf32>
    %975 = vector.extract_strided_slice %907 {offsets = [11, 0, 0], sizes = [1, 10, 128], strides = [1, 1, 1]} : vector<12x10x128xf32> to vector<1x10x128xf32>
    %976 = vector.shape_cast %975 : vector<1x10x128xf32> to vector<10x128xf32>
    %977 = vector.extract_strided_slice %905 {offsets = [11, 0], sizes = [1, 128], strides = [1, 1]} : vector<12x128xf32> to vector<1x128xf32>
    %978 = vector.broadcast %977 : vector<1x128xf32> to vector<10x128xf32>
    %979 = arith.mulf %976, %978 : vector<10x128xf32>
    %980 = arith.addf %974, %979 : vector<10x128xf32>
    %981 = tpu.iota {dimensions = array<i32: 0>} : vector<128x2xi32>
    %982 = tpu.iota {dimensions = array<i32: 1>} : vector<128x2xi32>
    %c64_i32 = arith.constant 64 : i32
    %983 = vector.broadcast %c64_i32 : i32 to vector<128x2xi32>
    %984 = arith.muli %982, %983 : vector<128x2xi32>
    %985 = arith.cmpi sge, %981, %984 : vector<128x2xi32>
    %c64_i32_373 = arith.constant 64 : i32
    %986 = vector.broadcast %c64_i32_373 : i32 to vector<128x2xi32>
    %987 = arith.muli %982, %986 : vector<128x2xi32>
    %c64_i32_374 = arith.constant 64 : i32
    %988 = vector.broadcast %c64_i32_374 : i32 to vector<128x2xi32>
    %989 = arith.addi %987, %988 : vector<128x2xi32>
    %990 = arith.cmpi slt, %981, %989 : vector<128x2xi32>
    %991 = arith.andi %985, %990 : vector<128x2xi1>
    %cst_375 = arith.constant 1.000000e+00 : f32
    %cst_376 = arith.constant 0.000000e+00 : f32
    %992 = vector.broadcast %cst_375 : f32 to vector<128x2xf32>
    %993 = vector.broadcast %cst_376 : f32 to vector<128x2xf32>
    %994 = arith.select %991, %992, %993 : vector<128x2xi1>, vector<128x2xf32>
    %cst_377 = arith.constant dense<0.000000e+00> : vector<10x2xf32>
    %995 = tpu.matmul %980, %994, %cst_377 {dimension_numbers = #tpu.dot_dimension_numbers<[1], [0], [0], [1], [0, 0, 1, 1], [], []>} : vector<10x128xf32>, vector<128x2xf32>, vector<10x2xf32> -> vector<10x2xf32>
    %c0_378 = arith.constant 0 : index
    %c0_379 = arith.constant 0 : index
    %996 = vector.load %arg10[%c0_378, %c0_379] : memref<10x1xf32, #tpu.memory_space<vmem>>, vector<10x1xf32>
    %997 = vector.broadcast %996 : vector<10x1xf32> to vector<10x2xf32>
    %998 = arith.addf %995, %997 : vector<10x2xf32>
    %c0_380 = arith.constant 0 : index
    %c0_381 = arith.constant 0 : index
    %999 = vector.load %arg11[%c0_380, %c0_381] : memref<10x2xf32, #tpu.memory_space<vmem>>, vector<10x2xf32>
    tpu.vector_store %arg11[%c0_380, %c0_381], %998 {strides = array<i32>} : memref<10x2xf32, #tpu.memory_space<vmem>>, vector<10x2xf32>,
    return
  }
}

</mosaic_0001>

<llo_original>
// kernel: lenet_forward.1
$region0: #{lenet_forward.1}
  #allocation0 [shape = 'u32[]', space=smem, size = 0x4, offset = 0x4, fixed_abs, tag = 'smem constant byte address 0x4 - core index']
  #allocation1 [shape = 'u32[72,128]{1,0:T(1,128)}', space=vmem, size = 0x9000, scoped, tag = 'internal scratch']
  #allocation2 [shape = 'f32[300,512]{1,0:T(8,128)}', space=vmem, size = 0x98000, scoped, tag = 'scratch operand']
  #allocation3 [shape = 'f32[300,128]{1,0:T(8,128)}', space=vmem, size = 0x26000, scoped, tag = 'scratch operand']
  %s0 = inlined_call_operand.vmem [shape: f32[75,512], index: 0, kind: input, shape index: {}]
  %s1 = inlined_call_operand.vmem [shape: s32[3,512], index: 1, kind: input, shape index: {}]
  %s2 = inlined_call_operand.vmem [shape: s32[3,128], index: 2, kind: input, shape index: {}]
  %s3 = inlined_call_operand.vmem [shape: f32[12,75], index: 3, kind: input, shape index: {}]
  %s4 = inlined_call_operand.vmem [shape: f32[12,1], index: 4, kind: input, shape index: {}]
  %s5 = inlined_call_operand.vmem [shape: f32[12,300], index: 5, kind: input, shape index: {}]
  %s6 = inlined_call_operand.vmem [shape: f32[12,1], index: 6, kind: input, shape index: {}]
  %s7 = inlined_call_operand.vmem [shape: f32[12,300], index: 7, kind: input, shape index: {}]
  %s8 = inlined_call_operand.vmem [shape: f32[12,1], index: 8, kind: input, shape index: {}]
  %s9 = inlined_call_operand.vmem [shape: f32[12,10,64], index: 9, kind: input, shape index: {}]
  %s10 = inlined_call_operand.vmem [shape: f32[10,1], index: 10, kind: input, shape index: {}]
  %s11 = inlined_call_operand.vmem [shape: f32[10,2], index: 11, kind: output, shape index: {}]
  %s12 = sld [smem:[#allocation0]]
  $region54: #{lenet_forward.1} parent=0
    _
  %s14 = ssub.s32 1, %s12
  %s15 = scalar_select 0, %s14, %s12
  // Predicated region
  $region2: #{lenet_forward.1} parent=0 // pred_check
    _
  $region3: #{lenet_forward.1} parent=0 // pred_check_branch
    %17 = sbr.rel (0) target = $region5
  $region4: #{lenet_forward.1} parent=0 // pred_region
    _
  $region5: #{lenet_forward.1} parent=0 // pred_fallthru
    _
  // Predicated region
  $region6: #{lenet_forward.1} parent=0 // pred_check
    _
  $region7: #{lenet_forward.1} parent=0 // pred_check_branch
    %19 = sbr.rel (0) target = $region9
  $region8: #{lenet_forward.1} parent=0 // pred_region
    _
  $region9: #{lenet_forward.1} parent=0 // pred_fallthru
    _
  // Predicated region
  $region10: #{lenet_forward.1} parent=0 // pred_check
    _
  $region11: #{lenet_forward.1} parent=0 // pred_check_branch
    %21 = sbr.rel (0) target = $region13
  $region12: #{lenet_forward.1} parent=0 // pred_region
    _
  $region13: #{lenet_forward.1} parent=0 // pred_fallthru
    _
  // Predicated region
  $region14: #{lenet_forward.1} parent=0 // pred_check
    _
  $region15: #{lenet_forward.1} parent=0 // pred_check_branch
    %23 = sbr.rel (0) target = $region17
  $region16: #{lenet_forward.1} parent=0 // pred_region
    _
  $region17: #{lenet_forward.1} parent=0 // pred_fallthru
    _
  // Predicated region
  $region18: #{lenet_forward.1} parent=0 // pred_check
    _
  $region19: #{lenet_forward.1} parent=0 // pred_check_branch
    %25 = sbr.rel (0) target = $region21
  $region20: #{lenet_forward.1} parent=0 // pred_region
    _
  $region21: #{lenet_forward.1} parent=0 // pred_fallthru
    _
  // Predicated region
  $region22: #{lenet_forward.1} parent=0 // pred_check
    _
  $region23: #{lenet_forward.1} parent=0 // pred_check_branch
    %27 = sbr.rel (0) target = $region25
  $region24: #{lenet_forward.1} parent=0 // pred_region
    _
  $region25: #{lenet_forward.1} parent=0 // pred_fallthru
    _
  // Predicated region
  $region26: #{lenet_forward.1} parent=0 // pred_check
    _
  $region27: #{lenet_forward.1} parent=0 // pred_check_branch
    %29 = sbr.rel (0) target = $region29
  $region28: #{lenet_forward.1} parent=0 // pred_region
    _
  $region29: #{lenet_forward.1} parent=0 // pred_fallthru
    _
  // Predicated region
  $region30: #{lenet_forward.1} parent=0 // pred_check
    _
  $region31: #{lenet_forward.1} parent=0 // pred_check_branch
    %31 = sbr.rel (0) target = $region33
  $region32: #{lenet_forward.1} parent=0 // pred_region
    _
  $region33: #{lenet_forward.1} parent=0 // pred_fallthru
    _
  // Predicated region
  $region34: #{lenet_forward.1} parent=0 // pred_check
    _
  $region35: #{lenet_forward.1} parent=0 // pred_check_branch
    %33 = sbr.rel (0) target = $region37
  $region36: #{lenet_forward.1} parent=0 // pred_region
    _
  $region37: #{lenet_forward.1} parent=0 // pred_fallthru
    _
  // Predicated region
  $region38: #{lenet_forward.1} parent=0 // pred_check
    _
  $region39: #{lenet_forward.1} parent=0 // pred_check_branch
    %35 = sbr.rel (0) target = $region41
  $region40: #{lenet_forward.1} parent=0 // pred_region
    _
  $region41: #{lenet_forward.1} parent=0 // pred_fallthru
    _
  // Predicated region
  $region42: #{lenet_forward.1} parent=0 // pred_check
    _
  $region43: #{lenet_forward.1} parent=0 // pred_check_branch
    %37 = sbr.rel (0) target = $region45
  $region44: #{lenet_forward.1} parent=0 // pred_region
    _
  $region45: #{lenet_forward.1} parent=0 // pred_fallthru
    _
  %s38 = scalar_lea.vmem %s1, 1
  %v39 = vld [vmem:[%s38] ss:$4 sm:$0xf]
  %s40 = scalar_lea.vmem %s1, 2
  %v41 = vld [vmem:[%s40] ss:$4 sm:$0xf]
  %v42 = vld [vmem:[%s2] sm:$0x1]
  %v43 = vld [vmem:[%s2 + $0x1] sm:$0x1]
  %v44 = vld [vmem:[%s2 + $0x2] sm:$0x1]
  %v45 = vld [vmem:[%s3] sm:$0xff]
  %v46 = vld [vmem:[%s3 + $0x8] sm:$0xf]
  %v47 = vld [vmem:[%s0] sm:$0xff]
  %v48 = vld [vmem:[%s0 + $0x8] sm:$0xff]
  %v49 = vld [vmem:[%s0 + $0x10] sm:$0xff]
  %v50 = vld [vmem:[%s0 + $0x18] sm:$0xff]
  %v51 = vld [vmem:[%s0 + $0x20] sm:$0xff]
  %v52 = vld [vmem:[%s0 + $0x28] sm:$0xff]
  %v53 = vld [vmem:[%s0 + $0x30] sm:$0xff]
  %v54 = vld [vmem:[%s0 + $0x38] sm:$0xff]
  %v55 = vld [vmem:[%s0 + $0x40] sm:$0xff]
  %v56 = vld [vmem:[%s0 + $0x48] sm:$0xff]
  %v57 = vld [vmem:[%s0 + $0x50] sm:$0xff]
  %v58 = vld [vmem:[%s0 + $0x58] sm:$0xff]
  %v59 = vld [vmem:[%s0 + $0x60] sm:$0xff]
  %v60 = vld [vmem:[%s0 + $0x68] sm:$0xff]
  %v61 = vld [vmem:[%s0 + $0x70] sm:$0xff]
  %v62 = vld [vmem:[%s0 + $0x78] sm:$0xff]
  %v63 = vld [vmem:[%s0 + $0x80] sm:$0xff]
  %v64 = vld [vmem:[%s0 + $0x88] sm:$0xff]
  %v65 = vld [vmem:[%s0 + $0x90] sm:$0xff]
  %v66 = vld [vmem:[%s0 + $0x98] sm:$0xff]
  %v67 = vld [vmem:[%s0 + $0xa0] sm:$0xff]
  %v68 = vld [vmem:[%s0 + $0xa8] sm:$0xff]
  %v69 = vld [vmem:[%s0 + $0xb0] sm:$0xff]
  %v70 = vld [vmem:[%s0 + $0xb8] sm:$0xff]
  %v71 = vld [vmem:[%s0 + $0xc0] sm:$0xff]
  %v72 = vld [vmem:[%s0 + $0xc8] sm:$0xff]
  %v73 = vld [vmem:[%s0 + $0xd0] sm:$0xff]
  %v74 = vld [vmem:[%s0 + $0xd8] sm:$0xff]
  %v75 = vld [vmem:[%s0 + $0xe0] sm:$0xff]
  %v76 = vld [vmem:[%s0 + $0xe8] sm:$0xff]
  %v77 = vld [vmem:[%s0 + $0xf0] sm:$0xff]
  %v78 = vld [vmem:[%s0 + $0xf8] sm:$0xff]
  %v79 = vld [vmem:[%s0 + $0x100] sm:$0xff]
  %v80 = vld [vmem:[%s0 + $0x108] sm:$0xff]
  %v81 = vld [vmem:[%s0 + $0x110] sm:$0xff]
  %v82 = vld [vmem:[%s0 + $0x118] sm:$0xff]
  %v83 = vld [vmem:[%s0 + $0x120] sm:$0x7]
  %v84 = vld [vmem:[%s0 + $0x128] sm:$0x7]
  %v85 = vld [vmem:[%s0 + $0x130] sm:$0x7]
  %v86 = vld [vmem:[%s0 + $0x138] sm:$0x7]
  %v87 = vld [vmem:[%s4] sm:$0xff]
  %v88 = vld [vmem:[%s4 + $0x8] sm:$0xf]
  %90 = vset.pattern.permute.xlu0 0
  %91 = vperm.xlu0 %90, %v87
  %v92 = vpop.permute.xlu0 %91
  %95 = vset.pattern.permute.xlu0 0
  %96 = vperm.xlu0 %95, %v88
  %v97 = vpop.permute.xlu0 %96
  %vm99 = vcmask 613376
  %v101 = vsel %vm99, %v45, 0
  %v104 = vsel %vm99, %v46, 0
  %vm106 = vcmask 1042432
  %v108 = vsel %vm106, %v83, 0
  %v111 = vsel %vm106, %v84, 0
  %v114 = vsel %vm106, %v85, 0
  %v117 = vsel %vm106, %v86, 0
  %119 = vmatpush.msra.mxu0 0.0
  %120 = vmatpush.msra.mxu0 0.0
  %121 = vmatpush.msra.mxu0 0.0
  %122 = vmatpush.msra.mxu0 0.0
  %123 = vmatpush.msra.mxu0 0.0
  %124 = vmatpush.msra.mxu0 0.0
  %125 = vmatpush.msra.mxu0 %v108
  %126 = vmatpush.msra.mxu0 %v79
  %127 = vmatpush.msra.mxu0 %v75
  %128 = vmatpush.msra.mxu0 %v71
  %129 = vmatpush.msra.mxu0 %v67
  %130 = vmatpush.msra.mxu0 %v63
  %131 = vmatpush.msra.mxu0 %v59
  %132 = vmatpush.msra.mxu0 %v55
  %133 = vmatpush.msra.mxu0 %v51
  %134 = vmatpush.msra.mxu0 %v47
  %135 = vmatmul.f32.gmra.mxu0 %v101
  %v136 = vpop.f32.mrf.mxu0
  %v137 = vadd.f32 %v92, %v136
  %138 = vmatmul.f32.gmra.mxu0 %v104
  %v139 = vpop.f32.mrf.mxu0
  %v140 = vadd.f32 %v97, %v139
  %141 = vdwg.mxu0
  %142 = vmatpush.msra.mxu0 0.0
  %143 = vmatpush.msra.mxu0 0.0
  %144 = vmatpush.msra.mxu0 0.0
  %145 = vmatpush.msra.mxu0 0.0
  %146 = vmatpush.msra.mxu0 0.0
  %147 = vmatpush.msra.mxu0 0.0
  %148 = vmatpush.msra.mxu0 %v111
  %149 = vmatpush.msra.mxu0 %v80
  %150 = vmatpush.msra.mxu0 %v76
  %151 = vmatpush.msra.mxu0 %v72
  %152 = vmatpush.msra.mxu0 %v68
  %153 = vmatpush.msra.mxu0 %v64
  %154 = vmatpush.msra.mxu0 %v60
  %155 = vmatpush.msra.mxu0 %v56
  %156 = vmatpush.msra.mxu0 %v52
  %157 = vmatpush.msra.mxu0 %v48
  %158 = vmatmul.f32.gmra.mxu0 %v101
  %v159 = vpop.f32.mrf.mxu0
  %v160 = vadd.f32 %v92, %v159
  %161 = vmatmul.f32.gmra.mxu0 %v104
  %v162 = vpop.f32.mrf.mxu0
  %v163 = vadd.f32 %v97, %v162
  %164 = vdwg.mxu0
  %165 = vmatpush.msra.mxu0 0.0
  %166 = vmatpush.msra.mxu0 0.0
  %167 = vmatpush.msra.mxu0 0.0
  %168 = vmatpush.msra.mxu0 0.0
  %169 = vmatpush.msra.mxu0 0.0
  %170 = vmatpush.msra.mxu0 0.0
  %171 = vmatpush.msra.mxu0 %v114
  %172 = vmatpush.msra.mxu0 %v81
  %173 = vmatpush.msra.mxu0 %v77
  %174 = vmatpush.msra.mxu0 %v73
  %175 = vmatpush.msra.mxu0 %v69
  %176 = vmatpush.msra.mxu0 %v65
  %177 = vmatpush.msra.mxu0 %v61
  %178 = vmatpush.msra.mxu0 %v57
  %179 = vmatpush.msra.mxu0 %v53
  %180 = vmatpush.msra.mxu0 %v49
  %181 = vmatmul.f32.gmra.mxu0 %v101
  %v182 = vpop.f32.mrf.mxu0
  %v183 = vadd.f32 %v92, %v182
  %184 = vmatmul.f32.gmra.mxu0 %v104
  %v185 = vpop.f32.mrf.mxu0
  %v186 = vadd.f32 %v97, %v185
  %187 = vdwg.mxu0
  %188 = vmatpush.msra.mxu0 0.0
  %189 = vmatpush.msra.mxu0 0.0
  %190 = vmatpush.msra.mxu0 0.0
  %191 = vmatpush.msra.mxu0 0.0
  %192 = vmatpush.msra.mxu0 0.0
  %193 = vmatpush.msra.mxu0 0.0
  %194 = vmatpush.msra.mxu0 %v117
  %195 = vmatpush.msra.mxu0 %v82
  %196 = vmatpush.msra.mxu0 %v78
  %197 = vmatpush.msra.mxu0 %v74
  %198 = vmatpush.msra.mxu0 %v70
  %199 = vmatpush.msra.mxu0 %v66
  %200 = vmatpush.msra.mxu0 %v62
  %201 = vmatpush.msra.mxu0 %v58
  %202 = vmatpush.msra.mxu0 %v54
  %203 = vmatpush.msra.mxu0 %v50
  %204 = vmatmul.f32.gmra.mxu0 %v101
  %v205 = vpop.f32.mrf.mxu0
  %v206 = vadd.f32 %v92, %v205
  %207 = vmatmul.f32.gmra.mxu0 %v104
  %v208 = vpop.f32.mrf.mxu0
  %v209 = vadd.f32 %v97, %v208
  %210 = vdwg.mxu0
  %v211 = vsub.f32 0.0, %v137
  %v212 = vsub.f32 0.0, %v160
  %v213 = vsub.f32 0.0, %v183
  %v214 = vsub.f32 0.0, %v206
  %v215 = vsub.f32 0.0, %v140
  %v216 = vsub.f32 0.0, %v163
  %v217 = vsub.f32 0.0, %v186
  %v218 = vsub.f32 0.0, %v209
  %v219 = vmul.f32 %v211, 1.442695
  %v220 = vpow.pop %v219
  %v221 = vmul.f32 %v212, 1.442695
  %v222 = vpow.pop %v221
  %v223 = vmul.f32 %v213, 1.442695
  %v224 = vpow.pop %v223
  %v225 = vmul.f32 %v214, 1.442695
  %v226 = vpow.pop %v225
  %v227 = vmul.f32 %v215, 1.442695
  %v228 = vpow.pop %v227
  %v229 = vmul.f32 %v216, 1.442695
  %v230 = vpow.pop %v229
  %v231 = vmul.f32 %v217, 1.442695
  %v232 = vpow.pop %v231
  %v233 = vmul.f32 %v218, 1.442695
  %v234 = vpow.pop %v233
  %v235 = vadd.f32 %v220, 1.0
  %v236 = vadd.f32 %v222, 1.0
  %v237 = vadd.f32 %v224, 1.0
  %v238 = vadd.f32 %v226, 1.0
  %v239 = vadd.f32 %v228, 1.0
  %v240 = vadd.f32 %v230, 1.0
  %v241 = vadd.f32 %v232, 1.0
  %v242 = vadd.f32 %v234, 1.0
  %v243 = vrcp.pop %v235
  %v244 = vmul.f32 %v235, %v243
  %v245 = vsub.f32 1.0, %v244
  %v246 = vmul.f32 %v243, %v245
  %v247 = vadd.f32 %v243, %v246
  %vm248 = vweird.f32 %v235
  %vm249 = vweird.f32 %v243
  %vm250 = vmor %vm248, %vm249
  %v251 = vsel %vm250, %v243, %v247
  %v252 = vand.u32 2147483647, %v235
  %vm253 = vcmp.eq.f32.partialorder %v252, 8.507059e+37
  %v254 = vand.u32 %v235, 2147483648
  %v255 = vor.u32 1.1754944e-38, %v254
  %v256 = vsel %vm253, %v255, %v251
  %v257 = vrcp.pop %v236
  %v258 = vmul.f32 %v236, %v257
  %v259 = vsub.f32 1.0, %v258
  %v260 = vmul.f32 %v257, %v259
  %v261 = vadd.f32 %v257, %v260
  %vm262 = vweird.f32 %v236
  %vm263 = vweird.f32 %v257
  %vm264 = vmor %vm262, %vm263
  %v265 = vsel %vm264, %v257, %v261
  %v266 = vand.u32 2147483647, %v236
  %vm267 = vcmp.eq.f32.partialorder %v266, 8.507059e+37
  %v268 = vand.u32 %v236, 2147483648
  %v269 = vor.u32 1.1754944e-38, %v268
  %v270 = vsel %vm267, %v269, %v265
  %v271 = vrcp.pop %v237
  %v272 = vmul.f32 %v237, %v271
  %v273 = vsub.f32 1.0, %v272
  %v274 = vmul.f32 %v271, %v273
  %v275 = vadd.f32 %v271, %v274
  %vm276 = vweird.f32 %v237
  %vm277 = vweird.f32 %v271
  %vm278 = vmor %vm276, %vm277
  %v279 = vsel %vm278, %v271, %v275
  %v280 = vand.u32 2147483647, %v237
  %vm281 = vcmp.eq.f32.partialorder %v280, 8.507059e+37
  %v282 = vand.u32 %v237, 2147483648
  %v283 = vor.u32 1.1754944e-38, %v282
  %v284 = vsel %vm281, %v283, %v279
  %v285 = vrcp.pop %v238
  %v286 = vmul.f32 %v238, %v285
  %v287 = vsub.f32 1.0, %v286
  %v288 = vmul.f32 %v285, %v287
  %v289 = vadd.f32 %v285, %v288
  %vm290 = vweird.f32 %v238
  %vm291 = vweird.f32 %v285
  %vm292 = vmor %vm290, %vm291
  %v293 = vsel %vm292, %v285, %v289
  %v294 = vand.u32 2147483647, %v238
  %vm295 = vcmp.eq.f32.partialorder %v294, 8.507059e+37
  %v296 = vand.u32 %v238, 2147483648
  %v297 = vor.u32 1.1754944e-38, %v296
  %v298 = vsel %vm295, %v297, %v293
  %v299 = vrcp.pop %v239
  %v300 = vmul.f32 %v239, %v299
  %v301 = vsub.f32 1.0, %v300
  %v302 = vmul.f32 %v299, %v301
  %v303 = vadd.f32 %v299, %v302
  %vm304 = vweird.f32 %v239
  %vm305 = vweird.f32 %v299
  %vm306 = vmor %vm304, %vm305
  %v307 = vsel %vm306, %v299, %v303
  %v308 = vand.u32 2147483647, %v239
  %vm309 = vcmp.eq.f32.partialorder %v308, 8.507059e+37
  %v310 = vand.u32 %v239, 2147483648
  %v311 = vor.u32 1.1754944e-38, %v310
  %v312 = vsel %vm309, %v311, %v307
  %v313 = vrcp.pop %v240
  %v314 = vmul.f32 %v240, %v313
  %v315 = vsub.f32 1.0, %v314
  %v316 = vmul.f32 %v313, %v315
  %v317 = vadd.f32 %v313, %v316
  %vm318 = vweird.f32 %v240
  %vm319 = vweird.f32 %v313
  %vm320 = vmor %vm318, %vm319
  %v321 = vsel %vm320, %v313, %v317
  %v322 = vand.u32 2147483647, %v240
  %vm323 = vcmp.eq.f32.partialorder %v322, 8.507059e+37
  %v324 = vand.u32 %v240, 2147483648
  %v325 = vor.u32 1.1754944e-38, %v324
  %v326 = vsel %vm323, %v325, %v321
  %v327 = vrcp.pop %v241
  %v328 = vmul.f32 %v241, %v327
  %v329 = vsub.f32 1.0, %v328
  %v330 = vmul.f32 %v327, %v329
  %v331 = vadd.f32 %v327, %v330
  %vm332 = vweird.f32 %v241
  %vm333 = vweird.f32 %v327
  %vm334 = vmor %vm332, %vm333
  %v335 = vsel %vm334, %v327, %v331
  %v336 = vand.u32 2147483647, %v241
  %vm337 = vcmp.eq.f32.partialorder %v336, 8.507059e+37
  %v338 = vand.u32 %v241, 2147483648
  %v339 = vor.u32 1.1754944e-38, %v338
  %v340 = vsel %vm337, %v339, %v335
  %v341 = vrcp.pop %v242
  %v342 = vmul.f32 %v242, %v341
  %v343 = vsub.f32 1.0, %v342
  %v344 = vmul.f32 %v341, %v343
  %v345 = vadd.f32 %v341, %v344
  %vm346 = vweird.f32 %v242
  %vm347 = vweird.f32 %v341
  %vm348 = vmor %vm346, %vm347
  %v349 = vsel %vm348, %v341, %v345
  %v350 = vand.u32 2147483647, %v242
  %vm351 = vcmp.eq.f32.partialorder %v350, 8.507059e+37
  %v352 = vand.u32 %v242, 2147483648
  %v353 = vor.u32 1.1754944e-38, %v352
  %v354 = vsel %vm351, %v353, %v349
  %355 = vrot.lane.b32.xlu0 %v256, 34
  %v356 = vpop.permute.xlu0 %355
  %357 = vrot.lane.b32.xlu0 %v312, 34
  %v358 = vpop.permute.xlu0 %357
  %359 = vrot.lane.b32.xlu0 %v270, 34
  %v360 = vpop.permute.xlu0 %359
  %361 = vrot.lane.b32.xlu0 %v326, 34
  %v362 = vpop.permute.xlu0 %361
  %363 = vrot.lane.b32.xlu0 %v284, 34
  %v364 = vpop.permute.xlu0 %363
  %365 = vrot.lane.b32.xlu0 %v340, 34
  %v366 = vpop.permute.xlu0 %365
  %367 = vrot.lane.b32.xlu0 %v298, 34
  %v368 = vpop.permute.xlu0 %367
  %369 = vrot.lane.b32.xlu0 %v354, 34
  %v370 = vpop.permute.xlu0 %369
  %v371 = vlaneseq
  %v372 = vand.u32 %v371, 127
  %vm373 = vcmp.lt.s32.totalorder %v372, 34
  %v374 = vsel %vm373, %v364, %v368
  %v375 = vsel %vm373, %v366, %v370
  %v376 = vsel %vm373, %v360, %v364
  %v377 = vsel %vm373, %v362, %v366
  %v378 = vsel %vm373, %v356, %v360
  %v379 = vsel %vm373, %v358, %v362
  %v380 = vsel %vm373, %v368, %v356
  %v381 = vsel %vm373, %v370, %v358
  %vm382 = vcmp.ge.s32.totalorder %v39, 2
  %vm383 = vcmp.lt.s32.totalorder %v39, 18
  %vm384 = vmand %vm382, %vm383
  %vm385 = vcmp.ge.s32.totalorder %v41, 2
  %vm386 = vmand %vm384, %vm385
  %vm387 = vcmp.lt.s32.totalorder %v41, 18
  %vm388 = vmand %vm386, %vm387
  %v389 = vsel %vm388, 1, 0
  %v390 = vperm.slane %v389, 0
  %v391 = vperm.slane %v389, 1
  %v392 = vperm.slane %v389, 2
  %v393 = vperm.slane %v389, 3
  %vm394 = vcmp.eq.s32.totalorder %v390, 1
  %vm395 = vcmp.eq.s32.totalorder %v391, 1
  %vm396 = vcmp.eq.s32.totalorder %v392, 1
  %vm397 = vcmp.eq.s32.totalorder %v393, 1
  %v398 = vsel %vm394, %v380, 0.0
  %v399 = vsel %vm395, %v378, 0.0
  %v400 = vsel %vm396, %v376, 0.0
  %v401 = vsel %vm397, %v374, 0.0
  %v402 = vsel %vm394, %v381, 0.0
  %v403 = vsel %vm395, %v379, 0.0
  %v404 = vsel %vm396, %v377, 0.0
  %v405 = vsel %vm397, %v375, 0.0
  %406 = vst [vmem:[#allocation2] sm:$0xff] %v398
  %407 = vst [vmem:[#allocation2 + $0x8] sm:$0xff] %v399
  %408 = vst [vmem:[#allocation2 + $0x10] sm:$0xff] %v400
  %409 = vst [vmem:[#allocation2 + $0x18] sm:$0xff] %v401
  %410 = vst [vmem:[#allocation2 + $0x20] sm:$0xf] %v402
  %411 = vst [vmem:[#allocation2 + $0x28] sm:$0xf] %v403
  %412 = vst [vmem:[#allocation2 + $0x30] sm:$0xf] %v404
  %413 = vst [vmem:[#allocation2 + $0x38] sm:$0xf] %v405
  %414 = vrot.lane.b32.xlu0 %v256, 33
  %v415 = vpop.permute.xlu0 %414
  %416 = vrot.lane.b32.xlu0 %v312, 33
  %v417 = vpop.permute.xlu0 %416
  %418 = vrot.lane.b32.xlu0 %v270, 33
  %v419 = vpop.permute.xlu0 %418
  %420 = vrot.lane.b32.xlu0 %v326, 33
  %v421 = vpop.permute.xlu0 %420
  %422 = vrot.lane.b32.xlu0 %v284, 33
  %v423 = vpop.permute.xlu0 %422
  %424 = vrot.lane.b32.xlu0 %v340, 33
  %v425 = vpop.permute.xlu0 %424
  %426 = vrot.lane.b32.xlu0 %v298, 33
  %v427 = vpop.permute.xlu0 %426
  %428 = vrot.lane.b32.xlu0 %v354, 33
  %v429 = vpop.permute.xlu0 %428
  %vm430 = vcmp.lt.s32.totalorder %v372, 33
  %v431 = vsel %vm430, %v423, %v427
  %v432 = vsel %vm430, %v425, %v429
  %v433 = vsel %vm430, %v419, %v423
  %v434 = vsel %vm430, %v421, %v425
  %v435 = vsel %vm430, %v415, %v419
  %v436 = vsel %vm430, %v417, %v421
  %v437 = vsel %vm430, %v427, %v415
  %v438 = vsel %vm430, %v429, %v417
  %vm439 = vcmp.ge.s32.totalorder %v41, 1
  %vm440 = vmand %vm384, %vm439
  %vm441 = vcmp.lt.s32.totalorder %v41, 17
  %vm442 = vmand %vm440, %vm441
  %v443 = vsel %vm442, 1, 0
  %v444 = vperm.slane %v443, 0
  %v445 = vperm.slane %v443, 1
  %v446 = vperm.slane %v443, 2
  %v447 = vperm.slane %v443, 3
  %vm448 = vcmp.eq.s32.totalorder %v444, 1
  %vm449 = vcmp.eq.s32.totalorder %v445, 1
  %vm450 = vcmp.eq.s32.totalorder %v446, 1
  %vm451 = vcmp.eq.s32.totalorder %v447, 1
  %v452 = vsel %vm448, %v437, 0.0
  %v453 = vsel %vm449, %v435, 0.0
  %v454 = vsel %vm450, %v433, 0.0
  %v455 = vsel %vm451, %v431, 0.0
  %v456 = vsel %vm448, %v438, 0.0
  %v457 = vsel %vm449, %v436, 0.0
  %v458 = vsel %vm450, %v434, 0.0
  %v459 = vsel %vm451, %v432, 0.0
  %vm468 = vcmask 1043456
  %v469 = vrot.slane %v452, 4
  %v470 = vrot.slane %v453, 4
  %v471 = vrot.slane %v454, 4
  %v472 = vrot.slane %v455, 4
  %v473 = vrot.slane %v456, 4
  %v474 = vsel %vm468, %v469, %v473
  %v475 = vrot.slane %v457, 4
  %v476 = vsel %vm468, %v470, %v475
  %v477 = vrot.slane %v458, 4
  %v478 = vsel %vm468, %v471, %v477
  %v479 = vrot.slane %v459, 4
  %v480 = vsel %vm468, %v472, %v479
  %489 = vst [vmem:[#allocation2 + $0x20] sm:$0xf0] %v469
  %490 = vst [vmem:[#allocation2 + $0x28] sm:$0xf0] %v470
  %491 = vst [vmem:[#allocation2 + $0x30] sm:$0xf0] %v471
  %492 = vst [vmem:[#allocation2 + $0x38] sm:$0xf0] %v472
  %493 = vst [vmem:[#allocation2 + $0x40] sm:$0xff] %v474
  %494 = vst [vmem:[#allocation2 + $0x48] sm:$0xff] %v476
  %495 = vst [vmem:[#allocation2 + $0x50] sm:$0xff] %v478
  %496 = vst [vmem:[#allocation2 + $0x58] sm:$0xff] %v480
  %497 = vrot.lane.b32.xlu0 %v256, 32
  %v498 = vpop.permute.xlu0 %497
  %499 = vrot.lane.b32.xlu0 %v312, 32
  %v500 = vpop.permute.xlu0 %499
  %501 = vrot.lane.b32.xlu0 %v270, 32
  %v502 = vpop.permute.xlu0 %501
  %503 = vrot.lane.b32.xlu0 %v326, 32
  %v504 = vpop.permute.xlu0 %503
  %505 = vrot.lane.b32.xlu0 %v284, 32
  %v506 = vpop.permute.xlu0 %505
  %507 = vrot.lane.b32.xlu0 %v340, 32
  %v508 = vpop.permute.xlu0 %507
  %509 = vrot.lane.b32.xlu0 %v298, 32
  %v510 = vpop.permute.xlu0 %509
  %511 = vrot.lane.b32.xlu0 %v354, 32
  %v512 = vpop.permute.xlu0 %511
  %vm513 = vcmp.lt.s32.totalorder %v372, 32
  %v514 = vsel %vm513, %v506, %v510
  %v515 = vsel %vm513, %v508, %v512
  %v516 = vsel %vm513, %v502, %v506
  %v517 = vsel %vm513, %v504, %v508
  %v518 = vsel %vm513, %v498, %v502
  %v519 = vsel %vm513, %v500, %v504
  %v520 = vsel %vm513, %v510, %v498
  %v521 = vsel %vm513, %v512, %v500
  %vm522 = vcmp.ge.s32.totalorder %v41, 0
  %vm523 = vmand %vm384, %vm522
  %vm524 = vcmp.lt.s32.totalorder %v41, 16
  %vm525 = vmand %vm523, %vm524
  %v526 = vsel %vm525, 1, 0
  %v527 = vperm.slane %v526, 0
  %v528 = vperm.slane %v526, 1
  %v529 = vperm.slane %v526, 2
  %v530 = vperm.slane %v526, 3
  %vm531 = vcmp.eq.s32.totalorder %v527, 1
  %vm532 = vcmp.eq.s32.totalorder %v528, 1
  %vm533 = vcmp.eq.s32.totalorder %v529, 1
  %vm534 = vcmp.eq.s32.totalorder %v530, 1
  %v535 = vsel %vm531, %v520, 0.0
  %v536 = vsel %vm532, %v518, 0.0
  %v537 = vsel %vm533, %v516, 0.0
  %v538 = vsel %vm534, %v514, 0.0
  %v539 = vsel %vm531, %v521, 0.0
  %v540 = vsel %vm532, %v519, 0.0
  %v541 = vsel %vm533, %v517, 0.0
  %v542 = vsel %vm534, %v515, 0.0
  %543 = vst [vmem:[#allocation2 + $0x60] sm:$0xff] %v535
  %544 = vst [vmem:[#allocation2 + $0x68] sm:$0xff] %v536
  %545 = vst [vmem:[#allocation2 + $0x70] sm:$0xff] %v537
  %546 = vst [vmem:[#allocation2 + $0x78] sm:$0xff] %v538
  %547 = vst [vmem:[#allocation2 + $0x80] sm:$0xf] %v539
  %548 = vst [vmem:[#allocation2 + $0x88] sm:$0xf] %v540
  %549 = vst [vmem:[#allocation2 + $0x90] sm:$0xf] %v541
  %550 = vst [vmem:[#allocation2 + $0x98] sm:$0xf] %v542
  %551 = vrot.lane.b32.xlu0 %v256, 31
  %v552 = vpop.permute.xlu0 %551
  %553 = vrot.lane.b32.xlu0 %v312, 31
  %v554 = vpop.permute.xlu0 %553
  %555 = vrot.lane.b32.xlu0 %v270, 31
  %v556 = vpop.permute.xlu0 %555
  %557 = vrot.lane.b32.xlu0 %v326, 31
  %v558 = vpop.permute.xlu0 %557
  %559 = vrot.lane.b32.xlu0 %v284, 31
  %v560 = vpop.permute.xlu0 %559
  %561 = vrot.lane.b32.xlu0 %v340, 31
  %v562 = vpop.permute.xlu0 %561
  %563 = vrot.lane.b32.xlu0 %v298, 31
  %v564 = vpop.permute.xlu0 %563
  %565 = vrot.lane.b32.xlu0 %v354, 31
  %v566 = vpop.permute.xlu0 %565
  %vm567 = vcmp.lt.s32.totalorder %v372, 31
  %v568 = vsel %vm567, %v560, %v564
  %v569 = vsel %vm567, %v562, %v566
  %v570 = vsel %vm567, %v556, %v560
  %v571 = vsel %vm567, %v558, %v562
  %v572 = vsel %vm567, %v552, %v556
  %v573 = vsel %vm567, %v554, %v558
  %v574 = vsel %vm567, %v564, %v552
  %v575 = vsel %vm567, %v566, %v554
  %vm576 = vcmp.ge.s32.totalorder %v41, 4294967295
  %vm577 = vmand %vm384, %vm576
  %vm578 = vcmp.lt.s32.totalorder %v41, 15
  %vm579 = vmand %vm577, %vm578
  %v580 = vsel %vm579, 1, 0
  %v581 = vperm.slane %v580, 0
  %v582 = vperm.slane %v580, 1
  %v583 = vperm.slane %v580, 2
  %v584 = vperm.slane %v580, 3
  %vm585 = vcmp.eq.s32.totalorder %v581, 1
  %vm586 = vcmp.eq.s32.totalorder %v582, 1
  %vm587 = vcmp.eq.s32.totalorder %v583, 1
  %vm588 = vcmp.eq.s32.totalorder %v584, 1
  %v589 = vsel %vm585, %v574, 0.0
  %v590 = vsel %vm586, %v572, 0.0
  %v591 = vsel %vm587, %v570, 0.0
  %v592 = vsel %vm588, %v568, 0.0
  %v593 = vsel %vm585, %v575, 0.0
  %v594 = vsel %vm586, %v573, 0.0
  %v595 = vsel %vm587, %v571, 0.0
  %v596 = vsel %vm588, %v569, 0.0
  %v605 = vrot.slane %v589, 4
  %v606 = vrot.slane %v590, 4
  %v607 = vrot.slane %v591, 4
  %v608 = vrot.slane %v592, 4
  %v609 = vrot.slane %v593, 4
  %v610 = vsel %vm468, %v605, %v609
  %v611 = vrot.slane %v594, 4
  %v612 = vsel %vm468, %v606, %v611
  %v613 = vrot.slane %v595, 4
  %v614 = vsel %vm468, %v607, %v613
  %v615 = vrot.slane %v596, 4
  %v616 = vsel %vm468, %v608, %v615
  %625 = vst [vmem:[#allocation2 + $0x80] sm:$0xf0] %v605
  %626 = vst [vmem:[#allocation2 + $0x88] sm:$0xf0] %v606
  %627 = vst [vmem:[#allocation2 + $0x90] sm:$0xf0] %v607
  %628 = vst [vmem:[#allocation2 + $0x98] sm:$0xf0] %v608
  %629 = vst [vmem:[#allocation2 + $0xa0] sm:$0xff] %v610
  %630 = vst [vmem:[#allocation2 + $0xa8] sm:$0xff] %v612
  %631 = vst [vmem:[#allocation2 + $0xb0] sm:$0xff] %v614
  %632 = vst [vmem:[#allocation2 + $0xb8] sm:$0xff] %v616
  %633 = vrot.lane.b32.xlu0 %v256, 30
  %v634 = vpop.permute.xlu0 %633
  %635 = vrot.lane.b32.xlu0 %v312, 30
  %v636 = vpop.permute.xlu0 %635
  %637 = vrot.lane.b32.xlu0 %v270, 30
  %v638 = vpop.permute.xlu0 %637
  %639 = vrot.lane.b32.xlu0 %v326, 30
  %v640 = vpop.permute.xlu0 %639
  %641 = vrot.lane.b32.xlu0 %v284, 30
  %v642 = vpop.permute.xlu0 %641
  %643 = vrot.lane.b32.xlu0 %v340, 30
  %v644 = vpop.permute.xlu0 %643
  %645 = vrot.lane.b32.xlu0 %v298, 30
  %v646 = vpop.permute.xlu0 %645
  %647 = vrot.lane.b32.xlu0 %v354, 30
  %v648 = vpop.permute.xlu0 %647
  %vm649 = vcmp.lt.s32.totalorder %v372, 30
  %v650 = vsel %vm649, %v642, %v646
  %v651 = vsel %vm649, %v644, %v648
  %v652 = vsel %vm649, %v638, %v642
  %v653 = vsel %vm649, %v640, %v644
  %v654 = vsel %vm649, %v634, %v638
  %v655 = vsel %vm649, %v636, %v640
  %v656 = vsel %vm649, %v646, %v634
  %v657 = vsel %vm649, %v648, %v636
  %vm658 = vcmp.ge.s32.totalorder %v41, 4294967294
  %vm659 = vmand %vm384, %vm658
  %vm660 = vcmp.lt.s32.totalorder %v41, 14
  %vm661 = vmand %vm659, %vm660
  %v662 = vsel %vm661, 1, 0
  %v663 = vperm.slane %v662, 0
  %v664 = vperm.slane %v662, 1
  %v665 = vperm.slane %v662, 2
  %v666 = vperm.slane %v662, 3
  %vm667 = vcmp.eq.s32.totalorder %v663, 1
  %vm668 = vcmp.eq.s32.totalorder %v664, 1
  %vm669 = vcmp.eq.s32.totalorder %v665, 1
  %vm670 = vcmp.eq.s32.totalorder %v666, 1
  %v671 = vsel %vm667, %v656, 0.0
  %v672 = vsel %vm668, %v654, 0.0
  %v673 = vsel %vm669, %v652, 0.0
  %v674 = vsel %vm670, %v650, 0.0
  %v675 = vsel %vm667, %v657, 0.0
  %v676 = vsel %vm668, %v655, 0.0
  %v677 = vsel %vm669, %v653, 0.0
  %v678 = vsel %vm670, %v651, 0.0
  %679 = vst [vmem:[#allocation2 + $0xc0] sm:$0xff] %v671
  %680 = vst [vmem:[#allocation2 + $0xc8] sm:$0xff] %v672
  %681 = vst [vmem:[#allocation2 + $0xd0] sm:$0xff] %v673
  %682 = vst [vmem:[#allocation2 + $0xd8] sm:$0xff] %v674
  %683 = vst [vmem:[#allocation2 + $0xe0] sm:$0xf] %v675
  %684 = vst [vmem:[#allocation2 + $0xe8] sm:$0xf] %v676
  %685 = vst [vmem:[#allocation2 + $0xf0] sm:$0xf] %v677
  %686 = vst [vmem:[#allocation2 + $0xf8] sm:$0xf] %v678
  %687 = vrot.lane.b32.xlu0 %v256, 18
  %v688 = vpop.permute.xlu0 %687
  %689 = vrot.lane.b32.xlu0 %v312, 18
  %v690 = vpop.permute.xlu0 %689
  %691 = vrot.lane.b32.xlu0 %v270, 18
  %v692 = vpop.permute.xlu0 %691
  %693 = vrot.lane.b32.xlu0 %v326, 18
  %v694 = vpop.permute.xlu0 %693
  %695 = vrot.lane.b32.xlu0 %v284, 18
  %v696 = vpop.permute.xlu0 %695
  %697 = vrot.lane.b32.xlu0 %v340, 18
  %v698 = vpop.permute.xlu0 %697
  %699 = vrot.lane.b32.xlu0 %v298, 18
  %v700 = vpop.permute.xlu0 %699
  %701 = vrot.lane.b32.xlu0 %v354, 18
  %v702 = vpop.permute.xlu0 %701
  %vm703 = vcmp.lt.s32.totalorder %v372, 18
  %v704 = vsel %vm703, %v696, %v700
  %v705 = vsel %vm703, %v698, %v702
  %v706 = vsel %vm703, %v692, %v696
  %v707 = vsel %vm703, %v694, %v698
  %v708 = vsel %vm703, %v688, %v692
  %v709 = vsel %vm703, %v690, %v694
  %v710 = vsel %vm703, %v700, %v688
  %v711 = vsel %vm703, %v702, %v690
  %vm712 = vcmp.ge.s32.totalorder %v39, 1
  %vm713 = vcmp.lt.s32.totalorder %v39, 17
  %vm714 = vmand %vm712, %vm713
  %vm715 = vmand %vm714, %vm385
  %vm716 = vmand %vm715, %vm387
  %v717 = vsel %vm716, 1, 0
  %v718 = vperm.slane %v717, 0
  %v719 = vperm.slane %v717, 1
  %v720 = vperm.slane %v717, 2
  %v721 = vperm.slane %v717, 3
  %vm722 = vcmp.eq.s32.totalorder %v718, 1
  %vm723 = vcmp.eq.s32.totalorder %v719, 1
  %vm724 = vcmp.eq.s32.totalorder %v720, 1
  %vm725 = vcmp.eq.s32.totalorder %v721, 1
  %v726 = vsel %vm722, %v710, 0.0
  %v727 = vsel %vm723, %v708, 0.0
  %v728 = vsel %vm724, %v706, 0.0
  %v729 = vsel %vm725, %v704, 0.0
  %v730 = vsel %vm722, %v711, 0.0
  %v731 = vsel %vm723, %v709, 0.0
  %v732 = vsel %vm724, %v707, 0.0
  %v733 = vsel %vm725, %v705, 0.0
  %v742 = vrot.slane %v726, 4
  %v743 = vrot.slane %v727, 4
  %v744 = vrot.slane %v728, 4
  %v745 = vrot.slane %v729, 4
  %v746 = vrot.slane %v730, 4
  %v747 = vsel %vm468, %v742, %v746
  %v748 = vrot.slane %v731, 4
  %v749 = vsel %vm468, %v743, %v748
  %v750 = vrot.slane %v732, 4
  %v751 = vsel %vm468, %v744, %v750
  %v752 = vrot.slane %v733, 4
  %v753 = vsel %vm468, %v745, %v752
  %762 = vst [vmem:[#allocation2 + $0xe0] sm:$0xf0] %v742
  %763 = vst [vmem:[#allocation2 + $0xe8] sm:$0xf0] %v743
  %764 = vst [vmem:[#allocation2 + $0xf0] sm:$0xf0] %v744
  %765 = vst [vmem:[#allocation2 + $0xf8] sm:$0xf0] %v745
  %766 = vst [vmem:[#allocation2 + $0x100] sm:$0xff] %v747
  %767 = vst [vmem:[#allocation2 + $0x108] sm:$0xff] %v749
  %768 = vst [vmem:[#allocation2 + $0x110] sm:$0xff] %v751
  %769 = vst [vmem:[#allocation2 + $0x118] sm:$0xff] %v753
  %770 = vrot.lane.b32.xlu0 %v256, 17
  %v771 = vpop.permute.xlu0 %770
  %772 = vrot.lane.b32.xlu0 %v312, 17
  %v773 = vpop.permute.xlu0 %772
  %774 = vrot.lane.b32.xlu0 %v270, 17
  %v775 = vpop.permute.xlu0 %774
  %776 = vrot.lane.b32.xlu0 %v326, 17
  %v777 = vpop.permute.xlu0 %776
  %778 = vrot.lane.b32.xlu0 %v284, 17
  %v779 = vpop.permute.xlu0 %778
  %780 = vrot.lane.b32.xlu0 %v340, 17
  %v781 = vpop.permute.xlu0 %780
  %782 = vrot.lane.b32.xlu0 %v298, 17
  %v783 = vpop.permute.xlu0 %782
  %784 = vrot.lane.b32.xlu0 %v354, 17
  %v785 = vpop.permute.xlu0 %784
  %vm786 = vcmp.lt.s32.totalorder %v372, 17
  %v787 = vsel %vm786, %v779, %v783
  %v788 = vsel %vm786, %v781, %v785
  %v789 = vsel %vm786, %v775, %v779
  %v790 = vsel %vm786, %v777, %v781
  %v791 = vsel %vm786, %v771, %v775
  %v792 = vsel %vm786, %v773, %v777
  %v793 = vsel %vm786, %v783, %v771
  %v794 = vsel %vm786, %v785, %v773
  %vm795 = vmand %vm714, %vm439
  %vm796 = vmand %vm795, %vm441
  %v797 = vsel %vm796, 1, 0
  %v798 = vperm.slane %v797, 0
  %v799 = vperm.slane %v797, 1
  %v800 = vperm.slane %v797, 2
  %v801 = vperm.slane %v797, 3
  %vm802 = vcmp.eq.s32.totalorder %v798, 1
  %vm803 = vcmp.eq.s32.totalorder %v799, 1
  %vm804 = vcmp.eq.s32.totalorder %v800, 1
  %vm805 = vcmp.eq.s32.totalorder %v801, 1
  %v806 = vsel %vm802, %v793, 0.0
  %v807 = vsel %vm803, %v791, 0.0
  %v808 = vsel %vm804, %v789, 0.0
  %v809 = vsel %vm805, %v787, 0.0
  %v810 = vsel %vm802, %v794, 0.0
  %v811 = vsel %vm803, %v792, 0.0
  %v812 = vsel %vm804, %v790, 0.0
  %v813 = vsel %vm805, %v788, 0.0
  %814 = vst [vmem:[#allocation2 + $0x120] sm:$0xff] %v806
  %815 = vst [vmem:[#allocation2 + $0x128] sm:$0xff] %v807
  %816 = vst [vmem:[#allocation2 + $0x130] sm:$0xff] %v808
  %817 = vst [vmem:[#allocation2 + $0x138] sm:$0xff] %v809
  %818 = vst [vmem:[#allocation2 + $0x140] sm:$0xf] %v810
  %819 = vst [vmem:[#allocation2 + $0x148] sm:$0xf] %v811
  %820 = vst [vmem:[#allocation2 + $0x150] sm:$0xf] %v812
  %821 = vst [vmem:[#allocation2 + $0x158] sm:$0xf] %v813
  %822 = vrot.lane.b32.xlu0 %v256, 16
  %v823 = vpop.permute.xlu0 %822
  %824 = vrot.lane.b32.xlu0 %v312, 16
  %v825 = vpop.permute.xlu0 %824
  %826 = vrot.lane.b32.xlu0 %v270, 16
  %v827 = vpop.permute.xlu0 %826
  %828 = vrot.lane.b32.xlu0 %v326, 16
  %v829 = vpop.permute.xlu0 %828
  %830 = vrot.lane.b32.xlu0 %v284, 16
  %v831 = vpop.permute.xlu0 %830
  %832 = vrot.lane.b32.xlu0 %v340, 16
  %v833 = vpop.permute.xlu0 %832
  %834 = vrot.lane.b32.xlu0 %v298, 16
  %v835 = vpop.permute.xlu0 %834
  %836 = vrot.lane.b32.xlu0 %v354, 16
  %v837 = vpop.permute.xlu0 %836
  %vm838 = vcmp.lt.s32.totalorder %v372, 16
  %v839 = vsel %vm838, %v831, %v835
  %v840 = vsel %vm838, %v833, %v837
  %v841 = vsel %vm838, %v827, %v831
  %v842 = vsel %vm838, %v829, %v833
  %v843 = vsel %vm838, %v823, %v827
  %v844 = vsel %vm838, %v825, %v829
  %v845 = vsel %vm838, %v835, %v823
  %v846 = vsel %vm838, %v837, %v825
  %vm847 = vmand %vm714, %vm522
  %vm848 = vmand %vm847, %vm524
  %v849 = vsel %vm848, 1, 0
  %v850 = vperm.slane %v849, 0
  %v851 = vperm.slane %v849, 1
  %v852 = vperm.slane %v849, 2
  %v853 = vperm.slane %v849, 3
  %vm854 = vcmp.eq.s32.totalorder %v850, 1
  %vm855 = vcmp.eq.s32.totalorder %v851, 1
  %vm856 = vcmp.eq.s32.totalorder %v852, 1
  %vm857 = vcmp.eq.s32.totalorder %v853, 1
  %v858 = vsel %vm854, %v845, 0.0
  %v859 = vsel %vm855, %v843, 0.0
  %v860 = vsel %vm856, %v841, 0.0
  %v861 = vsel %vm857, %v839, 0.0
  %v862 = vsel %vm854, %v846, 0.0
  %v863 = vsel %vm855, %v844, 0.0
  %v864 = vsel %vm856, %v842, 0.0
  %v865 = vsel %vm857, %v840, 0.0
  %v874 = vrot.slane %v858, 4
  %v875 = vrot.slane %v859, 4
  %v876 = vrot.slane %v860, 4
  %v877 = vrot.slane %v861, 4
  %v878 = vrot.slane %v862, 4
  %v879 = vsel %vm468, %v874, %v878
  %v880 = vrot.slane %v863, 4
  %v881 = vsel %vm468, %v875, %v880
  %v882 = vrot.slane %v864, 4
  %v883 = vsel %vm468, %v876, %v882
  %v884 = vrot.slane %v865, 4
  %v885 = vsel %vm468, %v877, %v884
  %894 = vst [vmem:[#allocation2 + $0x140] sm:$0xf0] %v874
  %895 = vst [vmem:[#allocation2 + $0x148] sm:$0xf0] %v875
  %896 = vst [vmem:[#allocation2 + $0x150] sm:$0xf0] %v876
  %897 = vst [vmem:[#allocation2 + $0x158] sm:$0xf0] %v877
  %898 = vst [vmem:[#allocation2 + $0x160] sm:$0xff] %v879
  %899 = vst [vmem:[#allocation2 + $0x168] sm:$0xff] %v881
  %900 = vst [vmem:[#allocation2 + $0x170] sm:$0xff] %v883
  %901 = vst [vmem:[#allocation2 + $0x178] sm:$0xff] %v885
  %902 = vrot.lane.b32.xlu0 %v256, 15
  %v903 = vpop.permute.xlu0 %902
  %904 = vrot.lane.b32.xlu0 %v312, 15
  %v905 = vpop.permute.xlu0 %904
  %906 = vrot.lane.b32.xlu0 %v270, 15
  %v907 = vpop.permute.xlu0 %906
  %908 = vrot.lane.b32.xlu0 %v326, 15
  %v909 = vpop.permute.xlu0 %908
  %910 = vrot.lane.b32.xlu0 %v284, 15
  %v911 = vpop.permute.xlu0 %910
  %912 = vrot.lane.b32.xlu0 %v340, 15
  %v913 = vpop.permute.xlu0 %912
  %914 = vrot.lane.b32.xlu0 %v298, 15
  %v915 = vpop.permute.xlu0 %914
  %916 = vrot.lane.b32.xlu0 %v354, 15
  %v917 = vpop.permute.xlu0 %916
  %vm918 = vcmp.lt.s32.totalorder %v372, 15
  %v919 = vsel %vm918, %v911, %v915
  %v920 = vsel %vm918, %v913, %v917
  %v921 = vsel %vm918, %v907, %v911
  %v922 = vsel %vm918, %v909, %v913
  %v923 = vsel %vm918, %v903, %v907
  %v924 = vsel %vm918, %v905, %v909
  %v925 = vsel %vm918, %v915, %v903
  %v926 = vsel %vm918, %v917, %v905
  %vm927 = vmand %vm714, %vm576
  %vm928 = vmand %vm927, %vm578
  %v929 = vsel %vm928, 1, 0
  %v930 = vperm.slane %v929, 0
  %v931 = vperm.slane %v929, 1
  %v932 = vperm.slane %v929, 2
  %v933 = vperm.slane %v929, 3
  %vm934 = vcmp.eq.s32.totalorder %v930, 1
  %vm935 = vcmp.eq.s32.totalorder %v931, 1
  %vm936 = vcmp.eq.s32.totalorder %v932, 1
  %vm937 = vcmp.eq.s32.totalorder %v933, 1
  %v938 = vsel %vm934, %v925, 0.0
  %v939 = vsel %vm935, %v923, 0.0
  %v940 = vsel %vm936, %v921, 0.0
  %v941 = vsel %vm937, %v919, 0.0
  %v942 = vsel %vm934, %v926, 0.0
  %v943 = vsel %vm935, %v924, 0.0
  %v944 = vsel %vm936, %v922, 0.0
  %v945 = vsel %vm937, %v920, 0.0
  %946 = vst [vmem:[#allocation2 + $0x180] sm:$0xff] %v938
  %947 = vst [vmem:[#allocation2 + $0x188] sm:$0xff] %v939
  %948 = vst [vmem:[#allocation2 + $0x190] sm:$0xff] %v940
  %949 = vst [vmem:[#allocation2 + $0x198] sm:$0xff] %v941
  %950 = vst [vmem:[#allocation2 + $0x1a0] sm:$0xf] %v942
  %951 = vst [vmem:[#allocation2 + $0x1a8] sm:$0xf] %v943
  %952 = vst [vmem:[#allocation2 + $0x1b0] sm:$0xf] %v944
  %953 = vst [vmem:[#allocation2 + $0x1b8] sm:$0xf] %v945
  %954 = vrot.lane.b32.xlu0 %v256, 14
  %v955 = vpop.permute.xlu0 %954
  %956 = vrot.lane.b32.xlu0 %v312, 14
  %v957 = vpop.permute.xlu0 %956
  %958 = vrot.lane.b32.xlu0 %v270, 14
  %v959 = vpop.permute.xlu0 %958
  %960 = vrot.lane.b32.xlu0 %v326, 14
  %v961 = vpop.permute.xlu0 %960
  %962 = vrot.lane.b32.xlu0 %v284, 14
  %v963 = vpop.permute.xlu0 %962
  %964 = vrot.lane.b32.xlu0 %v340, 14
  %v965 = vpop.permute.xlu0 %964
  %966 = vrot.lane.b32.xlu0 %v298, 14
  %v967 = vpop.permute.xlu0 %966
  %968 = vrot.lane.b32.xlu0 %v354, 14
  %v969 = vpop.permute.xlu0 %968
  %vm970 = vcmp.lt.s32.totalorder %v372, 14
  %v971 = vsel %vm970, %v963, %v967
  %v972 = vsel %vm970, %v965, %v969
  %v973 = vsel %vm970, %v959, %v963
  %v974 = vsel %vm970, %v961, %v965
  %v975 = vsel %vm970, %v955, %v959
  %v976 = vsel %vm970, %v957, %v961
  %v977 = vsel %vm970, %v967, %v955
  %v978 = vsel %vm970, %v969, %v957
  %vm979 = vmand %vm714, %vm658
  %vm980 = vmand %vm979, %vm660
  %v981 = vsel %vm980, 1, 0
  %v982 = vperm.slane %v981, 0
  %v983 = vperm.slane %v981, 1
  %v984 = vperm.slane %v981, 2
  %v985 = vperm.slane %v981, 3
  %vm986 = vcmp.eq.s32.totalorder %v982, 1
  %vm987 = vcmp.eq.s32.totalorder %v983, 1
  %vm988 = vcmp.eq.s32.totalorder %v984, 1
  %vm989 = vcmp.eq.s32.totalorder %v985, 1
  %v990 = vsel %vm986, %v977, 0.0
  %v991 = vsel %vm987, %v975, 0.0
  %v992 = vsel %vm988, %v973, 0.0
  %v993 = vsel %vm989, %v971, 0.0
  %v994 = vsel %vm986, %v978, 0.0
  %v995 = vsel %vm987, %v976, 0.0
  %v996 = vsel %vm988, %v974, 0.0
  %v997 = vsel %vm989, %v972, 0.0
  %v1006 = vrot.slane %v990, 4
  %v1007 = vrot.slane %v991, 4
  %v1008 = vrot.slane %v992, 4
  %v1009 = vrot.slane %v993, 4
  %v1010 = vrot.slane %v994, 4
  %v1011 = vsel %vm468, %v1006, %v1010
  %v1012 = vrot.slane %v995, 4
  %v1013 = vsel %vm468, %v1007, %v1012
  %v1014 = vrot.slane %v996, 4
  %v1015 = vsel %vm468, %v1008, %v1014
  %v1016 = vrot.slane %v997, 4
  %v1017 = vsel %vm468, %v1009, %v1016
  %1026 = vst [vmem:[#allocation2 + $0x1a0] sm:$0xf0] %v1006
  %1027 = vst [vmem:[#allocation2 + $0x1a8] sm:$0xf0] %v1007
  %1028 = vst [vmem:[#allocation2 + $0x1b0] sm:$0xf0] %v1008
  %1029 = vst [vmem:[#allocation2 + $0x1b8] sm:$0xf0] %v1009
  %1030 = vst [vmem:[#allocation2 + $0x1c0] sm:$0xff] %v1011
  %1031 = vst [vmem:[#allocation2 + $0x1c8] sm:$0xff] %v1013
  %1032 = vst [vmem:[#allocation2 + $0x1d0] sm:$0xff] %v1015
  %1033 = vst [vmem:[#allocation2 + $0x1d8] sm:$0xff] %v1017
  %1034 = vrot.lane.b32.xlu0 %v256, 2
  %v1035 = vpop.permute.xlu0 %1034
  %1036 = vrot.lane.b32.xlu0 %v312, 2
  %v1037 = vpop.permute.xlu0 %1036
  %1038 = vrot.lane.b32.xlu0 %v270, 2
  %v1039 = vpop.permute.xlu0 %1038
  %1040 = vrot.lane.b32.xlu0 %v326, 2
  %v1041 = vpop.permute.xlu0 %1040
  %1042 = vrot.lane.b32.xlu0 %v284, 2
  %v1043 = vpop.permute.xlu0 %1042
  %1044 = vrot.lane.b32.xlu0 %v340, 2
  %v1045 = vpop.permute.xlu0 %1044
  %1046 = vrot.lane.b32.xlu0 %v298, 2
  %v1047 = vpop.permute.xlu0 %1046
  %1048 = vrot.lane.b32.xlu0 %v354, 2
  %v1049 = vpop.permute.xlu0 %1048
  %vm1050 = vcmp.lt.s32.totalorder %v372, 2
  %v1051 = vsel %vm1050, %v1043, %v1047
  %v1052 = vsel %vm1050, %v1045, %v1049
  %v1053 = vsel %vm1050, %v1039, %v1043
  %v1054 = vsel %vm1050, %v1041, %v1045
  %v1055 = vsel %vm1050, %v1035, %v1039
  %v1056 = vsel %vm1050, %v1037, %v1041
  %v1057 = vsel %vm1050, %v1047, %v1035
  %v1058 = vsel %vm1050, %v1049, %v1037
  %vm1059 = vcmp.ge.s32.totalorder %v39, 0
  %vm1060 = vcmp.lt.s32.totalorder %v39, 16
  %vm1061 = vmand %vm1059, %vm1060
  %vm1062 = vmand %vm1061, %vm385
  %vm1063 = vmand %vm1062, %vm387
  %v1064 = vsel %vm1063, 1, 0
  %v1065 = vperm.slane %v1064, 0
  %v1066 = vperm.slane %v1064, 1
  %v1067 = vperm.slane %v1064, 2
  %v1068 = vperm.slane %v1064, 3
  %vm1069 = vcmp.eq.s32.totalorder %v1065, 1
  %vm1070 = vcmp.eq.s32.totalorder %v1066, 1
  %vm1071 = vcmp.eq.s32.totalorder %v1067, 1
  %vm1072 = vcmp.eq.s32.totalorder %v1068, 1
  %v1073 = vsel %vm1069, %v1057, 0.0
  %v1074 = vsel %vm1070, %v1055, 0.0
  %v1075 = vsel %vm1071, %v1053, 0.0
  %v1076 = vsel %vm1072, %v1051, 0.0
  %v1077 = vsel %vm1069, %v1058, 0.0
  %v1078 = vsel %vm1070, %v1056, 0.0
  %v1079 = vsel %vm1071, %v1054, 0.0
  %v1080 = vsel %vm1072, %v1052, 0.0
  %1081 = vst [vmem:[#allocation2 + $0x1e0] sm:$0xff] %v1073
  %1082 = vst [vmem:[#allocation2 + $0x1e8] sm:$0xff] %v1074
  %1083 = vst [vmem:[#allocation2 + $0x1f0] sm:$0xff] %v1075
  %1084 = vst [vmem:[#allocation2 + $0x1f8] sm:$0xff] %v1076
  %1085 = vst [vmem:[#allocation2 + $0x200] sm:$0xf] %v1077
  %1086 = vst [vmem:[#allocation2 + $0x208] sm:$0xf] %v1078
  %1087 = vst [vmem:[#allocation2 + $0x210] sm:$0xf] %v1079
  %1088 = vst [vmem:[#allocation2 + $0x218] sm:$0xf] %v1080
  %1089 = vrot.lane.b32.xlu0 %v256, 1
  %v1090 = vpop.permute.xlu0 %1089
  %1091 = vrot.lane.b32.xlu0 %v312, 1
  %v1092 = vpop.permute.xlu0 %1091
  %1093 = vrot.lane.b32.xlu0 %v270, 1
  %v1094 = vpop.permute.xlu0 %1093
  %1095 = vrot.lane.b32.xlu0 %v326, 1
  %v1096 = vpop.permute.xlu0 %1095
  %1097 = vrot.lane.b32.xlu0 %v284, 1
  %v1098 = vpop.permute.xlu0 %1097
  %1099 = vrot.lane.b32.xlu0 %v340, 1
  %v1100 = vpop.permute.xlu0 %1099
  %1101 = vrot.lane.b32.xlu0 %v298, 1
  %v1102 = vpop.permute.xlu0 %1101
  %1103 = vrot.lane.b32.xlu0 %v354, 1
  %v1104 = vpop.permute.xlu0 %1103
  %vm1105 = vcmp.lt.s32.totalorder %v372, 1
  %v1106 = vsel %vm1105, %v1098, %v1102
  %v1107 = vsel %vm1105, %v1100, %v1104
  %v1108 = vsel %vm1105, %v1094, %v1098
  %v1109 = vsel %vm1105, %v1096, %v1100
  %v1110 = vsel %vm1105, %v1090, %v1094
  %v1111 = vsel %vm1105, %v1092, %v1096
  %v1112 = vsel %vm1105, %v1102, %v1090
  %v1113 = vsel %vm1105, %v1104, %v1092
  %vm1114 = vmand %vm1061, %vm439
  %vm1115 = vmand %vm1114, %vm441
  %v1116 = vsel %vm1115, 1, 0
  %v1117 = vperm.slane %v1116, 0
  %v1118 = vperm.slane %v1116, 1
  %v1119 = vperm.slane %v1116, 2
  %v1120 = vperm.slane %v1116, 3
  %vm1121 = vcmp.eq.s32.totalorder %v1117, 1
  %vm1122 = vcmp.eq.s32.totalorder %v1118, 1
  %vm1123 = vcmp.eq.s32.totalorder %v1119, 1
  %vm1124 = vcmp.eq.s32.totalorder %v1120, 1
  %v1125 = vsel %vm1121, %v1112, 0.0
  %v1126 = vsel %vm1122, %v1110, 0.0
  %v1127 = vsel %vm1123, %v1108, 0.0
  %v1128 = vsel %vm1124, %v1106, 0.0
  %v1129 = vsel %vm1121, %v1113, 0.0
  %v1130 = vsel %vm1122, %v1111, 0.0
  %v1131 = vsel %vm1123, %v1109, 0.0
  %v1132 = vsel %vm1124, %v1107, 0.0
  %v1141 = vrot.slane %v1125, 4
  %v1142 = vrot.slane %v1126, 4
  %v1143 = vrot.slane %v1127, 4
  %v1144 = vrot.slane %v1128, 4
  %v1145 = vrot.slane %v1129, 4
  %v1146 = vsel %vm468, %v1141, %v1145
  %v1147 = vrot.slane %v1130, 4
  %v1148 = vsel %vm468, %v1142, %v1147
  %v1149 = vrot.slane %v1131, 4
  %v1150 = vsel %vm468, %v1143, %v1149
  %v1151 = vrot.slane %v1132, 4
  %v1152 = vsel %vm468, %v1144, %v1151
  %1161 = vst [vmem:[#allocation2 + $0x200] sm:$0xf0] %v1141
  %1162 = vst [vmem:[#allocation2 + $0x208] sm:$0xf0] %v1142
  %1163 = vst [vmem:[#allocation2 + $0x210] sm:$0xf0] %v1143
  %1164 = vst [vmem:[#allocation2 + $0x218] sm:$0xf0] %v1144
  %1165 = vst [vmem:[#allocation2 + $0x220] sm:$0xff] %v1146
  %1166 = vst [vmem:[#allocation2 + $0x228] sm:$0xff] %v1148
  %1167 = vst [vmem:[#allocation2 + $0x230] sm:$0xff] %v1150
  %1168 = vst [vmem:[#allocation2 + $0x238] sm:$0xff] %v1152
  %vm1169 = vmand %vm1061, %vm522
  %vm1170 = vmand %vm1169, %vm524
  %v1171 = vsel %vm1170, 1, 0
  %v1172 = vperm.slane %v1171, 0
  %v1173 = vperm.slane %v1171, 1
  %v1174 = vperm.slane %v1171, 2
  %v1175 = vperm.slane %v1171, 3
  %vm1176 = vcmp.eq.s32.totalorder %v1172, 1
  %vm1177 = vcmp.eq.s32.totalorder %v1173, 1
  %vm1178 = vcmp.eq.s32.totalorder %v1174, 1
  %vm1179 = vcmp.eq.s32.totalorder %v1175, 1
  %v1180 = vsel %vm1176, %v256, 0.0
  %v1181 = vsel %vm1177, %v270, 0.0
  %v1182 = vsel %vm1178, %v284, 0.0
  %v1183 = vsel %vm1179, %v298, 0.0
  %v1184 = vsel %vm1176, %v312, 0.0
  %v1185 = vsel %vm1177, %v326, 0.0
  %v1186 = vsel %vm1178, %v340, 0.0
  %v1187 = vsel %vm1179, %v354, 0.0
  %1188 = vst [vmem:[#allocation2 + $0x240] sm:$0xff] %v1180
  %1189 = vst [vmem:[#allocation2 + $0x248] sm:$0xff] %v1181
  %1190 = vst [vmem:[#allocation2 + $0x250] sm:$0xff] %v1182
  %1191 = vst [vmem:[#allocation2 + $0x258] sm:$0xff] %v1183
  %1192 = vst [vmem:[#allocation2 + $0x260] sm:$0xf] %v1184
  %1193 = vst [vmem:[#allocation2 + $0x268] sm:$0xf] %v1185
  %1194 = vst [vmem:[#allocation2 + $0x270] sm:$0xf] %v1186
  %1195 = vst [vmem:[#allocation2 + $0x278] sm:$0xf] %v1187
  %1196 = vrot.lane.b32.xlu0 %v256, 127
  %v1197 = vpop.permute.xlu0 %1196
  %1198 = vrot.lane.b32.xlu0 %v312, 127
  %v1199 = vpop.permute.xlu0 %1198
  %1200 = vrot.lane.b32.xlu0 %v270, 127
  %v1201 = vpop.permute.xlu0 %1200
  %1202 = vrot.lane.b32.xlu0 %v326, 127
  %v1203 = vpop.permute.xlu0 %1202
  %1204 = vrot.lane.b32.xlu0 %v284, 127
  %v1205 = vpop.permute.xlu0 %1204
  %1206 = vrot.lane.b32.xlu0 %v340, 127
  %v1207 = vpop.permute.xlu0 %1206
  %1208 = vrot.lane.b32.xlu0 %v298, 127
  %v1209 = vpop.permute.xlu0 %1208
  %1210 = vrot.lane.b32.xlu0 %v354, 127
  %v1211 = vpop.permute.xlu0 %1210
  %vm1212 = vcmp.lt.s32.totalorder %v372, 127
  %v1213 = vsel %vm1212, %v1205, %v1209
  %v1214 = vsel %vm1212, %v1207, %v1211
  %v1215 = vsel %vm1212, %v1201, %v1205
  %v1216 = vsel %vm1212, %v1203, %v1207
  %v1217 = vsel %vm1212, %v1197, %v1201
  %v1218 = vsel %vm1212, %v1199, %v1203
  %v1219 = vsel %vm1212, %v1209, %v1197
  %v1220 = vsel %vm1212, %v1211, %v1199
  %vm1221 = vmand %vm1061, %vm576
  %vm1222 = vmand %vm1221, %vm578
  %v1223 = vsel %vm1222, 1, 0
  %v1224 = vperm.slane %v1223, 0
  %v1225 = vperm.slane %v1223, 1
  %v1226 = vperm.slane %v1223, 2
  %v1227 = vperm.slane %v1223, 3
  %vm1228 = vcmp.eq.s32.totalorder %v1224, 1
  %vm1229 = vcmp.eq.s32.totalorder %v1225, 1
  %vm1230 = vcmp.eq.s32.totalorder %v1226, 1
  %vm1231 = vcmp.eq.s32.totalorder %v1227, 1
  %v1232 = vsel %vm1228, %v1217, 0.0
  %v1233 = vsel %vm1229, %v1215, 0.0
  %v1234 = vsel %vm1230, %v1213, 0.0
  %v1235 = vsel %vm1231, %v1219, 0.0
  %v1236 = vsel %vm1228, %v1218, 0.0
  %v1237 = vsel %vm1229, %v1216, 0.0
  %v1238 = vsel %vm1230, %v1214, 0.0
  %v1239 = vsel %vm1231, %v1220, 0.0
  %v1248 = vrot.slane %v1232, 4
  %v1249 = vrot.slane %v1233, 4
  %v1250 = vrot.slane %v1234, 4
  %v1251 = vrot.slane %v1235, 4
  %v1252 = vrot.slane %v1236, 4
  %v1253 = vsel %vm468, %v1248, %v1252
  %v1254 = vrot.slane %v1237, 4
  %v1255 = vsel %vm468, %v1249, %v1254
  %v1256 = vrot.slane %v1238, 4
  %v1257 = vsel %vm468, %v1250, %v1256
  %v1258 = vrot.slane %v1239, 4
  %v1259 = vsel %vm468, %v1251, %v1258
  %1268 = vst [vmem:[#allocation2 + $0x260] sm:$0xf0] %v1248
  %1269 = vst [vmem:[#allocation2 + $0x268] sm:$0xf0] %v1249
  %1270 = vst [vmem:[#allocation2 + $0x270] sm:$0xf0] %v1250
  %1271 = vst [vmem:[#allocation2 + $0x278] sm:$0xf0] %v1251
  %1272 = vst [vmem:[#allocation2 + $0x280] sm:$0xff] %v1253
  %1273 = vst [vmem:[#allocation2 + $0x288] sm:$0xff] %v1255
  %1274 = vst [vmem:[#allocation2 + $0x290] sm:$0xff] %v1257
  %1275 = vst [vmem:[#allocation2 + $0x298] sm:$0xff] %v1259
  %1276 = vrot.lane.b32.xlu0 %v256, 126
  %v1277 = vpop.permute.xlu0 %1276
  %1278 = vrot.lane.b32.xlu0 %v312, 126
  %v1279 = vpop.permute.xlu0 %1278
  %1280 = vrot.lane.b32.xlu0 %v270, 126
  %v1281 = vpop.permute.xlu0 %1280
  %1282 = vrot.lane.b32.xlu0 %v326, 126
  %v1283 = vpop.permute.xlu0 %1282
  %1284 = vrot.lane.b32.xlu0 %v284, 126
  %v1285 = vpop.permute.xlu0 %1284
  %1286 = vrot.lane.b32.xlu0 %v340, 126
  %v1287 = vpop.permute.xlu0 %1286
  %1288 = vrot.lane.b32.xlu0 %v298, 126
  %v1289 = vpop.permute.xlu0 %1288
  %1290 = vrot.lane.b32.xlu0 %v354, 126
  %v1291 = vpop.permute.xlu0 %1290
  %vm1292 = vcmp.lt.s32.totalorder %v372, 126
  %v1293 = vsel %vm1292, %v1285, %v1289
  %v1294 = vsel %vm1292, %v1287, %v1291
  %v1295 = vsel %vm1292, %v1281, %v1285
  %v1296 = vsel %vm1292, %v1283, %v1287
  %v1297 = vsel %vm1292, %v1277, %v1281
  %v1298 = vsel %vm1292, %v1279, %v1283
  %v1299 = vsel %vm1292, %v1289, %v1277
  %v1300 = vsel %vm1292, %v1291, %v1279
  %vm1301 = vmand %vm1061, %vm658
  %vm1302 = vmand %vm1301, %vm660
  %v1303 = vsel %vm1302, 1, 0
  %v1304 = vperm.slane %v1303, 0
  %v1305 = vperm.slane %v1303, 1
  %v1306 = vperm.slane %v1303, 2
  %v1307 = vperm.slane %v1303, 3
  %vm1308 = vcmp.eq.s32.totalorder %v1304, 1
  %vm1309 = vcmp.eq.s32.totalorder %v1305, 1
  %vm1310 = vcmp.eq.s32.totalorder %v1306, 1
  %vm1311 = vcmp.eq.s32.totalorder %v1307, 1
  %v1312 = vsel %vm1308, %v1297, 0.0
  %v1313 = vsel %vm1309, %v1295, 0.0
  %v1314 = vsel %vm1310, %v1293, 0.0
  %v1315 = vsel %vm1311, %v1299, 0.0
  %v1316 = vsel %vm1308, %v1298, 0.0
  %v1317 = vsel %vm1309, %v1296, 0.0
  %v1318 = vsel %vm1310, %v1294, 0.0
  %v1319 = vsel %vm1311, %v1300, 0.0
  %1320 = vst [vmem:[#allocation2 + $0x2a0] sm:$0xff] %v1312
  %1321 = vst [vmem:[#allocation2 + $0x2a8] sm:$0xff] %v1313
  %1322 = vst [vmem:[#allocation2 + $0x2b0] sm:$0xff] %v1314
  %1323 = vst [vmem:[#allocation2 + $0x2b8] sm:$0xff] %v1315
  %1324 = vst [vmem:[#allocation2 + $0x2c0] sm:$0xf] %v1316
  %1325 = vst [vmem:[#allocation2 + $0x2c8] sm:$0xf] %v1317
  %1326 = vst [vmem:[#allocation2 + $0x2d0] sm:$0xf] %v1318
  %1327 = vst [vmem:[#allocation2 + $0x2d8] sm:$0xf] %v1319
  %1328 = vrot.lane.b32.xlu0 %v256, 114
  %v1329 = vpop.permute.xlu0 %1328
  %1330 = vrot.lane.b32.xlu0 %v312, 114
  %v1331 = vpop.permute.xlu0 %1330
  %1332 = vrot.lane.b32.xlu0 %v270, 114
  %v1333 = vpop.permute.xlu0 %1332
  %1334 = vrot.lane.b32.xlu0 %v326, 114
  %v1335 = vpop.permute.xlu0 %1334
  %1336 = vrot.lane.b32.xlu0 %v284, 114
  %v1337 = vpop.permute.xlu0 %1336
  %1338 = vrot.lane.b32.xlu0 %v340, 114
  %v1339 = vpop.permute.xlu0 %1338
  %1340 = vrot.lane.b32.xlu0 %v298, 114
  %v1341 = vpop.permute.xlu0 %1340
  %1342 = vrot.lane.b32.xlu0 %v354, 114
  %v1343 = vpop.permute.xlu0 %1342
  %vm1344 = vcmp.lt.s32.totalorder %v372, 114
  %v1345 = vsel %vm1344, %v1337, %v1341
  %v1346 = vsel %vm1344, %v1339, %v1343
  %v1347 = vsel %vm1344, %v1333, %v1337
  %v1348 = vsel %vm1344, %v1335, %v1339
  %v1349 = vsel %vm1344, %v1329, %v1333
  %v1350 = vsel %vm1344, %v1331, %v1335
  %v1351 = vsel %vm1344, %v1341, %v1329
  %v1352 = vsel %vm1344, %v1343, %v1331
  %vm1353 = vcmp.ge.s32.totalorder %v39, 4294967295
  %vm1354 = vcmp.lt.s32.totalorder %v39, 15
  %vm1355 = vmand %vm1353, %vm1354
  %vm1356 = vmand %vm1355, %vm385
  %vm1357 = vmand %vm1356, %vm387
  %v1358 = vsel %vm1357, 1, 0
  %v1359 = vperm.slane %v1358, 0
  %v1360 = vperm.slane %v1358, 1
  %v1361 = vperm.slane %v1358, 2
  %v1362 = vperm.slane %v1358, 3
  %vm1363 = vcmp.eq.s32.totalorder %v1359, 1
  %vm1364 = vcmp.eq.s32.totalorder %v1360, 1
  %vm1365 = vcmp.eq.s32.totalorder %v1361, 1
  %vm1366 = vcmp.eq.s32.totalorder %v1362, 1
  %v1367 = vsel %vm1363, %v1349, 0.0
  %v1368 = vsel %vm1364, %v1347, 0.0
  %v1369 = vsel %vm1365, %v1345, 0.0
  %v1370 = vsel %vm1366, %v1351, 0.0
  %v1371 = vsel %vm1363, %v1350, 0.0
  %v1372 = vsel %vm1364, %v1348, 0.0
  %v1373 = vsel %vm1365, %v1346, 0.0
  %v1374 = vsel %vm1366, %v1352, 0.0
  %v1383 = vrot.slane %v1367, 4
  %v1384 = vrot.slane %v1368, 4
  %v1385 = vrot.slane %v1369, 4
  %v1386 = vrot.slane %v1370, 4
  %v1387 = vrot.slane %v1371, 4
  %v1388 = vsel %vm468, %v1383, %v1387
  %v1389 = vrot.slane %v1372, 4
  %v1390 = vsel %vm468, %v1384, %v1389
  %v1391 = vrot.slane %v1373, 4
  %v1392 = vsel %vm468, %v1385, %v1391
  %v1393 = vrot.slane %v1374, 4
  %v1394 = vsel %vm468, %v1386, %v1393
  %1403 = vst [vmem:[#allocation2 + $0x2c0] sm:$0xf0] %v1383
  %1404 = vst [vmem:[#allocation2 + $0x2c8] sm:$0xf0] %v1384
  %1405 = vst [vmem:[#allocation2 + $0x2d0] sm:$0xf0] %v1385
  %1406 = vst [vmem:[#allocation2 + $0x2d8] sm:$0xf0] %v1386
  %1407 = vst [vmem:[#allocation2 + $0x2e0] sm:$0xff] %v1388
  %1408 = vst [vmem:[#allocation2 + $0x2e8] sm:$0xff] %v1390
  %1409 = vst [vmem:[#allocation2 + $0x2f0] sm:$0xff] %v1392
  %1410 = vst [vmem:[#allocation2 + $0x2f8] sm:$0xff] %v1394
  %1411 = vrot.lane.b32.xlu0 %v256, 113
  %v1412 = vpop.permute.xlu0 %1411
  %1413 = vrot.lane.b32.xlu0 %v312, 113
  %v1414 = vpop.permute.xlu0 %1413
  %1415 = vrot.lane.b32.xlu0 %v270, 113
  %v1416 = vpop.permute.xlu0 %1415
  %1417 = vrot.lane.b32.xlu0 %v326, 113
  %v1418 = vpop.permute.xlu0 %1417
  %1419 = vrot.lane.b32.xlu0 %v284, 113
  %v1420 = vpop.permute.xlu0 %1419
  %1421 = vrot.lane.b32.xlu0 %v340, 113
  %v1422 = vpop.permute.xlu0 %1421
  %1423 = vrot.lane.b32.xlu0 %v298, 113
  %v1424 = vpop.permute.xlu0 %1423
  %1425 = vrot.lane.b32.xlu0 %v354, 113
  %v1426 = vpop.permute.xlu0 %1425
  %vm1427 = vcmp.lt.s32.totalorder %v372, 113
  %v1428 = vsel %vm1427, %v1420, %v1424
  %v1429 = vsel %vm1427, %v1422, %v1426
  %v1430 = vsel %vm1427, %v1416, %v1420
  %v1431 = vsel %vm1427, %v1418, %v1422
  %v1432 = vsel %vm1427, %v1412, %v1416
  %v1433 = vsel %vm1427, %v1414, %v1418
  %v1434 = vsel %vm1427, %v1424, %v1412
  %v1435 = vsel %vm1427, %v1426, %v1414
  %vm1436 = vmand %vm1355, %vm439
  %vm1437 = vmand %vm1436, %vm441
  %v1438 = vsel %vm1437, 1, 0
  %v1439 = vperm.slane %v1438, 0
  %v1440 = vperm.slane %v1438, 1
  %v1441 = vperm.slane %v1438, 2
  %v1442 = vperm.slane %v1438, 3
  %vm1443 = vcmp.eq.s32.totalorder %v1439, 1
  %vm1444 = vcmp.eq.s32.totalorder %v1440, 1
  %vm1445 = vcmp.eq.s32.totalorder %v1441, 1
  %vm1446 = vcmp.eq.s32.totalorder %v1442, 1
  %v1447 = vsel %vm1443, %v1432, 0.0
  %v1448 = vsel %vm1444, %v1430, 0.0
  %v1449 = vsel %vm1445, %v1428, 0.0
  %v1450 = vsel %vm1446, %v1434, 0.0
  %v1451 = vsel %vm1443, %v1433, 0.0
  %v1452 = vsel %vm1444, %v1431, 0.0
  %v1453 = vsel %vm1445, %v1429, 0.0
  %v1454 = vsel %vm1446, %v1435, 0.0
  %1455 = vst [vmem:[#allocation2 + $0x300] sm:$0xff] %v1447
  %1456 = vst [vmem:[#allocation2 + $0x308] sm:$0xff] %v1448
  %1457 = vst [vmem:[#allocation2 + $0x310] sm:$0xff] %v1449
  %1458 = vst [vmem:[#allocation2 + $0x318] sm:$0xff] %v1450
  %1459 = vst [vmem:[#allocation2 + $0x320] sm:$0xf] %v1451
  %1460 = vst [vmem:[#allocation2 + $0x328] sm:$0xf] %v1452
  %1461 = vst [vmem:[#allocation2 + $0x330] sm:$0xf] %v1453
  %1462 = vst [vmem:[#allocation2 + $0x338] sm:$0xf] %v1454
  %1463 = vrot.lane.b32.xlu0 %v256, 112
  %v1464 = vpop.permute.xlu0 %1463
  %1465 = vrot.lane.b32.xlu0 %v312, 112
  %v1466 = vpop.permute.xlu0 %1465
  %1467 = vrot.lane.b32.xlu0 %v270, 112
  %v1468 = vpop.permute.xlu0 %1467
  %1469 = vrot.lane.b32.xlu0 %v326, 112
  %v1470 = vpop.permute.xlu0 %1469
  %1471 = vrot.lane.b32.xlu0 %v284, 112
  %v1472 = vpop.permute.xlu0 %1471
  %1473 = vrot.lane.b32.xlu0 %v340, 112
  %v1474 = vpop.permute.xlu0 %1473
  %1475 = vrot.lane.b32.xlu0 %v298, 112
  %v1476 = vpop.permute.xlu0 %1475
  %1477 = vrot.lane.b32.xlu0 %v354, 112
  %v1478 = vpop.permute.xlu0 %1477
  %vm1479 = vcmp.lt.s32.totalorder %v372, 112
  %v1480 = vsel %vm1479, %v1472, %v1476
  %v1481 = vsel %vm1479, %v1474, %v1478
  %v1482 = vsel %vm1479, %v1468, %v1472
  %v1483 = vsel %vm1479, %v1470, %v1474
  %v1484 = vsel %vm1479, %v1464, %v1468
  %v1485 = vsel %vm1479, %v1466, %v1470
  %v1486 = vsel %vm1479, %v1476, %v1464
  %v1487 = vsel %vm1479, %v1478, %v1466
  %vm1488 = vmand %vm1355, %vm522
  %vm1489 = vmand %vm1488, %vm524
  %v1490 = vsel %vm1489, 1, 0
  %v1491 = vperm.slane %v1490, 0
  %v1492 = vperm.slane %v1490, 1
  %v1493 = vperm.slane %v1490, 2
  %v1494 = vperm.slane %v1490, 3
  %vm1495 = vcmp.eq.s32.totalorder %v1491, 1
  %vm1496 = vcmp.eq.s32.totalorder %v1492, 1
  %vm1497 = vcmp.eq.s32.totalorder %v1493, 1
  %vm1498 = vcmp.eq.s32.totalorder %v1494, 1
  %v1499 = vsel %vm1495, %v1484, 0.0
  %v1500 = vsel %vm1496, %v1482, 0.0
  %v1501 = vsel %vm1497, %v1480, 0.0
  %v1502 = vsel %vm1498, %v1486, 0.0
  %v1503 = vsel %vm1495, %v1485, 0.0
  %v1504 = vsel %vm1496, %v1483, 0.0
  %v1505 = vsel %vm1497, %v1481, 0.0
  %v1506 = vsel %vm1498, %v1487, 0.0
  %v1515 = vrot.slane %v1499, 4
  %v1516 = vrot.slane %v1500, 4
  %v1517 = vrot.slane %v1501, 4
  %v1518 = vrot.slane %v1502, 4
  %v1519 = vrot.slane %v1503, 4
  %v1520 = vsel %vm468, %v1515, %v1519
  %v1521 = vrot.slane %v1504, 4
  %v1522 = vsel %vm468, %v1516, %v1521
  %v1523 = vrot.slane %v1505, 4
  %v1524 = vsel %vm468, %v1517, %v1523
  %v1525 = vrot.slane %v1506, 4
  %v1526 = vsel %vm468, %v1518, %v1525
  %1535 = vst [vmem:[#allocation2 + $0x320] sm:$0xf0] %v1515
  %1536 = vst [vmem:[#allocation2 + $0x328] sm:$0xf0] %v1516
  %1537 = vst [vmem:[#allocation2 + $0x330] sm:$0xf0] %v1517
  %1538 = vst [vmem:[#allocation2 + $0x338] sm:$0xf0] %v1518
  %1539 = vst [vmem:[#allocation2 + $0x340] sm:$0xff] %v1520
  %1540 = vst [vmem:[#allocation2 + $0x348] sm:$0xff] %v1522
  %1541 = vst [vmem:[#allocation2 + $0x350] sm:$0xff] %v1524
  %1542 = vst [vmem:[#allocation2 + $0x358] sm:$0xff] %v1526
  %1543 = vrot.lane.b32.xlu0 %v256, 111
  %v1544 = vpop.permute.xlu0 %1543
  %1545 = vrot.lane.b32.xlu0 %v312, 111
  %v1546 = vpop.permute.xlu0 %1545
  %1547 = vrot.lane.b32.xlu0 %v270, 111
  %v1548 = vpop.permute.xlu0 %1547
  %1549 = vrot.lane.b32.xlu0 %v326, 111
  %v1550 = vpop.permute.xlu0 %1549
  %1551 = vrot.lane.b32.xlu0 %v284, 111
  %v1552 = vpop.permute.xlu0 %1551
  %1553 = vrot.lane.b32.xlu0 %v340, 111
  %v1554 = vpop.permute.xlu0 %1553
  %1555 = vrot.lane.b32.xlu0 %v298, 111
  %v1556 = vpop.permute.xlu0 %1555
  %1557 = vrot.lane.b32.xlu0 %v354, 111
  %v1558 = vpop.permute.xlu0 %1557
  %vm1559 = vcmp.lt.s32.totalorder %v372, 111
  %v1560 = vsel %vm1559, %v1552, %v1556
  %v1561 = vsel %vm1559, %v1554, %v1558
  %v1562 = vsel %vm1559, %v1548, %v1552
  %v1563 = vsel %vm1559, %v1550, %v1554
  %v1564 = vsel %vm1559, %v1544, %v1548
  %v1565 = vsel %vm1559, %v1546, %v1550
  %v1566 = vsel %vm1559, %v1556, %v1544
  %v1567 = vsel %vm1559, %v1558, %v1546
  %vm1568 = vmand %vm1355, %vm576
  %vm1569 = vmand %vm1568, %vm578
  %v1570 = vsel %vm1569, 1, 0
  %v1571 = vperm.slane %v1570, 0
  %v1572 = vperm.slane %v1570, 1
  %v1573 = vperm.slane %v1570, 2
  %v1574 = vperm.slane %v1570, 3
  %vm1575 = vcmp.eq.s32.totalorder %v1571, 1
  %vm1576 = vcmp.eq.s32.totalorder %v1572, 1
  %vm1577 = vcmp.eq.s32.totalorder %v1573, 1
  %vm1578 = vcmp.eq.s32.totalorder %v1574, 1
  %v1579 = vsel %vm1575, %v1564, 0.0
  %v1580 = vsel %vm1576, %v1562, 0.0
  %v1581 = vsel %vm1577, %v1560, 0.0
  %v1582 = vsel %vm1578, %v1566, 0.0
  %v1583 = vsel %vm1575, %v1565, 0.0
  %v1584 = vsel %vm1576, %v1563, 0.0
  %v1585 = vsel %vm1577, %v1561, 0.0
  %v1586 = vsel %vm1578, %v1567, 0.0
  %1587 = vst [vmem:[#allocation2 + $0x360] sm:$0xff] %v1579
  %1588 = vst [vmem:[#allocation2 + $0x368] sm:$0xff] %v1580
  %1589 = vst [vmem:[#allocation2 + $0x370] sm:$0xff] %v1581
  %1590 = vst [vmem:[#allocation2 + $0x378] sm:$0xff] %v1582
  %1591 = vst [vmem:[#allocation2 + $0x380] sm:$0xf] %v1583
  %1592 = vst [vmem:[#allocation2 + $0x388] sm:$0xf] %v1584
  %1593 = vst [vmem:[#allocation2 + $0x390] sm:$0xf] %v1585
  %1594 = vst [vmem:[#allocation2 + $0x398] sm:$0xf] %v1586
  %1595 = vrot.lane.b32.xlu0 %v256, 110
  %v1596 = vpop.permute.xlu0 %1595
  %1597 = vrot.lane.b32.xlu0 %v312, 110
  %v1598 = vpop.permute.xlu0 %1597
  %1599 = vrot.lane.b32.xlu0 %v270, 110
  %v1600 = vpop.permute.xlu0 %1599
  %1601 = vrot.lane.b32.xlu0 %v326, 110
  %v1602 = vpop.permute.xlu0 %1601
  %1603 = vrot.lane.b32.xlu0 %v284, 110
  %v1604 = vpop.permute.xlu0 %1603
  %1605 = vrot.lane.b32.xlu0 %v340, 110
  %v1606 = vpop.permute.xlu0 %1605
  %1607 = vrot.lane.b32.xlu0 %v298, 110
  %v1608 = vpop.permute.xlu0 %1607
  %1609 = vrot.lane.b32.xlu0 %v354, 110
  %v1610 = vpop.permute.xlu0 %1609
  %vm1611 = vcmp.lt.s32.totalorder %v372, 110
  %v1612 = vsel %vm1611, %v1604, %v1608
  %v1613 = vsel %vm1611, %v1606, %v1610
  %v1614 = vsel %vm1611, %v1600, %v1604
  %v1615 = vsel %vm1611, %v1602, %v1606
  %v1616 = vsel %vm1611, %v1596, %v1600
  %v1617 = vsel %vm1611, %v1598, %v1602
  %v1618 = vsel %vm1611, %v1608, %v1596
  %v1619 = vsel %vm1611, %v1610, %v1598
  %vm1620 = vmand %vm1355, %vm658
  %vm1621 = vmand %vm1620, %vm660
  %v1622 = vsel %vm1621, 1, 0
  %v1623 = vperm.slane %v1622, 0
  %v1624 = vperm.slane %v1622, 1
  %v1625 = vperm.slane %v1622, 2
  %v1626 = vperm.slane %v1622, 3
  %vm1627 = vcmp.eq.s32.totalorder %v1623, 1
  %vm1628 = vcmp.eq.s32.totalorder %v1624, 1
  %vm1629 = vcmp.eq.s32.totalorder %v1625, 1
  %vm1630 = vcmp.eq.s32.totalorder %v1626, 1
  %v1631 = vsel %vm1627, %v1616, 0.0
  %v1632 = vsel %vm1628, %v1614, 0.0
  %v1633 = vsel %vm1629, %v1612, 0.0
  %v1634 = vsel %vm1630, %v1618, 0.0
  %v1635 = vsel %vm1627, %v1617, 0.0
  %v1636 = vsel %vm1628, %v1615, 0.0
  %v1637 = vsel %vm1629, %v1613, 0.0
  %v1638 = vsel %vm1630, %v1619, 0.0
  %v1647 = vrot.slane %v1631, 4
  %v1648 = vrot.slane %v1632, 4
  %v1649 = vrot.slane %v1633, 4
  %v1650 = vrot.slane %v1634, 4
  %v1651 = vrot.slane %v1635, 4
  %v1652 = vsel %vm468, %v1647, %v1651
  %v1653 = vrot.slane %v1636, 4
  %v1654 = vsel %vm468, %v1648, %v1653
  %v1655 = vrot.slane %v1637, 4
  %v1656 = vsel %vm468, %v1649, %v1655
  %v1657 = vrot.slane %v1638, 4
  %v1658 = vsel %vm468, %v1650, %v1657
  %1667 = vst [vmem:[#allocation2 + $0x380] sm:$0xf0] %v1647
  %1668 = vst [vmem:[#allocation2 + $0x388] sm:$0xf0] %v1648
  %1669 = vst [vmem:[#allocation2 + $0x390] sm:$0xf0] %v1649
  %1670 = vst [vmem:[#allocation2 + $0x398] sm:$0xf0] %v1650
  %1671 = vst [vmem:[#allocation2 + $0x3a0] sm:$0xff] %v1652
  %1672 = vst [vmem:[#allocation2 + $0x3a8] sm:$0xff] %v1654
  %1673 = vst [vmem:[#allocation2 + $0x3b0] sm:$0xff] %v1656
  %1674 = vst [vmem:[#allocation2 + $0x3b8] sm:$0xff] %v1658
  %1675 = vrot.lane.b32.xlu0 %v256, 98
  %v1676 = vpop.permute.xlu0 %1675
  %1677 = vrot.lane.b32.xlu0 %v312, 98
  %v1678 = vpop.permute.xlu0 %1677
  %1679 = vrot.lane.b32.xlu0 %v270, 98
  %v1680 = vpop.permute.xlu0 %1679
  %1681 = vrot.lane.b32.xlu0 %v326, 98
  %v1682 = vpop.permute.xlu0 %1681
  %1683 = vrot.lane.b32.xlu0 %v284, 98
  %v1684 = vpop.permute.xlu0 %1683
  %1685 = vrot.lane.b32.xlu0 %v340, 98
  %v1686 = vpop.permute.xlu0 %1685
  %1687 = vrot.lane.b32.xlu0 %v298, 98
  %v1688 = vpop.permute.xlu0 %1687
  %1689 = vrot.lane.b32.xlu0 %v354, 98
  %v1690 = vpop.permute.xlu0 %1689
  %vm1691 = vcmp.lt.s32.totalorder %v372, 98
  %v1692 = vsel %vm1691, %v1684, %v1688
  %v1693 = vsel %vm1691, %v1686, %v1690
  %v1694 = vsel %vm1691, %v1680, %v1684
  %v1695 = vsel %vm1691, %v1682, %v1686
  %v1696 = vsel %vm1691, %v1676, %v1680
  %v1697 = vsel %vm1691, %v1678, %v1682
  %v1698 = vsel %vm1691, %v1688, %v1676
  %v1699 = vsel %vm1691, %v1690, %v1678
  %vm1700 = vcmp.ge.s32.totalorder %v39, 4294967294
  %vm1701 = vcmp.lt.s32.totalorder %v39, 14
  %vm1702 = vmand %vm1700, %vm1701
  %vm1703 = vmand %vm1702, %vm385
  %vm1704 = vmand %vm1703, %vm387
  %v1705 = vsel %vm1704, 1, 0
  %v1706 = vperm.slane %v1705, 0
  %v1707 = vperm.slane %v1705, 1
  %v1708 = vperm.slane %v1705, 2
  %v1709 = vperm.slane %v1705, 3
  %vm1710 = vcmp.eq.s32.totalorder %v1706, 1
  %vm1711 = vcmp.eq.s32.totalorder %v1707, 1
  %vm1712 = vcmp.eq.s32.totalorder %v1708, 1
  %vm1713 = vcmp.eq.s32.totalorder %v1709, 1
  %v1714 = vsel %vm1710, %v1696, 0.0
  %v1715 = vsel %vm1711, %v1694, 0.0
  %v1716 = vsel %vm1712, %v1692, 0.0
  %v1717 = vsel %vm1713, %v1698, 0.0
  %v1718 = vsel %vm1710, %v1697, 0.0
  %v1719 = vsel %vm1711, %v1695, 0.0
  %v1720 = vsel %vm1712, %v1693, 0.0
  %v1721 = vsel %vm1713, %v1699, 0.0
  %1722 = vst [vmem:[#allocation2 + $0x3c0] sm:$0xff] %v1714
  %1723 = vst [vmem:[#allocation2 + $0x3c8] sm:$0xff] %v1715
  %1724 = vst [vmem:[#allocation2 + $0x3d0] sm:$0xff] %v1716
  %1725 = vst [vmem:[#allocation2 + $0x3d8] sm:$0xff] %v1717
  %1726 = vst [vmem:[#allocation2 + $0x3e0] sm:$0xf] %v1718
  %1727 = vst [vmem:[#allocation2 + $0x3e8] sm:$0xf] %v1719
  %1728 = vst [vmem:[#allocation2 + $0x3f0] sm:$0xf] %v1720
  %1729 = vst [vmem:[#allocation2 + $0x3f8] sm:$0xf] %v1721
  %1730 = vrot.lane.b32.xlu0 %v256, 97
  %v1731 = vpop.permute.xlu0 %1730
  %1732 = vrot.lane.b32.xlu0 %v312, 97
  %v1733 = vpop.permute.xlu0 %1732
  %1734 = vrot.lane.b32.xlu0 %v270, 97
  %v1735 = vpop.permute.xlu0 %1734
  %1736 = vrot.lane.b32.xlu0 %v326, 97
  %v1737 = vpop.permute.xlu0 %1736
  %1738 = vrot.lane.b32.xlu0 %v284, 97
  %v1739 = vpop.permute.xlu0 %1738
  %1740 = vrot.lane.b32.xlu0 %v340, 97
  %v1741 = vpop.permute.xlu0 %1740
  %1742 = vrot.lane.b32.xlu0 %v298, 97
  %v1743 = vpop.permute.xlu0 %1742
  %1744 = vrot.lane.b32.xlu0 %v354, 97
  %v1745 = vpop.permute.xlu0 %1744
  %vm1746 = vcmp.lt.s32.totalorder %v372, 97
  %v1747 = vsel %vm1746, %v1739, %v1743
  %v1748 = vsel %vm1746, %v1741, %v1745
  %v1749 = vsel %vm1746, %v1735, %v1739
  %v1750 = vsel %vm1746, %v1737, %v1741
  %v1751 = vsel %vm1746, %v1731, %v1735
  %v1752 = vsel %vm1746, %v1733, %v1737
  %v1753 = vsel %vm1746, %v1743, %v1731
  %v1754 = vsel %vm1746, %v1745, %v1733
  %vm1755 = vmand %vm1702, %vm439
  %vm1756 = vmand %vm1755, %vm441
  %v1757 = vsel %vm1756, 1, 0
  %v1758 = vperm.slane %v1757, 0
  %v1759 = vperm.slane %v1757, 1
  %v1760 = vperm.slane %v1757, 2
  %v1761 = vperm.slane %v1757, 3
  %vm1762 = vcmp.eq.s32.totalorder %v1758, 1
  %vm1763 = vcmp.eq.s32.totalorder %v1759, 1
  %vm1764 = vcmp.eq.s32.totalorder %v1760, 1
  %vm1765 = vcmp.eq.s32.totalorder %v1761, 1
  %v1766 = vsel %vm1762, %v1751, 0.0
  %v1767 = vsel %vm1763, %v1749, 0.0
  %v1768 = vsel %vm1764, %v1747, 0.0
  %v1769 = vsel %vm1765, %v1753, 0.0
  %v1770 = vsel %vm1762, %v1752, 0.0
  %v1771 = vsel %vm1763, %v1750, 0.0
  %v1772 = vsel %vm1764, %v1748, 0.0
  %v1773 = vsel %vm1765, %v1754, 0.0
  %v1782 = vrot.slane %v1766, 4
  %v1783 = vrot.slane %v1767, 4
  %v1784 = vrot.slane %v1768, 4
  %v1785 = vrot.slane %v1769, 4
  %v1786 = vrot.slane %v1770, 4
  %v1787 = vsel %vm468, %v1782, %v1786
  %v1788 = vrot.slane %v1771, 4
  %v1789 = vsel %vm468, %v1783, %v1788
  %v1790 = vrot.slane %v1772, 4
  %v1791 = vsel %vm468, %v1784, %v1790
  %v1792 = vrot.slane %v1773, 4
  %v1793 = vsel %vm468, %v1785, %v1792
  %1802 = vst [vmem:[#allocation2 + $0x3e0] sm:$0xf0] %v1782
  %1803 = vst [vmem:[#allocation2 + $0x3e8] sm:$0xf0] %v1783
  %1804 = vst [vmem:[#allocation2 + $0x3f0] sm:$0xf0] %v1784
  %1805 = vst [vmem:[#allocation2 + $0x3f8] sm:$0xf0] %v1785
  %1806 = vst [vmem:[#allocation2 + $0x400] sm:$0xff] %v1787
  %1807 = vst [vmem:[#allocation2 + $0x408] sm:$0xff] %v1789
  %1808 = vst [vmem:[#allocation2 + $0x410] sm:$0xff] %v1791
  %1809 = vst [vmem:[#allocation2 + $0x418] sm:$0xff] %v1793
  %1810 = vrot.lane.b32.xlu0 %v256, 96
  %v1811 = vpop.permute.xlu0 %1810
  %1812 = vrot.lane.b32.xlu0 %v312, 96
  %v1813 = vpop.permute.xlu0 %1812
  %1814 = vrot.lane.b32.xlu0 %v270, 96
  %v1815 = vpop.permute.xlu0 %1814
  %1816 = vrot.lane.b32.xlu0 %v326, 96
  %v1817 = vpop.permute.xlu0 %1816
  %1818 = vrot.lane.b32.xlu0 %v284, 96
  %v1819 = vpop.permute.xlu0 %1818
  %1820 = vrot.lane.b32.xlu0 %v340, 96
  %v1821 = vpop.permute.xlu0 %1820
  %1822 = vrot.lane.b32.xlu0 %v298, 96
  %v1823 = vpop.permute.xlu0 %1822
  %1824 = vrot.lane.b32.xlu0 %v354, 96
  %v1825 = vpop.permute.xlu0 %1824
  %vm1826 = vcmp.lt.s32.totalorder %v372, 96
  %v1827 = vsel %vm1826, %v1819, %v1823
  %v1828 = vsel %vm1826, %v1821, %v1825
  %v1829 = vsel %vm1826, %v1815, %v1819
  %v1830 = vsel %vm1826, %v1817, %v1821
  %v1831 = vsel %vm1826, %v1811, %v1815
  %v1832 = vsel %vm1826, %v1813, %v1817
  %v1833 = vsel %vm1826, %v1823, %v1811
  %v1834 = vsel %vm1826, %v1825, %v1813
  %vm1835 = vmand %vm1702, %vm522
  %vm1836 = vmand %vm1835, %vm524
  %v1837 = vsel %vm1836, 1, 0
  %v1838 = vperm.slane %v1837, 0
  %v1839 = vperm.slane %v1837, 1
  %v1840 = vperm.slane %v1837, 2
  %v1841 = vperm.slane %v1837, 3
  %vm1842 = vcmp.eq.s32.totalorder %v1838, 1
  %vm1843 = vcmp.eq.s32.totalorder %v1839, 1
  %vm1844 = vcmp.eq.s32.totalorder %v1840, 1
  %vm1845 = vcmp.eq.s32.totalorder %v1841, 1
  %v1846 = vsel %vm1842, %v1831, 0.0
  %v1847 = vsel %vm1843, %v1829, 0.0
  %v1848 = vsel %vm1844, %v1827, 0.0
  %v1849 = vsel %vm1845, %v1833, 0.0
  %v1850 = vsel %vm1842, %v1832, 0.0
  %v1851 = vsel %vm1843, %v1830, 0.0
  %v1852 = vsel %vm1844, %v1828, 0.0
  %v1853 = vsel %vm1845, %v1834, 0.0
  %1854 = vst [vmem:[#allocation2 + $0x420] sm:$0xff] %v1846
  %1855 = vst [vmem:[#allocation2 + $0x428] sm:$0xff] %v1847
  %1856 = vst [vmem:[#allocation2 + $0x430] sm:$0xff] %v1848
  %1857 = vst [vmem:[#allocation2 + $0x438] sm:$0xff] %v1849
  %1858 = vst [vmem:[#allocation2 + $0x440] sm:$0xf] %v1850
  %1859 = vst [vmem:[#allocation2 + $0x448] sm:$0xf] %v1851
  %1860 = vst [vmem:[#allocation2 + $0x450] sm:$0xf] %v1852
  %1861 = vst [vmem:[#allocation2 + $0x458] sm:$0xf] %v1853
  %1862 = vrot.lane.b32.xlu0 %v256, 95
  %v1863 = vpop.permute.xlu0 %1862
  %1864 = vrot.lane.b32.xlu0 %v312, 95
  %v1865 = vpop.permute.xlu0 %1864
  %1866 = vrot.lane.b32.xlu0 %v270, 95
  %v1867 = vpop.permute.xlu0 %1866
  %1868 = vrot.lane.b32.xlu0 %v326, 95
  %v1869 = vpop.permute.xlu0 %1868
  %1870 = vrot.lane.b32.xlu0 %v284, 95
  %v1871 = vpop.permute.xlu0 %1870
  %1872 = vrot.lane.b32.xlu0 %v340, 95
  %v1873 = vpop.permute.xlu0 %1872
  %1874 = vrot.lane.b32.xlu0 %v298, 95
  %v1875 = vpop.permute.xlu0 %1874
  %1876 = vrot.lane.b32.xlu0 %v354, 95
  %v1877 = vpop.permute.xlu0 %1876
  %vm1878 = vcmp.lt.s32.totalorder %v372, 95
  %v1879 = vsel %vm1878, %v1871, %v1875
  %v1880 = vsel %vm1878, %v1873, %v1877
  %v1881 = vsel %vm1878, %v1867, %v1871
  %v1882 = vsel %vm1878, %v1869, %v1873
  %v1883 = vsel %vm1878, %v1863, %v1867
  %v1884 = vsel %vm1878, %v1865, %v1869
  %v1885 = vsel %vm1878, %v1875, %v1863
  %v1886 = vsel %vm1878, %v1877, %v1865
  %vm1887 = vmand %vm1702, %vm576
  %vm1888 = vmand %vm1887, %vm578
  %v1889 = vsel %vm1888, 1, 0
  %v1890 = vperm.slane %v1889, 0
  %v1891 = vperm.slane %v1889, 1
  %v1892 = vperm.slane %v1889, 2
  %v1893 = vperm.slane %v1889, 3
  %vm1894 = vcmp.eq.s32.totalorder %v1890, 1
  %vm1895 = vcmp.eq.s32.totalorder %v1891, 1
  %vm1896 = vcmp.eq.s32.totalorder %v1892, 1
  %vm1897 = vcmp.eq.s32.totalorder %v1893, 1
  %v1898 = vsel %vm1894, %v1883, 0.0
  %v1899 = vsel %vm1895, %v1881, 0.0
  %v1900 = vsel %vm1896, %v1879, 0.0
  %v1901 = vsel %vm1897, %v1885, 0.0
  %v1902 = vsel %vm1894, %v1884, 0.0
  %v1903 = vsel %vm1895, %v1882, 0.0
  %v1904 = vsel %vm1896, %v1880, 0.0
  %v1905 = vsel %vm1897, %v1886, 0.0
  %v1914 = vrot.slane %v1898, 4
  %v1915 = vrot.slane %v1899, 4
  %v1916 = vrot.slane %v1900, 4
  %v1917 = vrot.slane %v1901, 4
  %v1918 = vrot.slane %v1902, 4
  %v1919 = vsel %vm468, %v1914, %v1918
  %v1920 = vrot.slane %v1903, 4
  %v1921 = vsel %vm468, %v1915, %v1920
  %v1922 = vrot.slane %v1904, 4
  %v1923 = vsel %vm468, %v1916, %v1922
  %v1924 = vrot.slane %v1905, 4
  %v1925 = vsel %vm468, %v1917, %v1924
  %1934 = vst [vmem:[#allocation2 + $0x440] sm:$0xf0] %v1914
  %1935 = vst [vmem:[#allocation2 + $0x448] sm:$0xf0] %v1915
  %1936 = vst [vmem:[#allocation2 + $0x450] sm:$0xf0] %v1916
  %1937 = vst [vmem:[#allocation2 + $0x458] sm:$0xf0] %v1917
  %1938 = vst [vmem:[#allocation2 + $0x460] sm:$0xff] %v1919
  %1939 = vst [vmem:[#allocation2 + $0x468] sm:$0xff] %v1921
  %1940 = vst [vmem:[#allocation2 + $0x470] sm:$0xff] %v1923
  %1941 = vst [vmem:[#allocation2 + $0x478] sm:$0xff] %v1925
  %1942 = vrot.lane.b32.xlu0 %v256, 94
  %v1943 = vpop.permute.xlu0 %1942
  %1944 = vrot.lane.b32.xlu0 %v312, 94
  %v1945 = vpop.permute.xlu0 %1944
  %1946 = vrot.lane.b32.xlu0 %v270, 94
  %v1947 = vpop.permute.xlu0 %1946
  %1948 = vrot.lane.b32.xlu0 %v326, 94
  %v1949 = vpop.permute.xlu0 %1948
  %1950 = vrot.lane.b32.xlu0 %v284, 94
  %v1951 = vpop.permute.xlu0 %1950
  %1952 = vrot.lane.b32.xlu0 %v340, 94
  %v1953 = vpop.permute.xlu0 %1952
  %1954 = vrot.lane.b32.xlu0 %v298, 94
  %v1955 = vpop.permute.xlu0 %1954
  %1956 = vrot.lane.b32.xlu0 %v354, 94
  %v1957 = vpop.permute.xlu0 %1956
  %vm1958 = vcmp.lt.s32.totalorder %v372, 94
  %v1959 = vsel %vm1958, %v1951, %v1955
  %v1960 = vsel %vm1958, %v1953, %v1957
  %v1961 = vsel %vm1958, %v1947, %v1951
  %v1962 = vsel %vm1958, %v1949, %v1953
  %v1963 = vsel %vm1958, %v1943, %v1947
  %v1964 = vsel %vm1958, %v1945, %v1949
  %v1965 = vsel %vm1958, %v1955, %v1943
  %v1966 = vsel %vm1958, %v1957, %v1945
  %vm1967 = vmand %vm1702, %vm658
  %vm1968 = vmand %vm1967, %vm660
  %v1969 = vsel %vm1968, 1, 0
  %v1970 = vperm.slane %v1969, 0
  %v1971 = vperm.slane %v1969, 1
  %v1972 = vperm.slane %v1969, 2
  %v1973 = vperm.slane %v1969, 3
  %vm1974 = vcmp.eq.s32.totalorder %v1970, 1
  %vm1975 = vcmp.eq.s32.totalorder %v1971, 1
  %vm1976 = vcmp.eq.s32.totalorder %v1972, 1
  %vm1977 = vcmp.eq.s32.totalorder %v1973, 1
  %v1978 = vsel %vm1974, %v1963, 0.0
  %v1979 = vsel %vm1975, %v1961, 0.0
  %v1980 = vsel %vm1976, %v1959, 0.0
  %v1981 = vsel %vm1977, %v1965, 0.0
  %v1982 = vsel %vm1974, %v1964, 0.0
  %v1983 = vsel %vm1975, %v1962, 0.0
  %v1984 = vsel %vm1976, %v1960, 0.0
  %v1985 = vsel %vm1977, %v1966, 0.0
  %1986 = vst [vmem:[#allocation2 + $0x480] sm:$0xff] %v1978
  %1987 = vst [vmem:[#allocation2 + $0x488] sm:$0xff] %v1979
  %1988 = vst [vmem:[#allocation2 + $0x490] sm:$0xff] %v1980
  %1989 = vst [vmem:[#allocation2 + $0x498] sm:$0xff] %v1981
  %1990 = vst [vmem:[#allocation2 + $0x4a0] sm:$0xf] %v1982
  %1991 = vst [vmem:[#allocation2 + $0x4a8] sm:$0xf] %v1983
  %1992 = vst [vmem:[#allocation2 + $0x4b0] sm:$0xf] %v1984
  %1993 = vst [vmem:[#allocation2 + $0x4b8] sm:$0xf] %v1985
  %v1994 = vld [vmem:[%s5] sm:$0xff]
  %v1995 = vld [vmem:[%s5 + $0x8] sm:$0xff]
  %v1996 = vld [vmem:[%s5 + $0x10] sm:$0xff]
  %v1997 = vld [vmem:[%s5 + $0x18] sm:$0xf]
  %v1998 = vld [vmem:[%s5 + $0x20] sm:$0xf]
  %v1999 = vld [vmem:[%s5 + $0x28] sm:$0xf]
  %v2000 = vld [vmem:[#allocation2] sm:$0xff]
  %v2001 = vld [vmem:[#allocation2 + $0x8] sm:$0xff]
  %v2002 = vld [vmem:[#allocation2 + $0x10] sm:$0xff]
  %v2003 = vld [vmem:[#allocation2 + $0x18] sm:$0xff]
  %v2004 = vld [vmem:[#allocation2 + $0x20] sm:$0xff]
  %v2005 = vld [vmem:[#allocation2 + $0x28] sm:$0xff]
  %v2006 = vld [vmem:[#allocation2 + $0x30] sm:$0xff]
  %v2007 = vld [vmem:[#allocation2 + $0x38] sm:$0xff]
  %v2008 = vld [vmem:[#allocation2 + $0x40] sm:$0xff]
  %v2009 = vld [vmem:[#allocation2 + $0x48] sm:$0xff]
  %v2010 = vld [vmem:[#allocation2 + $0x50] sm:$0xff]
  %v2011 = vld [vmem:[#allocation2 + $0x58] sm:$0xff]
  %v2012 = vld [vmem:[#allocation2 + $0x60] sm:$0xff]
  %v2013 = vld [vmem:[#allocation2 + $0x68] sm:$0xff]
  %v2014 = vld [vmem:[#allocation2 + $0x70] sm:$0xff]
  %v2015 = vld [vmem:[#allocation2 + $0x78] sm:$0xff]
  %v2016 = vld [vmem:[#allocation2 + $0x80] sm:$0xff]
  %v2017 = vld [vmem:[#allocation2 + $0x88] sm:$0xff]
  %v2018 = vld [vmem:[#allocation2 + $0x90] sm:$0xff]
  %v2019 = vld [vmem:[#allocation2 + $0x98] sm:$0xff]
  %v2020 = vld [vmem:[#allocation2 + $0xa0] sm:$0xff]
  %v2021 = vld [vmem:[#allocation2 + $0xa8] sm:$0xff]
  %v2022 = vld [vmem:[#allocation2 + $0xb0] sm:$0xff]
  %v2023 = vld [vmem:[#allocation2 + $0xb8] sm:$0xff]
  %v2024 = vld [vmem:[#allocation2 + $0xc0] sm:$0xff]
  %v2025 = vld [vmem:[#allocation2 + $0xc8] sm:$0xff]
  %v2026 = vld [vmem:[#allocation2 + $0xd0] sm:$0xff]
  %v2027 = vld [vmem:[#allocation2 + $0xd8] sm:$0xff]
  %v2028 = vld [vmem:[#allocation2 + $0xe0] sm:$0xff]
  %v2029 = vld [vmem:[#allocation2 + $0xe8] sm:$0xff]
  %v2030 = vld [vmem:[#allocation2 + $0xf0] sm:$0xff]
  %v2031 = vld [vmem:[#allocation2 + $0xf8] sm:$0xff]
  %v2032 = vld [vmem:[#allocation2 + $0x100] sm:$0xff]
  %v2033 = vld [vmem:[#allocation2 + $0x108] sm:$0xff]
  %v2034 = vld [vmem:[#allocation2 + $0x110] sm:$0xff]
  %v2035 = vld [vmem:[#allocation2 + $0x118] sm:$0xff]
  %v2036 = vld [vmem:[#allocation2 + $0x120] sm:$0xff]
  %v2037 = vld [vmem:[#allocation2 + $0x128] sm:$0xff]
  %v2038 = vld [vmem:[#allocation2 + $0x130] sm:$0xff]
  %v2039 = vld [vmem:[#allocation2 + $0x138] sm:$0xff]
  %v2040 = vld [vmem:[#allocation2 + $0x140] sm:$0xff]
  %v2041 = vld [vmem:[#allocation2 + $0x148] sm:$0xff]
  %v2042 = vld [vmem:[#allocation2 + $0x150] sm:$0xff]
  %v2043 = vld [vmem:[#allocation2 + $0x158] sm:$0xff]
  %v2044 = vld [vmem:[#allocation2 + $0x160] sm:$0xff]
  %v2045 = vld [vmem:[#allocation2 + $0x168] sm:$0xff]
  %v2046 = vld [vmem:[#allocation2 + $0x170] sm:$0xff]
  %v2047 = vld [vmem:[#allocation2 + $0x178] sm:$0xff]
  %v2048 = vld [vmem:[#allocation2 + $0x180] sm:$0xff]
  %v2049 = vld [vmem:[#allocation2 + $0x188] sm:$0xff]
  %v2050 = vld [vmem:[#allocation2 + $0x190] sm:$0xff]
  %v2051 = vld [vmem:[#allocation2 + $0x198] sm:$0xff]
  %v2052 = vld [vmem:[#allocation2 + $0x1a0] sm:$0xff]
  %v2053 = vld [vmem:[#allocation2 + $0x1a8] sm:$0xff]
  %v2054 = vld [vmem:[#allocation2 + $0x1b0] sm:$0xff]
  %v2055 = vld [vmem:[#allocation2 + $0x1b8] sm:$0xff]
  %v2056 = vld [vmem:[#allocation2 + $0x1c0] sm:$0xff]
  %v2057 = vld [vmem:[#allocation2 + $0x1c8] sm:$0xff]
  %v2058 = vld [vmem:[#allocation2 + $0x1d0] sm:$0xff]
  %v2059 = vld [vmem:[#allocation2 + $0x1d8] sm:$0xff]
  %v2060 = vld [vmem:[#allocation2 + $0x1e0] sm:$0xff]
  %v2061 = vld [vmem:[#allocation2 + $0x1e8] sm:$0xff]
  %v2062 = vld [vmem:[#allocation2 + $0x1f0] sm:$0xff]
  %v2063 = vld [vmem:[#allocation2 + $0x1f8] sm:$0xff]
  %v2064 = vld [vmem:[#allocation2 + $0x200] sm:$0xff]
  %v2065 = vld [vmem:[#allocation2 + $0x208] sm:$0xff]
  %v2066 = vld [vmem:[#allocation2 + $0x210] sm:$0xff]
  %v2067 = vld [vmem:[#allocation2 + $0x218] sm:$0xff]
  %v2068 = vld [vmem:[#allocation2 + $0x220] sm:$0xff]
  %v2069 = vld [vmem:[#allocation2 + $0x228] sm:$0xff]
  %v2070 = vld [vmem:[#allocation2 + $0x230] sm:$0xff]
  %v2071 = vld [vmem:[#allocation2 + $0x238] sm:$0xff]
  %v2072 = vld [vmem:[#allocation2 + $0x240] sm:$0xff]
  %v2073 = vld [vmem:[#allocation2 + $0x248] sm:$0xff]
  %v2074 = vld [vmem:[#allocation2 + $0x250] sm:$0xff]
  %v2075 = vld [vmem:[#allocation2 + $0x258] sm:$0xff]
  %v2076 = vld [vmem:[#allocation2 + $0x260] sm:$0xff]
  %v2077 = vld [vmem:[#allocation2 + $0x268] sm:$0xff]
  %v2078 = vld [vmem:[#allocation2 + $0x270] sm:$0xff]
  %v2079 = vld [vmem:[#allocation2 + $0x278] sm:$0xff]
  %v2080 = vld [vmem:[#allocation2 + $0x280] sm:$0xff]
  %v2081 = vld [vmem:[#allocation2 + $0x288] sm:$0xff]
  %v2082 = vld [vmem:[#allocation2 + $0x290] sm:$0xff]
  %v2083 = vld [vmem:[#allocation2 + $0x298] sm:$0xff]
  %v2084 = vld [vmem:[#allocation2 + $0x2a0] sm:$0xff]
  %v2085 = vld [vmem:[#allocation2 + $0x2a8] sm:$0xff]
  %v2086 = vld [vmem:[#allocation2 + $0x2b0] sm:$0xff]
  %v2087 = vld [vmem:[#allocation2 + $0x2b8] sm:$0xff]
  %v2088 = vld [vmem:[#allocation2 + $0x2c0] sm:$0xff]
  %v2089 = vld [vmem:[#allocation2 + $0x2c8] sm:$0xff]
  %v2090 = vld [vmem:[#allocation2 + $0x2d0] sm:$0xff]
  %v2091 = vld [vmem:[#allocation2 + $0x2d8] sm:$0xff]
  %v2092 = vld [vmem:[#allocation2 + $0x2e0] sm:$0xff]
  %v2093 = vld [vmem:[#allocation2 + $0x2e8] sm:$0xff]
  %v2094 = vld [vmem:[#allocation2 + $0x2f0] sm:$0xff]
  %v2095 = vld [vmem:[#allocation2 + $0x2f8] sm:$0xff]
  %v2096 = vld [vmem:[#allocation2 + $0x300] sm:$0xff]
  %v2097 = vld [vmem:[#allocation2 + $0x308] sm:$0xff]
  %v2098 = vld [vmem:[#allocation2 + $0x310] sm:$0xff]
  %v2099 = vld [vmem:[#allocation2 + $0x318] sm:$0xff]
  %v2100 = vld [vmem:[#allocation2 + $0x320] sm:$0xff]
  %v2101 = vld [vmem:[#allocation2 + $0x328] sm:$0xff]
  %v2102 = vld [vmem:[#allocation2 + $0x330] sm:$0xff]
  %v2103 = vld [vmem:[#allocation2 + $0x338] sm:$0xff]
  %v2104 = vld [vmem:[#allocation2 + $0x340] sm:$0xff]
  %v2105 = vld [vmem:[#allocation2 + $0x348] sm:$0xff]
  %v2106 = vld [vmem:[#allocation2 + $0x350] sm:$0xff]
  %v2107 = vld [vmem:[#allocation2 + $0x358] sm:$0xff]
  %v2108 = vld [vmem:[#allocation2 + $0x360] sm:$0xff]
  %v2109 = vld [vmem:[#allocation2 + $0x368] sm:$0xff]
  %v2110 = vld [vmem:[#allocation2 + $0x370] sm:$0xff]
  %v2111 = vld [vmem:[#allocation2 + $0x378] sm:$0xff]
  %v2112 = vld [vmem:[#allocation2 + $0x380] sm:$0xff]
  %v2113 = vld [vmem:[#allocation2 + $0x388] sm:$0xff]
  %v2114 = vld [vmem:[#allocation2 + $0x390] sm:$0xff]
  %v2115 = vld [vmem:[#allocation2 + $0x398] sm:$0xff]
  %v2116 = vld [vmem:[#allocation2 + $0x3a0] sm:$0xff]
  %v2117 = vld [vmem:[#allocation2 + $0x3a8] sm:$0xff]
  %v2118 = vld [vmem:[#allocation2 + $0x3b0] sm:$0xff]
  %v2119 = vld [vmem:[#allocation2 + $0x3b8] sm:$0xff]
  %v2120 = vld [vmem:[#allocation2 + $0x3c0] sm:$0xff]
  %v2121 = vld [vmem:[#allocation2 + $0x3c8] sm:$0xff]
  %v2122 = vld [vmem:[#allocation2 + $0x3d0] sm:$0xff]
  %v2123 = vld [vmem:[#allocation2 + $0x3d8] sm:$0xff]
  %v2124 = vld [vmem:[#allocation2 + $0x3e0] sm:$0xff]
  %v2125 = vld [vmem:[#allocation2 + $0x3e8] sm:$0xff]
  %v2126 = vld [vmem:[#allocation2 + $0x3f0] sm:$0xff]
  %v2127 = vld [vmem:[#allocation2 + $0x3f8] sm:$0xff]
  %v2128 = vld [vmem:[#allocation2 + $0x400] sm:$0xff]
  %v2129 = vld [vmem:[#allocation2 + $0x408] sm:$0xff]
  %v2130 = vld [vmem:[#allocation2 + $0x410] sm:$0xff]
  %v2131 = vld [vmem:[#allocation2 + $0x418] sm:$0xff]
  %v2132 = vld [vmem:[#allocation2 + $0x420] sm:$0xff]
  %v2133 = vld [vmem:[#allocation2 + $0x428] sm:$0xff]
  %v2134 = vld [vmem:[#allocation2 + $0x430] sm:$0xff]
  %v2135 = vld [vmem:[#allocation2 + $0x438] sm:$0xff]
  %v2136 = vld [vmem:[#allocation2 + $0x440] sm:$0xff]
  %v2137 = vld [vmem:[#allocation2 + $0x448] sm:$0xff]
  %v2138 = vld [vmem:[#allocation2 + $0x450] sm:$0xff]
  %v2139 = vld [vmem:[#allocation2 + $0x458] sm:$0xff]
  %v2140 = vld [vmem:[#allocation2 + $0x460] sm:$0xff]
  %v2141 = vld [vmem:[#allocation2 + $0x468] sm:$0xff]
  %v2142 = vld [vmem:[#allocation2 + $0x470] sm:$0xff]
  %v2143 = vld [vmem:[#allocation2 + $0x478] sm:$0xff]
  %v2144 = vld [vmem:[#allocation2 + $0x480] sm:$0xff]
  %v2145 = vld [vmem:[#allocation2 + $0x488] sm:$0xff]
  %v2146 = vld [vmem:[#allocation2 + $0x490] sm:$0xff]
  %v2147 = vld [vmem:[#allocation2 + $0x498] sm:$0xff]
  %v2148 = vld [vmem:[#allocation2 + $0x4a0] sm:$0xf]
  %v2149 = vld [vmem:[#allocation2 + $0x4a8] sm:$0xf]
  %v2150 = vld [vmem:[#allocation2 + $0x4b0] sm:$0xf]
  %v2151 = vld [vmem:[#allocation2 + $0x4b8] sm:$0xf]
  %vm2152 = vcmask 359424
  %v2154 = vsel %vm2152, %v1996, 0
  %v2157 = vsel %vm2152, %v1999, 0
  %v2160 = vsel %vm468, %v2148, 0
  %v2163 = vsel %vm468, %v2149, 0
  %v2166 = vsel %vm468, %v2150, 0
  %v2169 = vsel %vm468, %v2151, 0
  %2171 = vmatpush.msra.mxu0 %v2060
  %2172 = vmatpush.msra.mxu0 %v2056
  %2173 = vmatpush.msra.mxu0 %v2052
  %2174 = vmatpush.msra.mxu0 %v2048
  %2175 = vmatpush.msra.mxu0 %v2044
  %2176 = vmatpush.msra.mxu0 %v2040
  %2177 = vmatpush.msra.mxu0 %v2036
  %2178 = vmatpush.msra.mxu0 %v2032
  %2179 = vmatpush.msra.mxu0 %v2028
  %2180 = vmatpush.msra.mxu0 %v2024
  %2181 = vmatpush.msra.mxu0 %v2020
  %2182 = vmatpush.msra.mxu0 %v2016
  %2183 = vmatpush.msra.mxu0 %v2012
  %2184 = vmatpush.msra.mxu0 %v2008
  %2185 = vmatpush.msra.mxu0 %v2004
  %2186 = vmatpush.msra.mxu0 %v2000
  %2187 = vmatmul.f32.gmra.mxu0 %v1994
  %v2188 = vpop.f32.mrf.mxu0
  %v2189 = vadd.f32 0.0, %v2188
  %2190 = vmatmul.f32.gmra.mxu0 %v1997
  %v2191 = vpop.f32.mrf.mxu0
  %v2192 = vadd.f32 0.0, %v2191
  %2193 = vdwg.mxu0
  %2194 = vmatpush.msra.mxu0 %v2124
  %2195 = vmatpush.msra.mxu0 %v2120
  %2196 = vmatpush.msra.mxu0 %v2116
  %2197 = vmatpush.msra.mxu0 %v2112
  %2198 = vmatpush.msra.mxu0 %v2108
  %2199 = vmatpush.msra.mxu0 %v2104
  %2200 = vmatpush.msra.mxu0 %v2100
  %2201 = vmatpush.msra.mxu0 %v2096
  %2202 = vmatpush.msra.mxu0 %v2092
  %2203 = vmatpush.msra.mxu0 %v2088
  %2204 = vmatpush.msra.mxu0 %v2084
  %2205 = vmatpush.msra.mxu0 %v2080
  %2206 = vmatpush.msra.mxu0 %v2076
  %2207 = vmatpush.msra.mxu0 %v2072
  %2208 = vmatpush.msra.mxu0 %v2068
  %2209 = vmatpush.msra.mxu0 %v2064
  %2210 = vmatmul.f32.gmra.mxu0 %v1995
  %v2211 = vpop.f32.mrf.mxu0
  %v2212 = vadd.f32 %v2189, %v2211
  %2213 = vmatmul.f32.gmra.mxu0 %v1998
  %v2214 = vpop.f32.mrf.mxu0
  %v2215 = vadd.f32 %v2192, %v2214
  %2216 = vdwg.mxu0
  %2217 = vmatpush.msra.mxu0 0.0
  %2218 = vmatpush.msra.mxu0 0.0
  %2219 = vmatpush.msra.mxu0 0.0
  %2220 = vmatpush.msra.mxu0 0.0
  %2221 = vmatpush.msra.mxu0 0.0
  %2222 = vmatpush.msra.mxu0 0.0
  %2223 = vmatpush.msra.mxu0 0.0
  %2224 = vmatpush.msra.mxu0 0.0
  %2225 = vmatpush.msra.mxu0 0.0
  %2226 = vmatpush.msra.mxu0 0.0
  %2227 = vmatpush.msra.mxu0 %v2160
  %2228 = vmatpush.msra.mxu0 %v2144
  %2229 = vmatpush.msra.mxu0 %v2140
  %2230 = vmatpush.msra.mxu0 %v2136
  %2231 = vmatpush.msra.mxu0 %v2132
  %2232 = vmatpush.msra.mxu0 %v2128
  %2233 = vmatmul.f32.gmra.mxu0 %v2154
  %v2234 = vpop.f32.mrf.mxu0
  %v2235 = vadd.f32 %v2212, %v2234
  %2236 = vmatmul.f32.gmra.mxu0 %v2157
  %v2237 = vpop.f32.mrf.mxu0
  %v2238 = vadd.f32 %v2215, %v2237
  %2239 = vdwg.mxu0
  %2240 = vmatpush.msra.mxu0 %v2061
  %2241 = vmatpush.msra.mxu0 %v2057
  %2242 = vmatpush.msra.mxu0 %v2053
  %2243 = vmatpush.msra.mxu0 %v2049
  %2244 = vmatpush.msra.mxu0 %v2045
  %2245 = vmatpush.msra.mxu0 %v2041
  %2246 = vmatpush.msra.mxu0 %v2037
  %2247 = vmatpush.msra.mxu0 %v2033
  %2248 = vmatpush.msra.mxu0 %v2029
  %2249 = vmatpush.msra.mxu0 %v2025
  %2250 = vmatpush.msra.mxu0 %v2021
  %2251 = vmatpush.msra.mxu0 %v2017
  %2252 = vmatpush.msra.mxu0 %v2013
  %2253 = vmatpush.msra.mxu0 %v2009
  %2254 = vmatpush.msra.mxu0 %v2005
  %2255 = vmatpush.msra.mxu0 %v2001
  %2256 = vmatmul.f32.gmra.mxu0 %v1994
  %v2257 = vpop.f32.mrf.mxu0
  %v2258 = vadd.f32 0.0, %v2257
  %2259 = vmatmul.f32.gmra.mxu0 %v1997
  %v2260 = vpop.f32.mrf.mxu0
  %v2261 = vadd.f32 0.0, %v2260
  %2262 = vdwg.mxu0
  %2263 = vmatpush.msra.mxu0 %v2125
  %2264 = vmatpush.msra.mxu0 %v2121
  %2265 = vmatpush.msra.mxu0 %v2117
  %2266 = vmatpush.msra.mxu0 %v2113
  %2267 = vmatpush.msra.mxu0 %v2109
  %2268 = vmatpush.msra.mxu0 %v2105
  %2269 = vmatpush.msra.mxu0 %v2101
  %2270 = vmatpush.msra.mxu0 %v2097
  %2271 = vmatpush.msra.mxu0 %v2093
  %2272 = vmatpush.msra.mxu0 %v2089
  %2273 = vmatpush.msra.mxu0 %v2085
  %2274 = vmatpush.msra.mxu0 %v2081
  %2275 = vmatpush.msra.mxu0 %v2077
  %2276 = vmatpush.msra.mxu0 %v2073
  %2277 = vmatpush.msra.mxu0 %v2069
  %2278 = vmatpush.msra.mxu0 %v2065
  %2279 = vmatmul.f32.gmra.mxu0 %v1995
  %v2280 = vpop.f32.mrf.mxu0
  %v2281 = vadd.f32 %v2258, %v2280
  %2282 = vmatmul.f32.gmra.mxu0 %v1998
  %v2283 = vpop.f32.mrf.mxu0
  %v2284 = vadd.f32 %v2261, %v2283
  %2285 = vdwg.mxu0
  %2286 = vmatpush.msra.mxu0 0.0
  %2287 = vmatpush.msra.mxu0 0.0
  %2288 = vmatpush.msra.mxu0 0.0
  %2289 = vmatpush.msra.mxu0 0.0
  %2290 = vmatpush.msra.mxu0 0.0
  %2291 = vmatpush.msra.mxu0 0.0
  %2292 = vmatpush.msra.mxu0 0.0
  %2293 = vmatpush.msra.mxu0 0.0
  %2294 = vmatpush.msra.mxu0 0.0
  %2295 = vmatpush.msra.mxu0 0.0
  %2296 = vmatpush.msra.mxu0 %v2163
  %2297 = vmatpush.msra.mxu0 %v2145
  %2298 = vmatpush.msra.mxu0 %v2141
  %2299 = vmatpush.msra.mxu0 %v2137
  %2300 = vmatpush.msra.mxu0 %v2133
  %2301 = vmatpush.msra.mxu0 %v2129
  %2302 = vmatmul.f32.gmra.mxu0 %v2154
  %v2303 = vpop.f32.mrf.mxu0
  %v2304 = vadd.f32 %v2281, %v2303
  %2305 = vmatmul.f32.gmra.mxu0 %v2157
  %v2306 = vpop.f32.mrf.mxu0
  %v2307 = vadd.f32 %v2284, %v2306
  %2308 = vdwg.mxu0
  %2309 = vmatpush.msra.mxu0 %v2062
  %2310 = vmatpush.msra.mxu0 %v2058
  %2311 = vmatpush.msra.mxu0 %v2054
  %2312 = vmatpush.msra.mxu0 %v2050
  %2313 = vmatpush.msra.mxu0 %v2046
  %2314 = vmatpush.msra.mxu0 %v2042
  %2315 = vmatpush.msra.mxu0 %v2038
  %2316 = vmatpush.msra.mxu0 %v2034
  %2317 = vmatpush.msra.mxu0 %v2030
  %2318 = vmatpush.msra.mxu0 %v2026
  %2319 = vmatpush.msra.mxu0 %v2022
  %2320 = vmatpush.msra.mxu0 %v2018
  %2321 = vmatpush.msra.mxu0 %v2014
  %2322 = vmatpush.msra.mxu0 %v2010
  %2323 = vmatpush.msra.mxu0 %v2006
  %2324 = vmatpush.msra.mxu0 %v2002
  %2325 = vmatmul.f32.gmra.mxu0 %v1994
  %v2326 = vpop.f32.mrf.mxu0
  %v2327 = vadd.f32 0.0, %v2326
  %2328 = vmatmul.f32.gmra.mxu0 %v1997
  %v2329 = vpop.f32.mrf.mxu0
  %v2330 = vadd.f32 0.0, %v2329
  %2331 = vdwg.mxu0
  %2332 = vmatpush.msra.mxu0 %v2126
  %2333 = vmatpush.msra.mxu0 %v2122
  %2334 = vmatpush.msra.mxu0 %v2118
  %2335 = vmatpush.msra.mxu0 %v2114
  %2336 = vmatpush.msra.mxu0 %v2110
  %2337 = vmatpush.msra.mxu0 %v2106
  %2338 = vmatpush.msra.mxu0 %v2102
  %2339 = vmatpush.msra.mxu0 %v2098
  %2340 = vmatpush.msra.mxu0 %v2094
  %2341 = vmatpush.msra.mxu0 %v2090
  %2342 = vmatpush.msra.mxu0 %v2086
  %2343 = vmatpush.msra.mxu0 %v2082
  %2344 = vmatpush.msra.mxu0 %v2078
  %2345 = vmatpush.msra.mxu0 %v2074
  %2346 = vmatpush.msra.mxu0 %v2070
  %2347 = vmatpush.msra.mxu0 %v2066
  %2348 = vmatmul.f32.gmra.mxu0 %v1995
  %v2349 = vpop.f32.mrf.mxu0
  %v2350 = vadd.f32 %v2327, %v2349
  %2351 = vmatmul.f32.gmra.mxu0 %v1998
  %v2352 = vpop.f32.mrf.mxu0
  %v2353 = vadd.f32 %v2330, %v2352
  %2354 = vdwg.mxu0
  %2355 = vmatpush.msra.mxu0 0.0
  %2356 = vmatpush.msra.mxu0 0.0
  %2357 = vmatpush.msra.mxu0 0.0
  %2358 = vmatpush.msra.mxu0 0.0
  %2359 = vmatpush.msra.mxu0 0.0
  %2360 = vmatpush.msra.mxu0 0.0
  %2361 = vmatpush.msra.mxu0 0.0
  %2362 = vmatpush.msra.mxu0 0.0
  %2363 = vmatpush.msra.mxu0 0.0
  %2364 = vmatpush.msra.mxu0 0.0
  %2365 = vmatpush.msra.mxu0 %v2166
  %2366 = vmatpush.msra.mxu0 %v2146
  %2367 = vmatpush.msra.mxu0 %v2142
  %2368 = vmatpush.msra.mxu0 %v2138
  %2369 = vmatpush.msra.mxu0 %v2134
  %2370 = vmatpush.msra.mxu0 %v2130
  %2371 = vmatmul.f32.gmra.mxu0 %v2154
  %v2372 = vpop.f32.mrf.mxu0
  %v2373 = vadd.f32 %v2350, %v2372
  %2374 = vmatmul.f32.gmra.mxu0 %v2157
  %v2375 = vpop.f32.mrf.mxu0
  %v2376 = vadd.f32 %v2353, %v2375
  %2377 = vdwg.mxu0
  %2378 = vmatpush.msra.mxu0 %v2063
  %2379 = vmatpush.msra.mxu0 %v2059
  %2380 = vmatpush.msra.mxu0 %v2055
  %2381 = vmatpush.msra.mxu0 %v2051
  %2382 = vmatpush.msra.mxu0 %v2047
  %2383 = vmatpush.msra.mxu0 %v2043
  %2384 = vmatpush.msra.mxu0 %v2039
  %2385 = vmatpush.msra.mxu0 %v2035
  %2386 = vmatpush.msra.mxu0 %v2031
  %2387 = vmatpush.msra.mxu0 %v2027
  %2388 = vmatpush.msra.mxu0 %v2023
  %2389 = vmatpush.msra.mxu0 %v2019
  %2390 = vmatpush.msra.mxu0 %v2015
  %2391 = vmatpush.msra.mxu0 %v2011
  %2392 = vmatpush.msra.mxu0 %v2007
  %2393 = vmatpush.msra.mxu0 %v2003
  %2394 = vmatmul.f32.gmra.mxu0 %v1994
  %v2395 = vpop.f32.mrf.mxu0
  %v2396 = vadd.f32 0.0, %v2395
  %2397 = vmatmul.f32.gmra.mxu0 %v1997
  %v2398 = vpop.f32.mrf.mxu0
  %v2399 = vadd.f32 0.0, %v2398
  %2400 = vdwg.mxu0
  %2401 = vmatpush.msra.mxu0 %v2127
  %2402 = vmatpush.msra.mxu0 %v2123
  %2403 = vmatpush.msra.mxu0 %v2119
  %2404 = vmatpush.msra.mxu0 %v2115
  %2405 = vmatpush.msra.mxu0 %v2111
  %2406 = vmatpush.msra.mxu0 %v2107
  %2407 = vmatpush.msra.mxu0 %v2103
  %2408 = vmatpush.msra.mxu0 %v2099
  %2409 = vmatpush.msra.mxu0 %v2095
  %2410 = vmatpush.msra.mxu0 %v2091
  %2411 = vmatpush.msra.mxu0 %v2087
  %2412 = vmatpush.msra.mxu0 %v2083
  %2413 = vmatpush.msra.mxu0 %v2079
  %2414 = vmatpush.msra.mxu0 %v2075
  %2415 = vmatpush.msra.mxu0 %v2071
  %2416 = vmatpush.msra.mxu0 %v2067
  %2417 = vmatmul.f32.gmra.mxu0 %v1995
  %v2418 = vpop.f32.mrf.mxu0
  %v2419 = vadd.f32 %v2396, %v2418
  %2420 = vmatmul.f32.gmra.mxu0 %v1998
  %v2421 = vpop.f32.mrf.mxu0
  %v2422 = vadd.f32 %v2399, %v2421
  %2423 = vdwg.mxu0
  %2424 = vmatpush.msra.mxu0 0.0
  %2425 = vmatpush.msra.mxu0 0.0
  %2426 = vmatpush.msra.mxu0 0.0
  %2427 = vmatpush.msra.mxu0 0.0
  %2428 = vmatpush.msra.mxu0 0.0
  %2429 = vmatpush.msra.mxu0 0.0
  %2430 = vmatpush.msra.mxu0 0.0
  %2431 = vmatpush.msra.mxu0 0.0
  %2432 = vmatpush.msra.mxu0 0.0
  %2433 = vmatpush.msra.mxu0 0.0
  %2434 = vmatpush.msra.mxu0 %v2169
  %2435 = vmatpush.msra.mxu0 %v2147
  %2436 = vmatpush.msra.mxu0 %v2143
  %2437 = vmatpush.msra.mxu0 %v2139
  %2438 = vmatpush.msra.mxu0 %v2135
  %2439 = vmatpush.msra.mxu0 %v2131
  %2440 = vmatmul.f32.gmra.mxu0 %v2154
  %v2441 = vpop.f32.mrf.mxu0
  %v2442 = vadd.f32 %v2419, %v2441
  %2443 = vmatmul.f32.gmra.mxu0 %v2157
  %v2444 = vpop.f32.mrf.mxu0
  %v2445 = vadd.f32 %v2422, %v2444
  %2446 = vdwg.mxu0
  %v2447 = vlaneseq
  %v2448 = vshrl.u32 %v2447, 7
  %v2449 = vadd.s32 %v2448, 8
  %v2450 = vadd.s32 %v2448, 16
  %v2451 = vadd.s32 %v2448, 24
  %v2452 = vadd.s32 %v2448, 32
  %v2453 = vadd.s32 %v2448, 40
  %v2454 = vadd.s32 %v2448, 48
  %v2455 = vadd.s32 %v2448, 56
  %v2456 = vadd.s32 %v2448, 64
  %v2457 = vadd.s32 %v2448, 72
  %v2458 = vadd.s32 %v2448, 80
  %v2459 = vadd.s32 %v2448, 88
  %v2460 = vadd.s32 %v2448, 96
  %v2461 = vadd.s32 %v2448, 104
  %v2462 = vadd.s32 %v2448, 112
  %v2463 = vadd.s32 %v2448, 120
  %v2464 = vadd.s32 %v2448, 128
  %v2465 = vadd.s32 %v2448, 136
  %v2466 = vadd.s32 %v2448, 144
  %v2467 = vadd.s32 %v2448, 152
  %v2468 = vadd.s32 %v2448, 160
  %v2469 = vadd.s32 %v2448, 168
  %v2470 = vadd.s32 %v2448, 176
  %v2471 = vadd.s32 %v2448, 184
  %v2472 = vadd.s32 %v2448, 192
  %v2473 = vadd.s32 %v2448, 200
  %v2474 = vadd.s32 %v2448, 208
  %v2475 = vadd.s32 %v2448, 216
  %v2476 = vadd.s32 %v2448, 224
  %v2477 = vadd.s32 %v2448, 232
  %v2478 = vadd.s32 %v2448, 240
  %v2479 = vadd.s32 %v2448, 248
  %v2480 = vadd.s32 %v2448, 256
  %v2481 = vadd.s32 %v2448, 264
  %v2482 = vadd.s32 %v2448, 272
  %v2483 = vadd.s32 %v2448, 280
  %v2484 = vadd.s32 %v2448, 288
  %v2485 = vadd.s32 %v2448, 296
  %v2486 = vadd.s32 %v2448, 304
  %v2487 = vadd.s32 %v2448, 312
  %v2488 = vadd.s32 %v2448, 320
  %v2489 = vadd.s32 %v2448, 328
  %v2490 = vadd.s32 %v2448, 336
  %v2491 = vadd.s32 %v2448, 344
  %v2492 = vadd.s32 %v2448, 352
  %v2493 = vadd.s32 %v2448, 360
  %v2494 = vadd.s32 %v2448, 368
  %v2495 = vadd.s32 %v2448, 376
  %v2496 = vadd.s32 %v2448, 384
  %v2497 = vadd.s32 %v2448, 392
  %v2498 = vadd.s32 %v2448, 400
  %v2499 = vadd.s32 %v2448, 408
  %v2500 = vadd.s32 %v2448, 416
  %v2501 = vadd.s32 %v2448, 424
  %v2502 = vadd.s32 %v2448, 432
  %v2503 = vadd.s32 %v2448, 440
  %v2504 = vadd.s32 %v2448, 448
  %v2505 = vadd.s32 %v2448, 456
  %v2506 = vadd.s32 %v2448, 464
  %v2507 = vadd.s32 %v2448, 472
  %v2508 = vadd.s32 %v2448, 480
  %v2509 = vadd.s32 %v2448, 488
  %v2510 = vadd.s32 %v2448, 496
  %v2511 = vadd.s32 %v2448, 504
  %v2512 = vmul.u32 %v42, 256
  %v2513 = vmul.u32 %v43, 2
  %v2514 = vmul.u32 %v2513, 16
  %v2515 = vadd.s32 %v2512, %v2514
  %v2516 = vmul.u32 %v44, 2
  %v2517 = vadd.s32 %v2515, %v2516
  %v2518 = vperm.slane %v2517, 0
  %vm2519 = vcmp.eq.s32.totalorder %v2448, %v2518
  %vm2520 = vcmp.eq.s32.totalorder %v2449, %v2518
  %vm2521 = vcmp.eq.s32.totalorder %v2450, %v2518
  %vm2522 = vcmp.eq.s32.totalorder %v2451, %v2518
  %vm2523 = vcmp.eq.s32.totalorder %v2452, %v2518
  %vm2524 = vcmp.eq.s32.totalorder %v2453, %v2518
  %vm2525 = vcmp.eq.s32.totalorder %v2454, %v2518
  %vm2526 = vcmp.eq.s32.totalorder %v2455, %v2518
  %vm2527 = vcmp.eq.s32.totalorder %v2456, %v2518
  %vm2528 = vcmp.eq.s32.totalorder %v2457, %v2518
  %vm2529 = vcmp.eq.s32.totalorder %v2458, %v2518
  %vm2530 = vcmp.eq.s32.totalorder %v2459, %v2518
  %vm2531 = vcmp.eq.s32.totalorder %v2460, %v2518
  %vm2532 = vcmp.eq.s32.totalorder %v2461, %v2518
  %vm2533 = vcmp.eq.s32.totalorder %v2462, %v2518
  %vm2534 = vcmp.eq.s32.totalorder %v2463, %v2518
  %vm2535 = vcmp.eq.s32.totalorder %v2464, %v2518
  %vm2536 = vcmp.eq.s32.totalorder %v2465, %v2518
  %vm2537 = vcmp.eq.s32.totalorder %v2466, %v2518
  %vm2538 = vcmp.eq.s32.totalorder %v2467, %v2518
  %vm2539 = vcmp.eq.s32.totalorder %v2468, %v2518
  %vm2540 = vcmp.eq.s32.totalorder %v2469, %v2518
  %vm2541 = vcmp.eq.s32.totalorder %v2470, %v2518
  %vm2542 = vcmp.eq.s32.totalorder %v2471, %v2518
  %vm2543 = vcmp.eq.s32.totalorder %v2472, %v2518
  %vm2544 = vcmp.eq.s32.totalorder %v2473, %v2518
  %vm2545 = vcmp.eq.s32.totalorder %v2474, %v2518
  %vm2546 = vcmp.eq.s32.totalorder %v2475, %v2518
  %vm2547 = vcmp.eq.s32.totalorder %v2476, %v2518
  %vm2548 = vcmp.eq.s32.totalorder %v2477, %v2518
  %vm2549 = vcmp.eq.s32.totalorder %v2478, %v2518
  %vm2550 = vcmp.eq.s32.totalorder %v2479, %v2518
  %vm2551 = vcmp.eq.s32.totalorder %v2480, %v2518
  %vm2552 = vcmp.eq.s32.totalorder %v2481, %v2518
  %vm2553 = vcmp.eq.s32.totalorder %v2482, %v2518
  %vm2554 = vcmp.eq.s32.totalorder %v2483, %v2518
  %vm2555 = vcmp.eq.s32.totalorder %v2484, %v2518
  %vm2556 = vcmp.eq.s32.totalorder %v2485, %v2518
  %vm2557 = vcmp.eq.s32.totalorder %v2486, %v2518
  %vm2558 = vcmp.eq.s32.totalorder %v2487, %v2518
  %vm2559 = vcmp.eq.s32.totalorder %v2488, %v2518
  %vm2560 = vcmp.eq.s32.totalorder %v2489, %v2518
  %vm2561 = vcmp.eq.s32.totalorder %v2490, %v2518
  %vm2562 = vcmp.eq.s32.totalorder %v2491, %v2518
  %vm2563 = vcmp.eq.s32.totalorder %v2492, %v2518
  %vm2564 = vcmp.eq.s32.totalorder %v2493, %v2518
  %vm2565 = vcmp.eq.s32.totalorder %v2494, %v2518
  %vm2566 = vcmp.eq.s32.totalorder %v2495, %v2518
  %vm2567 = vcmp.eq.s32.totalorder %v2496, %v2518
  %vm2568 = vcmp.eq.s32.totalorder %v2497, %v2518
  %vm2569 = vcmp.eq.s32.totalorder %v2498, %v2518
  %vm2570 = vcmp.eq.s32.totalorder %v2499, %v2518
  %vm2571 = vcmp.eq.s32.totalorder %v2500, %v2518
  %vm2572 = vcmp.eq.s32.totalorder %v2501, %v2518
  %vm2573 = vcmp.eq.s32.totalorder %v2502, %v2518
  %vm2574 = vcmp.eq.s32.totalorder %v2503, %v2518
  %vm2575 = vcmp.eq.s32.totalorder %v2504, %v2518
  %vm2576 = vcmp.eq.s32.totalorder %v2505, %v2518
  %vm2577 = vcmp.eq.s32.totalorder %v2506, %v2518
  %vm2578 = vcmp.eq.s32.totalorder %v2507, %v2518
  %vm2579 = vcmp.eq.s32.totalorder %v2508, %v2518
  %vm2580 = vcmp.eq.s32.totalorder %v2509, %v2518
  %vm2581 = vcmp.eq.s32.totalorder %v2510, %v2518
  %vm2582 = vcmp.eq.s32.totalorder %v2511, %v2518
  %v2583 = vsel %vm2519, 1.0, 0.0
  %v2584 = vsel %vm2520, 1.0, 0.0
  %v2585 = vsel %vm2521, 1.0, 0.0
  %v2586 = vsel %vm2522, 1.0, 0.0
  %v2587 = vsel %vm2523, 1.0, 0.0
  %v2588 = vsel %vm2524, 1.0, 0.0
  %v2589 = vsel %vm2525, 1.0, 0.0
  %v2590 = vsel %vm2526, 1.0, 0.0
  %v2591 = vsel %vm2527, 1.0, 0.0
  %v2592 = vsel %vm2528, 1.0, 0.0
  %v2593 = vsel %vm2529, 1.0, 0.0
  %v2594 = vsel %vm2530, 1.0, 0.0
  %v2595 = vsel %vm2531, 1.0, 0.0
  %v2596 = vsel %vm2532, 1.0, 0.0
  %v2597 = vsel %vm2533, 1.0, 0.0
  %v2598 = vsel %vm2534, 1.0, 0.0
  %v2599 = vsel %vm2535, 1.0, 0.0
  %v2600 = vsel %vm2536, 1.0, 0.0
  %v2601 = vsel %vm2537, 1.0, 0.0
  %v2602 = vsel %vm2538, 1.0, 0.0
  %v2603 = vsel %vm2539, 1.0, 0.0
  %v2604 = vsel %vm2540, 1.0, 0.0
  %v2605 = vsel %vm2541, 1.0, 0.0
  %v2606 = vsel %vm2542, 1.0, 0.0
  %v2607 = vsel %vm2543, 1.0, 0.0
  %v2608 = vsel %vm2544, 1.0, 0.0
  %v2609 = vsel %vm2545, 1.0, 0.0
  %v2610 = vsel %vm2546, 1.0, 0.0
  %v2611 = vsel %vm2547, 1.0, 0.0
  %v2612 = vsel %vm2548, 1.0, 0.0
  %v2613 = vsel %vm2549, 1.0, 0.0
  %v2614 = vsel %vm2550, 1.0, 0.0
  %v2615 = vsel %vm2551, 1.0, 0.0
  %v2616 = vsel %vm2552, 1.0, 0.0
  %v2617 = vsel %vm2553, 1.0, 0.0
  %v2618 = vsel %vm2554, 1.0, 0.0
  %v2619 = vsel %vm2555, 1.0, 0.0
  %v2620 = vsel %vm2556, 1.0, 0.0
  %v2621 = vsel %vm2557, 1.0, 0.0
  %v2622 = vsel %vm2558, 1.0, 0.0
  %v2623 = vsel %vm2559, 1.0, 0.0
  %v2624 = vsel %vm2560, 1.0, 0.0
  %v2625 = vsel %vm2561, 1.0, 0.0
  %v2626 = vsel %vm2562, 1.0, 0.0
  %v2627 = vsel %vm2563, 1.0, 0.0
  %v2628 = vsel %vm2564, 1.0, 0.0
  %v2629 = vsel %vm2565, 1.0, 0.0
  %v2630 = vsel %vm2566, 1.0, 0.0
  %v2631 = vsel %vm2567, 1.0, 0.0
  %v2632 = vsel %vm2568, 1.0, 0.0
  %v2633 = vsel %vm2569, 1.0, 0.0
  %v2634 = vsel %vm2570, 1.0, 0.0
  %v2635 = vsel %vm2571, 1.0, 0.0
  %v2636 = vsel %vm2572, 1.0, 0.0
  %v2637 = vsel %vm2573, 1.0, 0.0
  %v2638 = vsel %vm2574, 1.0, 0.0
  %v2639 = vsel %vm2575, 1.0, 0.0
  %v2640 = vsel %vm2576, 1.0, 0.0
  %v2641 = vsel %vm2577, 1.0, 0.0
  %v2642 = vsel %vm2578, 1.0, 0.0
  %v2643 = vsel %vm2579, 1.0, 0.0
  %v2644 = vsel %vm2580, 1.0, 0.0
  %v2645 = vsel %vm2581, 1.0, 0.0
  %v2646 = vsel %vm2582, 1.0, 0.0
  %v2647 = vld [vmem:[%s6] sm:$0xff]
  %v2648 = vld [vmem:[%s6 + $0x8] sm:$0xf]
  %2650 = vset.pattern.permute.xlu0 0
  %2651 = vperm.xlu0 %2650, %v2647
  %v2652 = vpop.permute.xlu0 %2651
  %2655 = vset.pattern.permute.xlu0 0
  %2656 = vperm.xlu0 %2655, %v2648
  %v2657 = vpop.permute.xlu0 %2656
  %2659 = vmatpush.msra.mxu0 %v2598
  %2660 = vmatpush.msra.mxu0 %v2597
  %2661 = vmatpush.msra.mxu0 %v2596
  %2662 = vmatpush.msra.mxu0 %v2595
  %2663 = vmatpush.msra.mxu0 %v2594
  %2664 = vmatpush.msra.mxu0 %v2593
  %2665 = vmatpush.msra.mxu0 %v2592
  %2666 = vmatpush.msra.mxu0 %v2591
  %2667 = vmatpush.msra.mxu0 %v2590
  %2668 = vmatpush.msra.mxu0 %v2589
  %2669 = vmatpush.msra.mxu0 %v2588
  %2670 = vmatpush.msra.mxu0 %v2587
  %2671 = vmatpush.msra.mxu0 %v2586
  %2672 = vmatpush.msra.mxu0 %v2585
  %2673 = vmatpush.msra.mxu0 %v2584
  %2674 = vmatpush.msra.mxu0 %v2583
  %2675 = vmatmul.f32.gmra.mxu0 %v2235
  %v2676 = vpop.f32.mrf.mxu0
  %v2677 = vadd.f32 %v2652, %v2676
  %2678 = vmatmul.f32.gmra.mxu0 %v2238
  %v2679 = vpop.f32.mrf.mxu0
  %v2680 = vadd.f32 %v2657, %v2679
  %2681 = vdwg.mxu0
  %2682 = vmatpush.msra.mxu0 %v2614
  %2683 = vmatpush.msra.mxu0 %v2613
  %2684 = vmatpush.msra.mxu0 %v2612
  %2685 = vmatpush.msra.mxu0 %v2611
  %2686 = vmatpush.msra.mxu0 %v2610
  %2687 = vmatpush.msra.mxu0 %v2609
  %2688 = vmatpush.msra.mxu0 %v2608
  %2689 = vmatpush.msra.mxu0 %v2607
  %2690 = vmatpush.msra.mxu0 %v2606
  %2691 = vmatpush.msra.mxu0 %v2605
  %2692 = vmatpush.msra.mxu0 %v2604
  %2693 = vmatpush.msra.mxu0 %v2603
  %2694 = vmatpush.msra.mxu0 %v2602
  %2695 = vmatpush.msra.mxu0 %v2601
  %2696 = vmatpush.msra.mxu0 %v2600
  %2697 = vmatpush.msra.mxu0 %v2599
  %2698 = vmatmul.f32.gmra.mxu0 %v2304
  %v2699 = vpop.f32.mrf.mxu0
  %v2700 = vadd.f32 %v2677, %v2699
  %2701 = vmatmul.f32.gmra.mxu0 %v2307
  %v2702 = vpop.f32.mrf.mxu0
  %v2703 = vadd.f32 %v2680, %v2702
  %2704 = vdwg.mxu0
  %2705 = vmatpush.msra.mxu0 %v2630
  %2706 = vmatpush.msra.mxu0 %v2629
  %2707 = vmatpush.msra.mxu0 %v2628
  %2708 = vmatpush.msra.mxu0 %v2627
  %2709 = vmatpush.msra.mxu0 %v2626
  %2710 = vmatpush.msra.mxu0 %v2625
  %2711 = vmatpush.msra.mxu0 %v2624
  %2712 = vmatpush.msra.mxu0 %v2623
  %2713 = vmatpush.msra.mxu0 %v2622
  %2714 = vmatpush.msra.mxu0 %v2621
  %2715 = vmatpush.msra.mxu0 %v2620
  %2716 = vmatpush.msra.mxu0 %v2619
  %2717 = vmatpush.msra.mxu0 %v2618
  %2718 = vmatpush.msra.mxu0 %v2617
  %2719 = vmatpush.msra.mxu0 %v2616
  %2720 = vmatpush.msra.mxu0 %v2615
  %2721 = vmatmul.f32.gmra.mxu0 %v2373
  %v2722 = vpop.f32.mrf.mxu0
  %v2723 = vadd.f32 %v2700, %v2722
  %2724 = vmatmul.f32.gmra.mxu0 %v2376
  %v2725 = vpop.f32.mrf.mxu0
  %v2726 = vadd.f32 %v2703, %v2725
  %2727 = vdwg.mxu0
  %2728 = vmatpush.msra.mxu0 %v2646
  %2729 = vmatpush.msra.mxu0 %v2645
  %2730 = vmatpush.msra.mxu0 %v2644
  %2731 = vmatpush.msra.mxu0 %v2643
  %2732 = vmatpush.msra.mxu0 %v2642
  %2733 = vmatpush.msra.mxu0 %v2641
  %2734 = vmatpush.msra.mxu0 %v2640
  %2735 = vmatpush.msra.mxu0 %v2639
  %2736 = vmatpush.msra.mxu0 %v2638
  %2737 = vmatpush.msra.mxu0 %v2637
  %2738 = vmatpush.msra.mxu0 %v2636
  %2739 = vmatpush.msra.mxu0 %v2635
  %2740 = vmatpush.msra.mxu0 %v2634
  %2741 = vmatpush.msra.mxu0 %v2633
  %2742 = vmatpush.msra.mxu0 %v2632
  %2743 = vmatpush.msra.mxu0 %v2631
  %2744 = vmatmul.f32.gmra.mxu0 %v2442
  %v2745 = vpop.f32.mrf.mxu0
  %v2746 = vadd.f32 %v2723, %v2745
  %2747 = vmatmul.f32.gmra.mxu0 %v2445
  %v2748 = vpop.f32.mrf.mxu0
  %v2749 = vadd.f32 %v2726, %v2748
  %2750 = vdwg.mxu0
  %v2751 = vsub.f32 0.0, %v2746
  %v2752 = vsub.f32 0.0, %v2749
  %v2753 = vmul.f32 %v2751, 1.442695
  %v2754 = vpow.pop %v2753
  %v2755 = vmul.f32 %v2752, 1.442695
  %v2756 = vpow.pop %v2755
  %v2757 = vadd.f32 %v2754, 1.0
  %v2758 = vadd.f32 %v2756, 1.0
  %v2759 = vrcp.pop %v2757
  %v2760 = vmul.f32 %v2757, %v2759
  %v2761 = vsub.f32 1.0, %v2760
  %v2762 = vmul.f32 %v2759, %v2761
  %v2763 = vadd.f32 %v2759, %v2762
  %vm2764 = vweird.f32 %v2757
  %vm2765 = vweird.f32 %v2759
  %vm2766 = vmor %vm2764, %vm2765
  %v2767 = vsel %vm2766, %v2759, %v2763
  %v2768 = vand.u32 2147483647, %v2757
  %vm2769 = vcmp.eq.f32.partialorder %v2768, 8.507059e+37
  %v2770 = vand.u32 %v2757, 2147483648
  %v2771 = vor.u32 1.1754944e-38, %v2770
  %v2772 = vsel %vm2769, %v2771, %v2767
  %v2773 = vrcp.pop %v2758
  %v2774 = vmul.f32 %v2758, %v2773
  %v2775 = vsub.f32 1.0, %v2774
  %v2776 = vmul.f32 %v2773, %v2775
  %v2777 = vadd.f32 %v2773, %v2776
  %vm2778 = vweird.f32 %v2758
  %vm2779 = vweird.f32 %v2773
  %vm2780 = vmor %vm2778, %vm2779
  %v2781 = vsel %vm2780, %v2773, %v2777
  %v2782 = vand.u32 2147483647, %v2758
  %vm2783 = vcmp.eq.f32.partialorder %v2782, 8.507059e+37
  %v2784 = vand.u32 %v2758, 2147483648
  %v2785 = vor.u32 1.1754944e-38, %v2784
  %v2786 = vsel %vm2783, %v2785, %v2781
  %2787 = vrot.lane.b32.xlu0 %v2772, 18
  %v2788 = vpop.permute.xlu0 %2787
  %2789 = vrot.lane.b32.xlu0 %v2786, 18
  %v2790 = vpop.permute.xlu0 %2789
  %vm2791 = vcmp.ge.s32.totalorder %v43, 2
  %vm2792 = vcmp.lt.s32.totalorder %v43, 10
  %vm2793 = vmand %vm2791, %vm2792
  %vm2794 = vcmp.ge.s32.totalorder %v44, 2
  %vm2795 = vmand %vm2793, %vm2794
  %vm2796 = vcmp.lt.s32.totalorder %v44, 10
  %vm2797 = vmand %vm2795, %vm2796
  %v2798 = vsel %vm2797, 1, 0
  %v2799 = vperm.slane %v2798, 0
  %vm2800 = vcmp.eq.s32.totalorder %v2799, 1
  %v2801 = vsel %vm2800, %v2788, 0.0
  %v2802 = vsel %vm2800, %v2790, 0.0
  %2803 = vst [vmem:[#allocation3] sm:$0xff] %v2801
  %2804 = vst [vmem:[#allocation3 + $0x8] sm:$0xf] %v2802
  %2805 = vrot.lane.b32.xlu0 %v2772, 17
  %v2806 = vpop.permute.xlu0 %2805
  %2807 = vrot.lane.b32.xlu0 %v2786, 17
  %v2808 = vpop.permute.xlu0 %2807
  %vm2809 = vcmp.ge.s32.totalorder %v44, 1
  %vm2810 = vmand %vm2793, %vm2809
  %vm2811 = vcmp.lt.s32.totalorder %v44, 9
  %vm2812 = vmand %vm2810, %vm2811
  %v2813 = vsel %vm2812, 1, 0
  %v2814 = vperm.slane %v2813, 0
  %vm2815 = vcmp.eq.s32.totalorder %v2814, 1
  %v2816 = vsel %vm2815, %v2806, 0.0
  %v2817 = vsel %vm2815, %v2808, 0.0
  %2818 = vst [vmem:[#allocation3 + $0xc] sm:$0xff] %v2816
  %2819 = vst [vmem:[#allocation3 + $0x14] sm:$0xf] %v2817
  %2820 = vrot.lane.b32.xlu0 %v2772, 16
  %v2821 = vpop.permute.xlu0 %2820
  %2822 = vrot.lane.b32.xlu0 %v2786, 16
  %v2823 = vpop.permute.xlu0 %2822
  %vm2824 = vcmp.ge.s32.totalorder %v44, 0
  %vm2825 = vmand %vm2793, %vm2824
  %vm2826 = vcmp.lt.s32.totalorder %v44, 8
  %vm2827 = vmand %vm2825, %vm2826
  %v2828 = vsel %vm2827, 1, 0
  %v2829 = vperm.slane %v2828, 0
  %vm2830 = vcmp.eq.s32.totalorder %v2829, 1
  %v2831 = vsel %vm2830, %v2821, 0.0
  %v2832 = vsel %vm2830, %v2823, 0.0
  %2833 = vst [vmem:[#allocation3 + $0x18] sm:$0xff] %v2831
  %2834 = vst [vmem:[#allocation3 + $0x20] sm:$0xf] %v2832
  %2835 = vrot.lane.b32.xlu0 %v2772, 15
  %v2836 = vpop.permute.xlu0 %2835
  %2837 = vrot.lane.b32.xlu0 %v2786, 15
  %v2838 = vpop.permute.xlu0 %2837
  %vm2839 = vcmp.ge.s32.totalorder %v44, 4294967295
  %vm2840 = vmand %vm2793, %vm2839
  %vm2841 = vcmp.lt.s32.totalorder %v44, 7
  %vm2842 = vmand %vm2840, %vm2841
  %v2843 = vsel %vm2842, 1, 0
  %v2844 = vperm.slane %v2843, 0
  %vm2845 = vcmp.eq.s32.totalorder %v2844, 1
  %v2846 = vsel %vm2845, %v2836, 0.0
  %v2847 = vsel %vm2845, %v2838, 0.0
  %2848 = vst [vmem:[#allocation3 + $0x24] sm:$0xff] %v2846
  %2849 = vst [vmem:[#allocation3 + $0x2c] sm:$0xf] %v2847
  %2850 = vrot.lane.b32.xlu0 %v2772, 14
  %v2851 = vpop.permute.xlu0 %2850
  %2852 = vrot.lane.b32.xlu0 %v2786, 14
  %v2853 = vpop.permute.xlu0 %2852
  %vm2854 = vcmp.ge.s32.totalorder %v44, 4294967294
  %vm2855 = vmand %vm2793, %vm2854
  %vm2856 = vcmp.lt.s32.totalorder %v44, 6
  %vm2857 = vmand %vm2855, %vm2856
  %v2858 = vsel %vm2857, 1, 0
  %v2859 = vperm.slane %v2858, 0
  %vm2860 = vcmp.eq.s32.totalorder %v2859, 1
  %v2861 = vsel %vm2860, %v2851, 0.0
  %v2862 = vsel %vm2860, %v2853, 0.0
  %2863 = vst [vmem:[#allocation3 + $0x30] sm:$0xff] %v2861
  %2864 = vst [vmem:[#allocation3 + $0x38] sm:$0xf] %v2862
  %2865 = vrot.lane.b32.xlu0 %v2772, 10
  %v2866 = vpop.permute.xlu0 %2865
  %2867 = vrot.lane.b32.xlu0 %v2786, 10
  %v2868 = vpop.permute.xlu0 %2867
  %vm2869 = vcmp.ge.s32.totalorder %v43, 1
  %vm2870 = vcmp.lt.s32.totalorder %v43, 9
  %vm2871 = vmand %vm2869, %vm2870
  %vm2872 = vmand %vm2871, %vm2794
  %vm2873 = vmand %vm2872, %vm2796
  %v2874 = vsel %vm2873, 1, 0
  %v2875 = vperm.slane %v2874, 0
  %vm2876 = vcmp.eq.s32.totalorder %v2875, 1
  %v2877 = vsel %vm2876, %v2866, 0.0
  %v2878 = vsel %vm2876, %v2868, 0.0
  %2879 = vst [vmem:[#allocation3 + $0x3c] sm:$0xff] %v2877
  %2880 = vst [vmem:[#allocation3 + $0x44] sm:$0xf] %v2878
  %2881 = vrot.lane.b32.xlu0 %v2772, 9
  %v2882 = vpop.permute.xlu0 %2881
  %2883 = vrot.lane.b32.xlu0 %v2786, 9
  %v2884 = vpop.permute.xlu0 %2883
  %vm2885 = vmand %vm2871, %vm2809
  %vm2886 = vmand %vm2885, %vm2811
  %v2887 = vsel %vm2886, 1, 0
  %v2888 = vperm.slane %v2887, 0
  %vm2889 = vcmp.eq.s32.totalorder %v2888, 1
  %v2890 = vsel %vm2889, %v2882, 0.0
  %v2891 = vsel %vm2889, %v2884, 0.0
  %2892 = vst [vmem:[#allocation3 + $0x48] sm:$0xff] %v2890
  %2893 = vst [vmem:[#allocation3 + $0x50] sm:$0xf] %v2891
  %2894 = vrot.lane.b32.xlu0 %v2772, 8
  %v2895 = vpop.permute.xlu0 %2894
  %2896 = vrot.lane.b32.xlu0 %v2786, 8
  %v2897 = vpop.permute.xlu0 %2896
  %vm2898 = vmand %vm2871, %vm2824
  %vm2899 = vmand %vm2898, %vm2826
  %v2900 = vsel %vm2899, 1, 0
  %v2901 = vperm.slane %v2900, 0
  %vm2902 = vcmp.eq.s32.totalorder %v2901, 1
  %v2903 = vsel %vm2902, %v2895, 0.0
  %v2904 = vsel %vm2902, %v2897, 0.0
  %2905 = vst [vmem:[#allocation3 + $0x54] sm:$0xff] %v2903
  %2906 = vst [vmem:[#allocation3 + $0x5c] sm:$0xf] %v2904
  %2907 = vrot.lane.b32.xlu0 %v2772, 7
  %v2908 = vpop.permute.xlu0 %2907
  %2909 = vrot.lane.b32.xlu0 %v2786, 7
  %v2910 = vpop.permute.xlu0 %2909
  %vm2911 = vmand %vm2871, %vm2839
  %vm2912 = vmand %vm2911, %vm2841
  %v2913 = vsel %vm2912, 1, 0
  %v2914 = vperm.slane %v2913, 0
  %vm2915 = vcmp.eq.s32.totalorder %v2914, 1
  %v2916 = vsel %vm2915, %v2908, 0.0
  %v2917 = vsel %vm2915, %v2910, 0.0
  %2918 = vst [vmem:[#allocation3 + $0x60] sm:$0xff] %v2916
  %2919 = vst [vmem:[#allocation3 + $0x68] sm:$0xf] %v2917
  %2920 = vrot.lane.b32.xlu0 %v2772, 6
  %v2921 = vpop.permute.xlu0 %2920
  %2922 = vrot.lane.b32.xlu0 %v2786, 6
  %v2923 = vpop.permute.xlu0 %2922
  %vm2924 = vmand %vm2871, %vm2854
  %vm2925 = vmand %vm2924, %vm2856
  %v2926 = vsel %vm2925, 1, 0
  %v2927 = vperm.slane %v2926, 0
  %vm2928 = vcmp.eq.s32.totalorder %v2927, 1
  %v2929 = vsel %vm2928, %v2921, 0.0
  %v2930 = vsel %vm2928, %v2923, 0.0
  %2931 = vst [vmem:[#allocation3 + $0x6c] sm:$0xff] %v2929
  %2932 = vst [vmem:[#allocation3 + $0x74] sm:$0xf] %v2930
  %2933 = vrot.lane.b32.xlu0 %v2772, 2
  %v2934 = vpop.permute.xlu0 %2933
  %2935 = vrot.lane.b32.xlu0 %v2786, 2
  %v2936 = vpop.permute.xlu0 %2935
  %vm2937 = vcmp.ge.s32.totalorder %v43, 0
  %vm2938 = vcmp.lt.s32.totalorder %v43, 8
  %vm2939 = vmand %vm2937, %vm2938
  %vm2940 = vmand %vm2939, %vm2794
  %vm2941 = vmand %vm2940, %vm2796
  %v2942 = vsel %vm2941, 1, 0
  %v2943 = vperm.slane %v2942, 0
  %vm2944 = vcmp.eq.s32.totalorder %v2943, 1
  %v2945 = vsel %vm2944, %v2934, 0.0
  %v2946 = vsel %vm2944, %v2936, 0.0
  %2947 = vst [vmem:[#allocation3 + $0x78] sm:$0xff] %v2945
  %2948 = vst [vmem:[#allocation3 + $0x80] sm:$0xf] %v2946
  %2949 = vrot.lane.b32.xlu0 %v2772, 1
  %v2950 = vpop.permute.xlu0 %2949
  %2951 = vrot.lane.b32.xlu0 %v2786, 1
  %v2952 = vpop.permute.xlu0 %2951
  %vm2953 = vmand %vm2939, %vm2809
  %vm2954 = vmand %vm2953, %vm2811
  %v2955 = vsel %vm2954, 1, 0
  %v2956 = vperm.slane %v2955, 0
  %vm2957 = vcmp.eq.s32.totalorder %v2956, 1
  %v2958 = vsel %vm2957, %v2950, 0.0
  %v2959 = vsel %vm2957, %v2952, 0.0
  %2960 = vst [vmem:[#allocation3 + $0x84] sm:$0xff] %v2958
  %2961 = vst [vmem:[#allocation3 + $0x8c] sm:$0xf] %v2959
  %vm2962 = vmand %vm2939, %vm2824
  %vm2963 = vmand %vm2962, %vm2826
  %v2964 = vsel %vm2963, 1, 0
  %v2965 = vperm.slane %v2964, 0
  %vm2966 = vcmp.eq.s32.totalorder %v2965, 1
  %v2967 = vsel %vm2966, %v2772, 0.0
  %v2968 = vsel %vm2966, %v2786, 0.0
  %2969 = vst [vmem:[#allocation3 + $0x90] sm:$0xff] %v2967
  %2970 = vst [vmem:[#allocation3 + $0x98] sm:$0xf] %v2968
  %2971 = vrot.lane.b32.xlu0 %v2772, 127
  %v2972 = vpop.permute.xlu0 %2971
  %2973 = vrot.lane.b32.xlu0 %v2786, 127
  %v2974 = vpop.permute.xlu0 %2973
  %vm2975 = vmand %vm2939, %vm2839
  %vm2976 = vmand %vm2975, %vm2841
  %v2977 = vsel %vm2976, 1, 0
  %v2978 = vperm.slane %v2977, 0
  %vm2979 = vcmp.eq.s32.totalorder %v2978, 1
  %v2980 = vsel %vm2979, %v2972, 0.0
  %v2981 = vsel %vm2979, %v2974, 0.0
  %2982 = vst [vmem:[#allocation3 + $0x9c] sm:$0xff] %v2980
  %2983 = vst [vmem:[#allocation3 + $0xa4] sm:$0xf] %v2981
  %2984 = vrot.lane.b32.xlu0 %v2772, 126
  %v2985 = vpop.permute.xlu0 %2984
  %2986 = vrot.lane.b32.xlu0 %v2786, 126
  %v2987 = vpop.permute.xlu0 %2986
  %vm2988 = vmand %vm2939, %vm2854
  %vm2989 = vmand %vm2988, %vm2856
  %v2990 = vsel %vm2989, 1, 0
  %v2991 = vperm.slane %v2990, 0
  %vm2992 = vcmp.eq.s32.totalorder %v2991, 1
  %v2993 = vsel %vm2992, %v2985, 0.0
  %v2994 = vsel %vm2992, %v2987, 0.0
  %2995 = vst [vmem:[#allocation3 + $0xa8] sm:$0xff] %v2993
  %2996 = vst [vmem:[#allocation3 + $0xb0] sm:$0xf] %v2994
  %2997 = vrot.lane.b32.xlu0 %v2772, 122
  %v2998 = vpop.permute.xlu0 %2997
  %2999 = vrot.lane.b32.xlu0 %v2786, 122
  %v3000 = vpop.permute.xlu0 %2999
  %vm3001 = vcmp.ge.s32.totalorder %v43, 4294967295
  %vm3002 = vcmp.lt.s32.totalorder %v43, 7
  %vm3003 = vmand %vm3001, %vm3002
  %vm3004 = vmand %vm3003, %vm2794
  %vm3005 = vmand %vm3004, %vm2796
  %v3006 = vsel %vm3005, 1, 0
  %v3007 = vperm.slane %v3006, 0
  %vm3008 = vcmp.eq.s32.totalorder %v3007, 1
  %v3009 = vsel %vm3008, %v2998, 0.0
  %v3010 = vsel %vm3008, %v3000, 0.0
  %3011 = vst [vmem:[#allocation3 + $0xb4] sm:$0xff] %v3009
  %3012 = vst [vmem:[#allocation3 + $0xbc] sm:$0xf] %v3010
  %3013 = vrot.lane.b32.xlu0 %v2772, 121
  %v3014 = vpop.permute.xlu0 %3013
  %3015 = vrot.lane.b32.xlu0 %v2786, 121
  %v3016 = vpop.permute.xlu0 %3015
  %vm3017 = vmand %vm3003, %vm2809
  %vm3018 = vmand %vm3017, %vm2811
  %v3019 = vsel %vm3018, 1, 0
  %v3020 = vperm.slane %v3019, 0
  %vm3021 = vcmp.eq.s32.totalorder %v3020, 1
  %v3022 = vsel %vm3021, %v3014, 0.0
  %v3023 = vsel %vm3021, %v3016, 0.0
  %3024 = vst [vmem:[#allocation3 + $0xc0] sm:$0xff] %v3022
  %3025 = vst [vmem:[#allocation3 + $0xc8] sm:$0xf] %v3023
  %3026 = vrot.lane.b32.xlu0 %v2772, 120
  %v3027 = vpop.permute.xlu0 %3026
  %3028 = vrot.lane.b32.xlu0 %v2786, 120
  %v3029 = vpop.permute.xlu0 %3028
  %vm3030 = vmand %vm3003, %vm2824
  %vm3031 = vmand %vm3030, %vm2826
  %v3032 = vsel %vm3031, 1, 0
  %v3033 = vperm.slane %v3032, 0
  %vm3034 = vcmp.eq.s32.totalorder %v3033, 1
  %v3035 = vsel %vm3034, %v3027, 0.0
  %v3036 = vsel %vm3034, %v3029, 0.0
  %3037 = vst [vmem:[#allocation3 + $0xcc] sm:$0xff] %v3035
  %3038 = vst [vmem:[#allocation3 + $0xd4] sm:$0xf] %v3036
  %3039 = vrot.lane.b32.xlu0 %v2772, 119
  %v3040 = vpop.permute.xlu0 %3039
  %3041 = vrot.lane.b32.xlu0 %v2786, 119
  %v3042 = vpop.permute.xlu0 %3041
  %vm3043 = vmand %vm3003, %vm2839
  %vm3044 = vmand %vm3043, %vm2841
  %v3045 = vsel %vm3044, 1, 0
  %v3046 = vperm.slane %v3045, 0
  %vm3047 = vcmp.eq.s32.totalorder %v3046, 1
  %v3048 = vsel %vm3047, %v3040, 0.0
  %v3049 = vsel %vm3047, %v3042, 0.0
  %3050 = vst [vmem:[#allocation3 + $0xd8] sm:$0xff] %v3048
  %3051 = vst [vmem:[#allocation3 + $0xe0] sm:$0xf] %v3049
  %3052 = vrot.lane.b32.xlu0 %v2772, 118
  %v3053 = vpop.permute.xlu0 %3052
  %3054 = vrot.lane.b32.xlu0 %v2786, 118
  %v3055 = vpop.permute.xlu0 %3054
  %vm3056 = vmand %vm3003, %vm2854
  %vm3057 = vmand %vm3056, %vm2856
  %v3058 = vsel %vm3057, 1, 0
  %v3059 = vperm.slane %v3058, 0
  %vm3060 = vcmp.eq.s32.totalorder %v3059, 1
  %v3061 = vsel %vm3060, %v3053, 0.0
  %v3062 = vsel %vm3060, %v3055, 0.0
  %3063 = vst [vmem:[#allocation3 + $0xe4] sm:$0xff] %v3061
  %3064 = vst [vmem:[#allocation3 + $0xec] sm:$0xf] %v3062
  %3065 = vrot.lane.b32.xlu0 %v2772, 114
  %v3066 = vpop.permute.xlu0 %3065
  %3067 = vrot.lane.b32.xlu0 %v2786, 114
  %v3068 = vpop.permute.xlu0 %3067
  %vm3069 = vcmp.ge.s32.totalorder %v43, 4294967294
  %vm3070 = vcmp.lt.s32.totalorder %v43, 6
  %vm3071 = vmand %vm3069, %vm3070
  %vm3072 = vmand %vm3071, %vm2794
  %vm3073 = vmand %vm3072, %vm2796
  %v3074 = vsel %vm3073, 1, 0
  %v3075 = vperm.slane %v3074, 0
  %vm3076 = vcmp.eq.s32.totalorder %v3075, 1
  %v3077 = vsel %vm3076, %v3066, 0.0
  %v3078 = vsel %vm3076, %v3068, 0.0
  %3079 = vst [vmem:[#allocation3 + $0xf0] sm:$0xff] %v3077
  %3080 = vst [vmem:[#allocation3 + $0xf8] sm:$0xf] %v3078
  %3081 = vrot.lane.b32.xlu0 %v2772, 113
  %v3082 = vpop.permute.xlu0 %3081
  %3083 = vrot.lane.b32.xlu0 %v2786, 113
  %v3084 = vpop.permute.xlu0 %3083
  %vm3085 = vmand %vm3071, %vm2809
  %vm3086 = vmand %vm3085, %vm2811
  %v3087 = vsel %vm3086, 1, 0
  %v3088 = vperm.slane %v3087, 0
  %vm3089 = vcmp.eq.s32.totalorder %v3088, 1
  %v3090 = vsel %vm3089, %v3082, 0.0
  %v3091 = vsel %vm3089, %v3084, 0.0
  %3092 = vst [vmem:[#allocation3 + $0xfc] sm:$0xff] %v3090
  %3093 = vst [vmem:[#allocation3 + $0x104] sm:$0xf] %v3091
  %3094 = vrot.lane.b32.xlu0 %v2772, 112
  %v3095 = vpop.permute.xlu0 %3094
  %3096 = vrot.lane.b32.xlu0 %v2786, 112
  %v3097 = vpop.permute.xlu0 %3096
  %vm3098 = vmand %vm3071, %vm2824
  %vm3099 = vmand %vm3098, %vm2826
  %v3100 = vsel %vm3099, 1, 0
  %v3101 = vperm.slane %v3100, 0
  %vm3102 = vcmp.eq.s32.totalorder %v3101, 1
  %v3103 = vsel %vm3102, %v3095, 0.0
  %v3104 = vsel %vm3102, %v3097, 0.0
  %3105 = vst [vmem:[#allocation3 + $0x108] sm:$0xff] %v3103
  %3106 = vst [vmem:[#allocation3 + $0x110] sm:$0xf] %v3104
  %3107 = vrot.lane.b32.xlu0 %v2772, 111
  %v3108 = vpop.permute.xlu0 %3107
  %3109 = vrot.lane.b32.xlu0 %v2786, 111
  %v3110 = vpop.permute.xlu0 %3109
  %vm3111 = vmand %vm3071, %vm2839
  %vm3112 = vmand %vm3111, %vm2841
  %v3113 = vsel %vm3112, 1, 0
  %v3114 = vperm.slane %v3113, 0
  %vm3115 = vcmp.eq.s32.totalorder %v3114, 1
  %v3116 = vsel %vm3115, %v3108, 0.0
  %v3117 = vsel %vm3115, %v3110, 0.0
  %3118 = vst [vmem:[#allocation3 + $0x114] sm:$0xff] %v3116
  %3119 = vst [vmem:[#allocation3 + $0x11c] sm:$0xf] %v3117
  %3120 = vrot.lane.b32.xlu0 %v2772, 110
  %v3121 = vpop.permute.xlu0 %3120
  %3122 = vrot.lane.b32.xlu0 %v2786, 110
  %v3123 = vpop.permute.xlu0 %3122
  %vm3124 = vmand %vm3071, %vm2854
  %vm3125 = vmand %vm3124, %vm2856
  %v3126 = vsel %vm3125, 1, 0
  %v3127 = vperm.slane %v3126, 0
  %vm3128 = vcmp.eq.s32.totalorder %v3127, 1
  %v3129 = vsel %vm3128, %v3121, 0.0
  %v3130 = vsel %vm3128, %v3123, 0.0
  %3131 = vst [vmem:[#allocation3 + $0x120] sm:$0xff] %v3129
  %3132 = vst [vmem:[#allocation3 + $0x128] sm:$0xf] %v3130
  %v3133 = vld [vmem:[%s7] sm:$0xff]
  %v3134 = vld [vmem:[%s7 + $0x8] sm:$0xff]
  %v3135 = vld [vmem:[%s7 + $0x10] sm:$0xff]
  %v3136 = vld [vmem:[%s7 + $0x18] sm:$0xf]
  %v3137 = vld [vmem:[%s7 + $0x20] sm:$0xf]
  %v3138 = vld [vmem:[%s7 + $0x28] sm:$0xf]
  %v3139 = vld [vmem:[#allocation3] sm:$0xff]
  %v3140 = vld [vmem:[#allocation3 + $0x8] sm:$0xff]
  %v3141 = vld [vmem:[#allocation3 + $0x10] sm:$0xff]
  %v3142 = vld [vmem:[#allocation3 + $0x18] sm:$0xff]
  %v3143 = vld [vmem:[#allocation3 + $0x20] sm:$0xff]
  %v3144 = vld [vmem:[#allocation3 + $0x28] sm:$0xff]
  %v3145 = vld [vmem:[#allocation3 + $0x30] sm:$0xff]
  %v3146 = vld [vmem:[#allocation3 + $0x38] sm:$0xff]
  %v3147 = vld [vmem:[#allocation3 + $0x40] sm:$0xff]
  %v3148 = vld [vmem:[#allocation3 + $0x48] sm:$0xff]
  %v3149 = vld [vmem:[#allocation3 + $0x50] sm:$0xff]
  %v3150 = vld [vmem:[#allocation3 + $0x58] sm:$0xff]
  %v3151 = vld [vmem:[#allocation3 + $0x60] sm:$0xff]
  %v3152 = vld [vmem:[#allocation3 + $0x68] sm:$0xff]
  %v3153 = vld [vmem:[#allocation3 + $0x70] sm:$0xff]
  %v3154 = vld [vmem:[#allocation3 + $0x78] sm:$0xff]
  %v3155 = vld [vmem:[#allocation3 + $0x80] sm:$0xff]
  %v3156 = vld [vmem:[#allocation3 + $0x88] sm:$0xff]
  %v3157 = vld [vmem:[#allocation3 + $0x90] sm:$0xff]
  %v3158 = vld [vmem:[#allocation3 + $0x98] sm:$0xff]
  %v3159 = vld [vmem:[#allocation3 + $0xa0] sm:$0xff]
  %v3160 = vld [vmem:[#allocation3 + $0xa8] sm:$0xff]
  %v3161 = vld [vmem:[#allocation3 + $0xb0] sm:$0xff]
  %v3162 = vld [vmem:[#allocation3 + $0xb8] sm:$0xff]
  %v3163 = vld [vmem:[#allocation3 + $0xc0] sm:$0xff]
  %v3164 = vld [vmem:[#allocation3 + $0xc8] sm:$0xff]
  %v3165 = vld [vmem:[#allocation3 + $0xd0] sm:$0xff]
  %v3166 = vld [vmem:[#allocation3 + $0xd8] sm:$0xff]
  %v3167 = vld [vmem:[#allocation3 + $0xe0] sm:$0xff]
  %v3168 = vld [vmem:[#allocation3 + $0xe8] sm:$0xff]
  %v3169 = vld [vmem:[#allocation3 + $0xf0] sm:$0xff]
  %v3170 = vld [vmem:[#allocation3 + $0xf8] sm:$0xff]
  %v3171 = vld [vmem:[#allocation3 + $0x100] sm:$0xff]
  %v3172 = vld [vmem:[#allocation3 + $0x108] sm:$0xff]
  %v3173 = vld [vmem:[#allocation3 + $0x110] sm:$0xff]
  %v3174 = vld [vmem:[#allocation3 + $0x118] sm:$0xff]
  %v3175 = vld [vmem:[#allocation3 + $0x120] sm:$0xff]
  %v3176 = vld [vmem:[#allocation3 + $0x128] sm:$0xf]
  %v3177 = vld [vmem:[%s8] sm:$0xff]
  %v3178 = vld [vmem:[%s8 + $0x8] sm:$0xf]
  %3180 = vset.pattern.permute.xlu0 0
  %3181 = vperm.xlu0 %3180, %v3177
  %v3182 = vpop.permute.xlu0 %3181
  %3185 = vset.pattern.permute.xlu0 0
  %3186 = vperm.xlu0 %3185, %v3178
  %v3187 = vpop.permute.xlu0 %3186
  %v3190 = vsel %vm2152, %v3135, 0
  %v3193 = vsel %vm2152, %v3138, 0
  %v3196 = vsel %vm468, %v3176, 0
  %3198 = vmatpush.msra.mxu0 %v3154
  %3199 = vmatpush.msra.mxu0 %v3153
  %3200 = vmatpush.msra.mxu0 %v3152
  %3201 = vmatpush.msra.mxu0 %v3151
  %3202 = vmatpush.msra.mxu0 %v3150
  %3203 = vmatpush.msra.mxu0 %v3149
  %3204 = vmatpush.msra.mxu0 %v3148
  %3205 = vmatpush.msra.mxu0 %v3147
  %3206 = vmatpush.msra.mxu0 %v3146
  %3207 = vmatpush.msra.mxu0 %v3145
  %3208 = vmatpush.msra.mxu0 %v3144
  %3209 = vmatpush.msra.mxu0 %v3143
  %3210 = vmatpush.msra.mxu0 %v3142
  %3211 = vmatpush.msra.mxu0 %v3141
  %3212 = vmatpush.msra.mxu0 %v3140
  %3213 = vmatpush.msra.mxu0 %v3139
  %3214 = vmatmul.f32.gmra.mxu0 %v3133
  %v3215 = vpop.f32.mrf.mxu0
  %v3216 = vadd.f32 %v3182, %v3215
  %3217 = vmatmul.f32.gmra.mxu0 %v3136
  %v3218 = vpop.f32.mrf.mxu0
  %v3219 = vadd.f32 %v3187, %v3218
  %3220 = vdwg.mxu0
  %3221 = vmatpush.msra.mxu0 %v3170
  %3222 = vmatpush.msra.mxu0 %v3169
  %3223 = vmatpush.msra.mxu0 %v3168
  %3224 = vmatpush.msra.mxu0 %v3167
  %3225 = vmatpush.msra.mxu0 %v3166
  %3226 = vmatpush.msra.mxu0 %v3165
  %3227 = vmatpush.msra.mxu0 %v3164
  %3228 = vmatpush.msra.mxu0 %v3163
  %3229 = vmatpush.msra.mxu0 %v3162
  %3230 = vmatpush.msra.mxu0 %v3161
  %3231 = vmatpush.msra.mxu0 %v3160
  %3232 = vmatpush.msra.mxu0 %v3159
  %3233 = vmatpush.msra.mxu0 %v3158
  %3234 = vmatpush.msra.mxu0 %v3157
  %3235 = vmatpush.msra.mxu0 %v3156
  %3236 = vmatpush.msra.mxu0 %v3155
  %3237 = vmatmul.f32.gmra.mxu0 %v3134
  %v3238 = vpop.f32.mrf.mxu0
  %v3239 = vadd.f32 %v3216, %v3238
  %3240 = vmatmul.f32.gmra.mxu0 %v3137
  %v3241 = vpop.f32.mrf.mxu0
  %v3242 = vadd.f32 %v3219, %v3241
  %3243 = vdwg.mxu0
  %3244 = vmatpush.msra.mxu0 0.0
  %3245 = vmatpush.msra.mxu0 0.0
  %3246 = vmatpush.msra.mxu0 0.0
  %3247 = vmatpush.msra.mxu0 0.0
  %3248 = vmatpush.msra.mxu0 0.0
  %3249 = vmatpush.msra.mxu0 0.0
  %3250 = vmatpush.msra.mxu0 0.0
  %3251 = vmatpush.msra.mxu0 0.0
  %3252 = vmatpush.msra.mxu0 0.0
  %3253 = vmatpush.msra.mxu0 0.0
  %3254 = vmatpush.msra.mxu0 %v3196
  %3255 = vmatpush.msra.mxu0 %v3175
  %3256 = vmatpush.msra.mxu0 %v3174
  %3257 = vmatpush.msra.mxu0 %v3173
  %3258 = vmatpush.msra.mxu0 %v3172
  %3259 = vmatpush.msra.mxu0 %v3171
  %3260 = vmatmul.f32.gmra.mxu0 %v3190
  %v3261 = vpop.f32.mrf.mxu0
  %v3262 = vadd.f32 %v3239, %v3261
  %3263 = vmatmul.f32.gmra.mxu0 %v3193
  %v3264 = vpop.f32.mrf.mxu0
  %v3265 = vadd.f32 %v3242, %v3264
  %3266 = vdwg.mxu0
  %v3267 = vsub.f32 0.0, %v3262
  %v3268 = vsub.f32 0.0, %v3265
  %v3269 = vmul.f32 %v3267, 1.442695
  %v3270 = vpow.pop %v3269
  %v3271 = vmul.f32 %v3268, 1.442695
  %v3272 = vpow.pop %v3271
  %v3273 = vadd.f32 %v3270, 1.0
  %v3274 = vadd.f32 %v3272, 1.0
  %v3275 = vrcp.pop %v3273
  %v3276 = vmul.f32 %v3273, %v3275
  %v3277 = vsub.f32 1.0, %v3276
  %v3278 = vmul.f32 %v3275, %v3277
  %v3279 = vadd.f32 %v3275, %v3278
  %vm3280 = vweird.f32 %v3273
  %vm3281 = vweird.f32 %v3275
  %vm3282 = vmor %vm3280, %vm3281
  %v3283 = vsel %vm3282, %v3275, %v3279
  %v3284 = vand.u32 2147483647, %v3273
  %vm3285 = vcmp.eq.f32.partialorder %v3284, 8.507059e+37
  %v3286 = vand.u32 %v3273, 2147483648
  %v3287 = vor.u32 1.1754944e-38, %v3286
  %v3288 = vsel %vm3285, %v3287, %v3283
  %v3289 = vrcp.pop %v3274
  %v3290 = vmul.f32 %v3274, %v3289
  %v3291 = vsub.f32 1.0, %v3290
  %v3292 = vmul.f32 %v3289, %v3291
  %v3293 = vadd.f32 %v3289, %v3292
  %vm3294 = vweird.f32 %v3274
  %vm3295 = vweird.f32 %v3289
  %vm3296 = vmor %vm3294, %vm3295
  %v3297 = vsel %vm3296, %v3289, %v3293
  %v3298 = vand.u32 2147483647, %v3274
  %vm3299 = vcmp.eq.f32.partialorder %v3298, 8.507059e+37
  %v3300 = vand.u32 %v3274, 2147483648
  %v3301 = vor.u32 1.1754944e-38, %v3300
  %v3302 = vsel %vm3299, %v3301, %v3297
  %v3303 = vld [vmem:[%s9] sm:$0xff]
  %v3304 = vld [vmem:[%s9 + $0x8] sm:$0x3]
  %v3305 = vld [vmem:[%s9 + $0x10] sm:$0xff]
  %v3306 = vld [vmem:[%s9 + $0x18] sm:$0x3]
  %v3307 = vld [vmem:[%s9 + $0x20] sm:$0xff]
  %v3308 = vld [vmem:[%s9 + $0x28] sm:$0x3]
  %v3309 = vld [vmem:[%s9 + $0x30] sm:$0xff]
  %v3310 = vld [vmem:[%s9 + $0x38] sm:$0x3]
  %v3311 = vld [vmem:[%s9 + $0x40] sm:$0xff]
  %v3312 = vld [vmem:[%s9 + $0x48] sm:$0x3]
  %v3313 = vld [vmem:[%s9 + $0x50] sm:$0xff]
  %v3314 = vld [vmem:[%s9 + $0x58] sm:$0x3]
  %v3315 = vld [vmem:[%s9 + $0x60] sm:$0xff]
  %v3316 = vld [vmem:[%s9 + $0x68] sm:$0x3]
  %v3317 = vld [vmem:[%s9 + $0x70] sm:$0xff]
  %v3318 = vld [vmem:[%s9 + $0x78] sm:$0x3]
  %v3319 = vld [vmem:[%s9 + $0x80] sm:$0xff]
  %v3320 = vld [vmem:[%s9 + $0x88] sm:$0x3]
  %v3321 = vld [vmem:[%s9 + $0x90] sm:$0xff]
  %v3322 = vld [vmem:[%s9 + $0x98] sm:$0x3]
  %v3323 = vld [vmem:[%s9 + $0xa0] sm:$0xff]
  %v3324 = vld [vmem:[%s9 + $0xa8] sm:$0x3]
  %v3325 = vld [vmem:[%s9 + $0xb0] sm:$0xff]
  %v3326 = vld [vmem:[%s9 + $0xb8] sm:$0x3]
  %3351 = vrot.lane.b32.xlu0 %v3303, 64
  %v3352 = vpop.permute.xlu0 %3351
  %3353 = vrot.lane.b32.xlu0 %v3304, 64
  %v3354 = vpop.permute.xlu0 %3353
  %3355 = vrot.lane.b32.xlu0 %v3305, 64
  %v3356 = vpop.permute.xlu0 %3355
  %3357 = vrot.lane.b32.xlu0 %v3306, 64
  %v3358 = vpop.permute.xlu0 %3357
  %3359 = vrot.lane.b32.xlu0 %v3307, 64
  %v3360 = vpop.permute.xlu0 %3359
  %3361 = vrot.lane.b32.xlu0 %v3308, 64
  %v3362 = vpop.permute.xlu0 %3361
  %3363 = vrot.lane.b32.xlu0 %v3309, 64
  %v3364 = vpop.permute.xlu0 %3363
  %3365 = vrot.lane.b32.xlu0 %v3310, 64
  %v3366 = vpop.permute.xlu0 %3365
  %3367 = vrot.lane.b32.xlu0 %v3311, 64
  %v3368 = vpop.permute.xlu0 %3367
  %3369 = vrot.lane.b32.xlu0 %v3312, 64
  %v3370 = vpop.permute.xlu0 %3369
  %3371 = vrot.lane.b32.xlu0 %v3313, 64
  %v3372 = vpop.permute.xlu0 %3371
  %3373 = vrot.lane.b32.xlu0 %v3314, 64
  %v3374 = vpop.permute.xlu0 %3373
  %3375 = vrot.lane.b32.xlu0 %v3315, 64
  %v3376 = vpop.permute.xlu0 %3375
  %3377 = vrot.lane.b32.xlu0 %v3316, 64
  %v3378 = vpop.permute.xlu0 %3377
  %3379 = vrot.lane.b32.xlu0 %v3317, 64
  %v3380 = vpop.permute.xlu0 %3379
  %3381 = vrot.lane.b32.xlu0 %v3318, 64
  %v3382 = vpop.permute.xlu0 %3381
  %3383 = vrot.lane.b32.xlu0 %v3319, 64
  %v3384 = vpop.permute.xlu0 %3383
  %3385 = vrot.lane.b32.xlu0 %v3320, 64
  %v3386 = vpop.permute.xlu0 %3385
  %3387 = vrot.lane.b32.xlu0 %v3321, 64
  %v3388 = vpop.permute.xlu0 %3387
  %3389 = vrot.lane.b32.xlu0 %v3322, 64
  %v3390 = vpop.permute.xlu0 %3389
  %3391 = vrot.lane.b32.xlu0 %v3323, 64
  %v3392 = vpop.permute.xlu0 %3391
  %3393 = vrot.lane.b32.xlu0 %v3324, 64
  %v3394 = vpop.permute.xlu0 %3393
  %3395 = vrot.lane.b32.xlu0 %v3325, 64
  %v3396 = vpop.permute.xlu0 %3395
  %3397 = vrot.lane.b32.xlu0 %v3326, 64
  %v3398 = vpop.permute.xlu0 %3397
  %vm3423 = vcmask 523264
  %v3424 = vsel %vm3423, %v3303, %v3352
  %v3425 = vsel %vm3423, %v3304, %v3354
  %v3426 = vsel %vm3423, %v3305, %v3356
  %v3427 = vsel %vm3423, %v3306, %v3358
  %v3428 = vsel %vm3423, %v3307, %v3360
  %v3429 = vsel %vm3423, %v3308, %v3362
  %v3430 = vsel %vm3423, %v3309, %v3364
  %v3431 = vsel %vm3423, %v3310, %v3366
  %v3432 = vsel %vm3423, %v3311, %v3368
  %v3433 = vsel %vm3423, %v3312, %v3370
  %v3434 = vsel %vm3423, %v3313, %v3372
  %v3435 = vsel %vm3423, %v3314, %v3374
  %v3436 = vsel %vm3423, %v3315, %v3376
  %v3437 = vsel %vm3423, %v3316, %v3378
  %v3438 = vsel %vm3423, %v3317, %v3380
  %v3439 = vsel %vm3423, %v3318, %v3382
  %v3440 = vsel %vm3423, %v3319, %v3384
  %v3441 = vsel %vm3423, %v3320, %v3386
  %v3442 = vsel %vm3423, %v3321, %v3388
  %v3443 = vsel %vm3423, %v3322, %v3390
  %v3444 = vsel %vm3423, %v3323, %v3392
  %v3445 = vsel %vm3423, %v3324, %v3394
  %v3446 = vsel %vm3423, %v3325, %v3396
  %v3447 = vsel %vm3423, %v3326, %v3398
  %v3448 = vperm.slane %v3288, 0
  %v3449 = vmul.f32 %v3424, %v3448
  %v3450 = vmul.f32 %v3425, %v3448
  %v3451 = vadd.f32 %v3449, 0.0
  %v3452 = vadd.f32 %v3450, 0.0
  %v3453 = vperm.slane %v3288, 1
  %v3454 = vmul.f32 %v3426, %v3453
  %v3455 = vmul.f32 %v3427, %v3453
  %v3456 = vadd.f32 %v3451, %v3454
  %v3457 = vadd.f32 %v3452, %v3455
  %v3458 = vperm.slane %v3288, 2
  %v3459 = vmul.f32 %v3428, %v3458
  %v3460 = vmul.f32 %v3429, %v3458
  %v3461 = vadd.f32 %v3456, %v3459
  %v3462 = vadd.f32 %v3457, %v3460
  %v3463 = vperm.slane %v3288, 3
  %v3464 = vmul.f32 %v3430, %v3463
  %v3465 = vmul.f32 %v3431, %v3463
  %v3466 = vadd.f32 %v3461, %v3464
  %v3467 = vadd.f32 %v3462, %v3465
  %v3468 = vperm.slane %v3288, 4
  %v3469 = vmul.f32 %v3432, %v3468
  %v3470 = vmul.f32 %v3433, %v3468
  %v3471 = vadd.f32 %v3466, %v3469
  %v3472 = vadd.f32 %v3467, %v3470
  %v3473 = vperm.slane %v3288, 5
  %v3474 = vmul.f32 %v3434, %v3473
  %v3475 = vmul.f32 %v3435, %v3473
  %v3476 = vadd.f32 %v3471, %v3474
  %v3477 = vadd.f32 %v3472, %v3475
  %v3478 = vperm.slane %v3288, 6
  %v3479 = vmul.f32 %v3436, %v3478
  %v3480 = vmul.f32 %v3437, %v3478
  %v3481 = vadd.f32 %v3476, %v3479
  %v3482 = vadd.f32 %v3477, %v3480
  %v3483 = vperm.slane %v3288, 7
  %v3484 = vmul.f32 %v3438, %v3483
  %v3485 = vmul.f32 %v3439, %v3483
  %v3486 = vadd.f32 %v3481, %v3484
  %v3487 = vadd.f32 %v3482, %v3485
  %v3488 = vperm.slane %v3302, 0
  %v3489 = vmul.f32 %v3440, %v3488
  %v3490 = vmul.f32 %v3441, %v3488
  %v3491 = vadd.f32 %v3486, %v3489
  %v3492 = vadd.f32 %v3487, %v3490
  %v3493 = vperm.slane %v3302, 1
  %v3494 = vmul.f32 %v3442, %v3493
  %v3495 = vmul.f32 %v3443, %v3493
  %v3496 = vadd.f32 %v3491, %v3494
  %v3497 = vadd.f32 %v3492, %v3495
  %v3498 = vperm.slane %v3302, 2
  %v3499 = vmul.f32 %v3444, %v3498
  %v3500 = vmul.f32 %v3445, %v3498
  %v3501 = vadd.f32 %v3496, %v3499
  %v3502 = vadd.f32 %v3497, %v3500
  %v3503 = vperm.slane %v3302, 3
  %v3504 = vmul.f32 %v3446, %v3503
  %v3505 = vmul.f32 %v3447, %v3503
  %v3506 = vadd.f32 %v3501, %v3504
  %v3507 = vadd.f32 %v3502, %v3505
  %v3508 = vmul.u32 %v372, 64
  %vm3509 = vcmp.ge.s32.totalorder %v2448, %v3508
  %vm3510 = vcmp.ge.s32.totalorder %v2449, %v3508
  %vm3511 = vcmp.ge.s32.totalorder %v2450, %v3508
  %vm3512 = vcmp.ge.s32.totalorder %v2451, %v3508
  %vm3513 = vcmp.ge.s32.totalorder %v2452, %v3508
  %vm3514 = vcmp.ge.s32.totalorder %v2453, %v3508
  %vm3515 = vcmp.ge.s32.totalorder %v2454, %v3508
  %vm3516 = vcmp.ge.s32.totalorder %v2455, %v3508
  %vm3517 = vcmp.ge.s32.totalorder %v2456, %v3508
  %vm3518 = vcmp.ge.s32.totalorder %v2457, %v3508
  %vm3519 = vcmp.ge.s32.totalorder %v2458, %v3508
  %vm3520 = vcmp.ge.s32.totalorder %v2459, %v3508
  %vm3521 = vcmp.ge.s32.totalorder %v2460, %v3508
  %vm3522 = vcmp.ge.s32.totalorder %v2461, %v3508
  %vm3523 = vcmp.ge.s32.totalorder %v2462, %v3508
  %vm3524 = vcmp.ge.s32.totalorder %v2463, %v3508
  %v3525 = vadd.s32 %v3508, 64
  %vm3526 = vcmp.lt.s32.totalorder %v2448, %v3525
  %vm3527 = vcmp.lt.s32.totalorder %v2449, %v3525
  %vm3528 = vcmp.lt.s32.totalorder %v2450, %v3525
  %vm3529 = vcmp.lt.s32.totalorder %v2451, %v3525
  %vm3530 = vcmp.lt.s32.totalorder %v2452, %v3525
  %vm3531 = vcmp.lt.s32.totalorder %v2453, %v3525
  %vm3532 = vcmp.lt.s32.totalorder %v2454, %v3525
  %vm3533 = vcmp.lt.s32.totalorder %v2455, %v3525
  %vm3534 = vcmp.lt.s32.totalorder %v2456, %v3525
  %vm3535 = vcmp.lt.s32.totalorder %v2457, %v3525
  %vm3536 = vcmp.lt.s32.totalorder %v2458, %v3525
  %vm3537 = vcmp.lt.s32.totalorder %v2459, %v3525
  %vm3538 = vcmp.lt.s32.totalorder %v2460, %v3525
  %vm3539 = vcmp.lt.s32.totalorder %v2461, %v3525
  %vm3540 = vcmp.lt.s32.totalorder %v2462, %v3525
  %vm3541 = vcmp.lt.s32.totalorder %v2463, %v3525
  %vm3542 = vmand %vm3509, %vm3526
  %vm3543 = vmand %vm3510, %vm3527
  %vm3544 = vmand %vm3511, %vm3528
  %vm3545 = vmand %vm3512, %vm3529
  %vm3546 = vmand %vm3513, %vm3530
  %vm3547 = vmand %vm3514, %vm3531
  %vm3548 = vmand %vm3515, %vm3532
  %vm3549 = vmand %vm3516, %vm3533
  %vm3550 = vmand %vm3517, %vm3534
  %vm3551 = vmand %vm3518, %vm3535
  %vm3552 = vmand %vm3519, %vm3536
  %vm3553 = vmand %vm3520, %vm3537
  %vm3554 = vmand %vm3521, %vm3538
  %vm3555 = vmand %vm3522, %vm3539
  %vm3556 = vmand %vm3523, %vm3540
  %vm3557 = vmand %vm3524, %vm3541
  %v3558 = vsel %vm3542, 1.0, 0.0
  %v3559 = vsel %vm3543, 1.0, 0.0
  %v3560 = vsel %vm3544, 1.0, 0.0
  %v3561 = vsel %vm3545, 1.0, 0.0
  %v3562 = vsel %vm3546, 1.0, 0.0
  %v3563 = vsel %vm3547, 1.0, 0.0
  %v3564 = vsel %vm3548, 1.0, 0.0
  %v3565 = vsel %vm3549, 1.0, 0.0
  %v3566 = vsel %vm3550, 1.0, 0.0
  %v3567 = vsel %vm3551, 1.0, 0.0
  %v3568 = vsel %vm3552, 1.0, 0.0
  %v3569 = vsel %vm3553, 1.0, 0.0
  %v3570 = vsel %vm3554, 1.0, 0.0
  %v3571 = vsel %vm3555, 1.0, 0.0
  %v3572 = vsel %vm3556, 1.0, 0.0
  %v3573 = vsel %vm3557, 1.0, 0.0
  %v3574 = vld [vmem:[%s10] sm:$0xff]
  %v3575 = vld [vmem:[%s10 + $0x8] sm:$0x3]
  %3577 = vset.pattern.permute.xlu0 0
  %3578 = vperm.xlu0 %3577, %v3574
  %v3579 = vpop.permute.xlu0 %3578
  %3582 = vset.pattern.permute.xlu0 0
  %3583 = vperm.xlu0 %3582, %v3575
  %v3584 = vpop.permute.xlu0 %3583
  %3586 = vmatpush.msra.mxu0 %v3573
  %3587 = vmatpush.msra.mxu0 %v3572
  %3588 = vmatpush.msra.mxu0 %v3571
  %3589 = vmatpush.msra.mxu0 %v3570
  %3590 = vmatpush.msra.mxu0 %v3569
  %3591 = vmatpush.msra.mxu0 %v3568
  %3592 = vmatpush.msra.mxu0 %v3567
  %3593 = vmatpush.msra.mxu0 %v3566
  %3594 = vmatpush.msra.mxu0 %v3565
  %3595 = vmatpush.msra.mxu0 %v3564
  %3596 = vmatpush.msra.mxu0 %v3563
  %3597 = vmatpush.msra.mxu0 %v3562
  %3598 = vmatpush.msra.mxu0 %v3561
  %3599 = vmatpush.msra.mxu0 %v3560
  %3600 = vmatpush.msra.mxu0 %v3559
  %3601 = vmatpush.msra.mxu0 %v3558
  %3602 = vmatmul.f32.gmra.mxu0 %v3506
  %v3603 = vpop.f32.mrf.mxu0
  %v3604 = vadd.f32 %v3579, %v3603
  %3605 = vmatmul.f32.gmra.mxu0 %v3507
  %v3606 = vpop.f32.mrf.mxu0
  %v3607 = vadd.f32 %v3584, %v3606
  %3608 = vdwg.mxu0
  %vm3609 = vcmask 15360
  %3610 = vst.msk [vmem:[%s11] sm:$0xff] %vm3609, %v3604
  %vm3611 = vcmask 9216
  %3612 = vst.msk [vmem:[%s11 + $0x8] sm:$0x3] %vm3611, %v3607
  // Predicated region
  $region46: #{lenet_forward.1} parent=0 // pred_check
    _
  $region47: #{lenet_forward.1} parent=0 // pred_check_branch
    %3614 = sbr.rel (0) target = $region49
  $region48: #{lenet_forward.1} parent=0 // pred_region
    _
  $region49: #{lenet_forward.1} parent=0 // pred_fallthru
    _
  // Predicated region
  $region50: #{lenet_forward.1} parent=0 // pred_check
    _
  $region51: #{lenet_forward.1} parent=0 // pred_check_branch
    %3616 = sbr.rel (0) target = $region53
  $region52: #{lenet_forward.1} parent=0 // pred_region
    _
  $region53: #{lenet_forward.1} parent=0 // pred_fallthru
    _

</llo_original>
